<compile_context>
chip_gen: v5e
topology: v5e:2x2
jax: 0.10.0
libtpu: 0.0.40
codegen_flags: <defaults>
</compile_context>

<pallas_src>
import functools
import math

import jax
import jax.numpy as jnp
from jax import lax
from jax.experimental import pallas as pl
from jax.experimental.pallas import tpu as pltpu

NHEAD = 4
EPS = 1e-5


# ----------------------------- in-kernel helpers -----------------------------

def _layer_norm(x, g, b):
    """LayerNorm over the last dim. g/b already broadcast to x's shape."""
    mu = jnp.mean(x, axis=-1, keepdims=True)
    xc = x - mu
    var = jnp.mean(xc * xc, axis=-1, keepdims=True)
    return xc * lax.rsqrt(var + EPS) * g + b


def _softmax(s):
    """Row softmax in f32; the divide goes to the EUP via approx reciprocal."""
    m = jnp.max(s, axis=-1, keepdims=True)
    p = jnp.exp(s - m)
    return p * pl.reciprocal(jnp.sum(p, axis=-1, keepdims=True), approx=True)


# ------------------------------- fused kernel --------------------------------

def msdecoder_kernel(num_layers, nhead, S, L, return_intermediate, *refs):
    """Whole MSDecoder forward for `bt` batch elements (all scales, all layers)."""
    (tgt_ref, mem_ref, qpos_ref, pos_ref,
     wqk_ref, wsq_ref, fc1_ref, fc2_ref, vecs_ref, out_ref) = refs

    bt, N, D = tgt_ref.shape            # batch tile, S*L rows, d_model
    M = mem_ref.shape[1]
    H = fc1_ref.shape[1]
    hd = D // nhead
    rows = bt * N                       # total rows seen by every matmul
    G = bt * S                          # self-attn groups (block-diagonal)
    scale = 1.0 / math.sqrt(hd)
    f32 = jnp.float32

    # ---- packed weights ----
    w_sa_qk = wqk_ref[...]              # (D, 2D)  fused [Wq | Wk] self-attn
    w_sq = wsq_ref[...]                 # (6, D, D)
    w_sa_v, w_ca_q, w_ca_k, w_ca_v = w_sq[0], w_sq[1], w_sq[2], w_sq[3]
    w_sa_o, w_ca_o = w_sq[4], w_sq[5]
    w_fc1 = fc1_ref[...]                # (D, H)
    w_fc2 = fc2_ref[...]                # (H, D)
    cd = w_sq.dtype                     # MXU operand dtype (bf16)

    vecs = vecs_ref[...]                # (17, Wpad) f32 bias / LayerNorm slab

    def vrow(i, n):
        return vecs[i:i + 1, :n]

    def bcast(i, n):
        return jnp.broadcast_to(vrow(i, n), (rows, n))

    # Hoisted, layer-loop-invariant broadcasts (JAX does not CSE these).
    b_sa_qk = bcast(0, 2 * D)
    b_sa_v = bcast(1, D)
    b_sa_o = bcast(2, D)
    g_ln1, b_ln1 = bcast(3, D), bcast(4, D)
    b_ca_q = bcast(5, D)
    b_ca_o = bcast(8, D)
    g_ln2, b_ln2 = bcast(9, D), bcast(10, D)
    b_fc1 = bcast(11, H)
    b_fc2 = bcast(12, D)
    g_ln3, b_ln3 = bcast(13, D), bcast(14, D)
    g_nrm, b_nrm = bcast(15, D), bcast(16, D)

    # ---- activations (pre-flattened to (rows, D) wrapper-side layout) ----
    x0 = tgt_ref[...].astype(f32).reshape(rows, D)
    qpos = qpos_ref[...].astype(f32).reshape(rows, D)
    mem = mem_ref[...].astype(f32)      # (bt, M, D)
    pos = pos_ref[...].astype(f32)

    def to_heads(t, b, n):              # (b*n, D) -> (b*nhead, n, hd)
        t = t.reshape(b, n, nhead, hd)
        return jnp.transpose(t, (0, 2, 1, 3)).reshape(b * nhead, n, hd)

    def from_heads(t, b, n):            # (b*nhead, n, hd) -> (b*n, D)
        t = t.reshape(b, nhead, n, hd)
        return jnp.transpose(t, (0, 2, 1, 3)).reshape(b * n, D)

    # ---- hoisted cross-attn K/V of memory (layer-invariant) ----
    mrows = bt * M
    k_in = (mem + pos).reshape(mrows, D).astype(cd)
    v_in = mem.reshape(mrows, D).astype(cd)
    k_mem = (jnp.dot(k_in, w_ca_k, preferred_element_type=f32)
             + jnp.broadcast_to(vrow(6, D), (mrows, D)))
    v_mem = (jnp.dot(v_in, w_ca_v, preferred_element_type=f32)
             + jnp.broadcast_to(vrow(7, D), (mrows, D)))
    k_mem_h = to_heads(k_mem, bt, M).astype(cd)     # (bt*nhead, M, hd)
    v_mem_h = to_heads(v_mem, bt, M).astype(cd)

    def decoder_layer(x):
        # x: (rows, D) f32 residual stream (batch x scale x length row-major).

        # ---- self-attention (block-diagonal per (batch, scale)) ----
        qk_in = (x + qpos).astype(cd)            # DETR: q = k = tgt + query_pos
        qk = jnp.dot(qk_in, w_sa_qk, preferred_element_type=f32) + b_sa_qk
        v = jnp.dot(x.astype(cd), w_sa_v, preferred_element_type=f32) + b_sa_v
        qh = to_heads(qk[:, :D], G, L).astype(cd)
        kh = to_heads(qk[:, D:], G, L).astype(cd)
        vh = to_heads(v, G, L).astype(cd)
        s = jnp.einsum("blf,bmf->blm", qh, kh,
                       preferred_element_type=f32) * scale
        pr = _softmax(s).astype(cd)
        ctx = jnp.einsum("blm,bmf->blf", pr, vh, preferred_element_type=f32)
        sa = (jnp.dot(from_heads(ctx, G, L).astype(cd), w_sa_o,
                      preferred_element_type=f32) + b_sa_o)
        x = _layer_norm(x + sa, g_ln1, b_ln1)

        # ---- cross-attention to memory ----
        q = (jnp.dot((x + qpos).astype(cd), w_ca_q,
                     preferred_element_type=f32) + b_ca_q)
        qh = to_heads(q, bt, N).astype(cd)
        s = jnp.einsum("bnf,bmf->bnm", qh, k_mem_h,
                       preferred_element_type=f32) * scale
        pr = _softmax(s).astype(cd)
        ctx = jnp.einsum("bnm,bmf->bnf", pr, v_mem_h, preferred_element_type=f32)
        ca = (jnp.dot(from_heads(ctx, bt, N).astype(cd), w_ca_o,
                      preferred_element_type=f32) + b_ca_o)
        x = _layer_norm(x + ca, g_ln2, b_ln2)

        # ---- feed-forward ----
        h1 = jnp.maximum(
            jnp.dot(x.astype(cd), w_fc1, preferred_element_type=f32) + b_fc1, 0.0)
        f = jnp.dot(h1.astype(cd), w_fc2, preferred_element_type=f32) + b_fc2
        return _layer_norm(x + f, g_ln3, b_ln3)

    if return_intermediate:
        def body(layer_idx, x):
            x = decoder_layer(x)
            # == norm(torch.cat(output, dim=1)) snapshot for this layer.
            y = _layer_norm(x, g_nrm, b_nrm)
            out_ref[layer_idx] = y.reshape(bt, N, D).astype(out_ref.dtype)
            return x
        lax.fori_loop(0, num_layers, body, x0)
    else:
        x = lax.fori_loop(0, num_layers, lambda _, xx: decoder_layer(xx), x0)
        y = _layer_norm(x, g_nrm, b_nrm)
        out_ref[...] = y.reshape(bt, N, D).astype(out_ref.dtype)


# --------------------------- wrapper-side plumbing ----------------------------

def _prepare_params(lp, norm_w, norm_b, compute_dtype):
    """Pack the 28 per-layer parameters into 5 arrays.

    NOTE: to load real torch weights, nn.MultiheadAttention.in_proj_weight is
    (3D, D) acting as x @ W.T -- split its rows into q/k/v and transpose each
    to (D, D) first (same for out_proj.weight and the FFN Linear layers).
    """
    D = lp["sa_wq"].shape[0]
    H = lp["fc1_w"].shape[1]
    f32 = jnp.float32

    w_sa_qk = jnp.concatenate([lp["sa_wq"], lp["sa_wk"]],
                              axis=1).astype(compute_dtype)             # (D, 2D)
    w_sq = jnp.stack([lp["sa_wv"], lp["ca_wq"], lp["ca_wk"], lp["ca_wv"],
                      lp["sa_wo"], lp["ca_wo"]], axis=0).astype(compute_dtype)
    fc1_w = lp["fc1_w"].astype(compute_dtype)
    fc2_w = lp["fc2_w"].astype(compute_dtype)

    wpad = max(2 * D, H)

    def row(v):
        v = jnp.asarray(v, f32).reshape(-1)
        return jnp.pad(v, (0, wpad - v.shape[0]))

    vecs = jnp.stack([
        row(jnp.concatenate([lp["sa_bq"], lp["sa_bk"]])),   # 0  [bq|bk] self
        row(lp["sa_bv"]),                                   # 1
        row(lp["sa_bo"]),                                   # 2
        row(lp["ln1_w"]), row(lp["ln1_b"]),                 # 3, 4
        row(lp["ca_bq"]), row(lp["ca_bk"]), row(lp["ca_bv"]),  # 5, 6, 7
        row(lp["ca_bo"]),                                   # 8
        row(lp["ln2_w"]), row(lp["ln2_b"]),                 # 9, 10
        row(lp["fc1_b"]), row(lp["fc2_b"]),                 # 11, 12
        row(lp["ln3_w"]), row(lp["ln3_b"]),                 # 13, 14
        row(norm_w), row(norm_b),                           # 15, 16
    ], axis=0)                                              # (17, wpad) f32
    return w_sa_qk, w_sq, fc1_w, fc2_w, vecs


def _estimate_vmem_bytes(weights, bt, S, L, D, H, M, num_layers, ri):
    """Rough per-grid-step VMEM footprint -> explicit vmem_limit_bytes."""
    n = S * L
    rows = bt * n
    wbytes = sum(int(w.size) * w.dtype.itemsize for w in weights)
    in_blk = 2 * bt * n * D * 2 + 2 * bt * M * D * 2          # tgt/qpos + mem/pos
    out_blk = (num_layers if ri else 1) * bt * n * D * 2
    scores = max(bt * S * NHEAD * L * L, bt * NHEAD * n * M) * 4
    act = rows * (8 * D + 2 * H) * 4 + 2 * bt * M * D * 2
    est = 2 * (wbytes + in_blk + out_blk) + 4 * (scores + act)
    # Clamp: >= default scoped budget, < v7x 64 MiB physical.
    return int(min(max(est, 32 * 1024 * 1024), 56 * 1024 * 1024))


def ms_decoder_forward(tgt_list, memory, layer_params, norm_w, norm_b,
                       query_pos_list, pos, num_layers,
                       return_intermediate=False,
                       batch_block=None,
                       compute_dtype=jnp.bfloat16):
    """Mirrors MSDecoder.forward (inference: masks=None, dropout off).

    Returns norm(cat(output, dim=1)) with shape (B, sum(L_s), D); with
    return_intermediate=True returns the stacked (num_layers, B, sum(L_s), D).
    All cloned layers share one param set (deepcopy of a single decoder_layer).
    """
    S = len(tgt_list)
    B, L, D = tgt_list[0].shape
    assert D % NHEAD == 0
    # TODO(synk): the fused path assumes equal-length scales; pad or add a
    # per-scale grid axis for ragged multi-scale lists.
    assert all(t.shape == (B, L, D) for t in tgt_list)
    assert all(q.shape == (B, L, D) for q in query_pos_list)
    M = memory.shape[1]
    H = layer_params["fc1_w"].shape[1]
    total_L = S * L

    # Batch folding: single-TC v5e/v6e like taller row blocks; v7x megacore
    # still gets >=2 "parallel" grid steps with this default.
    if batch_block is None:
        batch_block = B // 2 if (B % 2 == 0 and B >= 2) else 1
    bt = batch_block
    assert B % bt == 0

    # Pre-flatten scales wrapper-side -> no in-kernel (S, L, D) relayouts.
    tgt = jnp.stack(tgt_list, axis=1).reshape(B, total_L, D).astype(compute_dtype)
    qpos = jnp.stack(query_pos_list, axis=1).reshape(B, total_L, D).astype(compute_dtype)
    mem = memory.astype(compute_dtype)
    posm = pos.astype(compute_dtype)

    weights = _prepare_params(layer_params, norm_w, norm_b, compute_dtype)

    in_specs = [
        pl.BlockSpec((bt, total_L, D), lambda b: (b, 0, 0)),   # tgt
        pl.BlockSpec((bt, M, D), lambda b: (b, 0, 0)),         # memory
        pl.BlockSpec((bt, total_L, D), lambda b: (b, 0, 0)),   # query_pos
        pl.BlockSpec((bt, M, D), lambda b: (b, 0, 0)),         # pos
    ] + [
        pl.BlockSpec(w.shape, lambda b, nd=w.ndim: (0,) * nd)  # broadcast weights
        for w in weights
    ]

    # bf16 output halves HBM writeback; cast back to f32 outside the kernel.
    # TODO(synk): for d_model < 128 a lane-dense flattened (bt, total_L*D)
    # out block would avoid masked vst; at realistic D (multiple of 128) the
    # (..., D) store is already lane-dense.
    if return_intermediate:
        out_shape = jax.ShapeDtypeStruct((num_layers, B, total_L, D), jnp.bfloat16)
        out_spec = pl.BlockSpec((num_layers, bt, total_L, D),
                                lambda b: (0, b, 0, 0))
    else:
        out_shape = jax.ShapeDtypeStruct((B, total_L, D), jnp.bfloat16)
        out_spec = pl.BlockSpec((bt, total_L, D), lambda b: (b, 0, 0))

    kernel = functools.partial(msdecoder_kernel, num_layers, NHEAD, S, L,
                               return_intermediate)
    vmem_limit = _estimate_vmem_bytes(weights, bt, S, L, D, H, M,
                                      num_layers, return_intermediate)

    out = pl.pallas_call(
        kernel,
        out_shape=out_shape,
        grid=(B // bt,),
        in_specs=in_specs,
        out_specs=out_spec,
        compiler_params=pltpu.CompilerParams(
            dimension_semantics=("parallel",),      # batch axis -> both v7x TCs
            vmem_limit_bytes=vmem_limit),
    )(tgt, mem, qpos, posm, *weights)

    return out.astype(jnp.float32)


# ----------------------------- deterministic init ------------------------------

def init_layer_params(key, D, H):
    ks = jax.random.split(key, 10)
    s = 0.05
    f32 = jnp.float32

    def w(k, shape):
        return jax.random.normal(k, shape, f32) * s

    return dict(
        sa_wq=w(ks[0], (D, D)), sa_wk=w(ks[1], (D, D)), sa_wv=w(ks[2], (D, D)),
        sa_bq=jnp.zeros((D,), f32), sa_bk=jnp.zeros((D,), f32),
        sa_bv=jnp.zeros((D,), f32),
        sa_wo=w(ks[3], (D, D)), sa_bo=jnp.zeros((D,), f32),
        ln1_w=jnp.ones((D,), f32), ln1_b=jnp.zeros((D,), f32),
        ca_wq=w(ks[4], (D, D)), ca_wk=w(ks[5], (D, D)), ca_wv=w(ks[6], (D, D)),
        ca_bq=jnp.zeros((D,), f32), ca_bk=jnp.zeros((D,), f32),
        ca_bv=jnp.zeros((D,), f32),
        ca_wo=w(ks[7], (D, D)), ca_bo=jnp.zeros((D,), f32),
        ln2_w=jnp.ones((D,), f32), ln2_b=jnp.zeros((D,), f32),
        fc1_w=w(ks[8], (D, H)), fc1_b=jnp.zeros((H,), f32),
        fc2_w=w(ks[9], (H, D)), fc2_b=jnp.zeros((D,), f32),
        ln3_w=jnp.ones((D,), f32), ln3_b=jnp.zeros((D,), f32),
    )


if __name__ == "__main__":
    B, D, H, M = 2, 32, 64, 16          # batch, d_model, ffn hidden, memory len
    scale_lens = (8, 8)                  # multi-scale target lengths
    num_layers = 2

    key = jax.random.PRNGKey(0)
    k_tgt, k_mem, k_qp, k_pos, k_par = jax.random.split(key, 5)

    tgt_list = [
        jax.random.normal(jax.random.fold_in(k_tgt, i), (B, L, D), jnp.float32)
        for i, L in enumerate(scale_lens)
    ]
    query_pos_list = [
        jax.random.normal(jax.random.fold_in(k_qp, i), (B, L, D), jnp.float32)
        for i, L in enumerate(scale_lens)
    ]
    memory = jax.random.normal(k_mem, (B, M, D), jnp.float32)
    pos = jax.random.normal(k_pos, (B, M, D), jnp.float32)

    layer_params = init_layer_params(k_par, D, H)
    norm_w = jnp.ones((D,), jnp.float32)
    norm_b = jnp.zeros((D,), jnp.float32)

    out = ms_decoder_forward(tgt_list, memory, layer_params, norm_w, norm_b,
                             query_pos_list, pos, num_layers,
                             return_intermediate=False)
    out = jax.block_until_ready(out)

    assert out.shape == (B, sum(scale_lens), D), out.shape
    assert bool(jnp.all(jnp.isfinite(out)))
    print("KERNEL_OK")
</pallas_src>

<mosaic_0001>
module attributes {stable_mosaic.version = 11 : i64} {
  func.func @msdecoder_kernel(%arg0: i32, %arg1: memref<1x16x32xbf16, #tpu.memory_space<vmem>>, %arg2: memref<1x16x32xbf16, #tpu.memory_space<vmem>>, %arg3: memref<1x16x32xbf16, #tpu.memory_space<vmem>>, %arg4: memref<1x16x32xbf16, #tpu.memory_space<vmem>>, %arg5: memref<32x64xbf16, #tpu.memory_space<vmem>>, %arg6: memref<6x32x32xbf16, #tpu.memory_space<vmem>>, %arg7: memref<32x64xbf16, #tpu.memory_space<vmem>>, %arg8: memref<64x32xbf16, #tpu.memory_space<vmem>>, %arg9: memref<17x64xf32, #tpu.memory_space<vmem>>, %arg10: memref<1x16x32xbf16, #tpu.memory_space<vmem>>) attributes {dimension_semantics = [#tpu.dimension_semantics<parallel>], iteration_bounds = array<i64: 2>, scalar_prefetch = 0 : i64, scratch_operands = 0 : i64, tpu.core_type = #tpu.core_type<tc>, window_params = [{transform_indices = @transform_0, window_bounds = array<i64: 1, 16, 32>}, {transform_indices = @transform_1, window_bounds = array<i64: 1, 16, 32>}, {transform_indices = @transform_2, window_bounds = array<i64: 1, 16, 32>}, {transform_indices = @transform_3, window_bounds = array<i64: 1, 16, 32>}, {pipeline_mode = #tpu.pipeline_mode<synchronous>, transform_indices = @transform_4, window_bounds = array<i64: 32, 64>}, {pipeline_mode = #tpu.pipeline_mode<synchronous>, transform_indices = @transform_5, window_bounds = array<i64: 6, 32, 32>}, {pipeline_mode = #tpu.pipeline_mode<synchronous>, transform_indices = @transform_6, window_bounds = array<i64: 32, 64>}, {pipeline_mode = #tpu.pipeline_mode<synchronous>, transform_indices = @transform_7, window_bounds = array<i64: 64, 32>}, {pipeline_mode = #tpu.pipeline_mode<synchronous>, transform_indices = @transform_8, window_bounds = array<i64: 17, 64>}, {transform_indices = @transform_9, window_bounds = array<i64: 1, 16, 32>}]} {
    %c0 = arith.constant 0 : index
    %c0_0 = arith.constant 0 : index
    %0 = vector.load %arg5[%c0, %c0_0] : memref<32x64xbf16, #tpu.memory_space<vmem>>, vector<32x64xbf16>
    %c0_1 = arith.constant 0 : index
    %c0_2 = arith.constant 0 : index
    %c0_3 = arith.constant 0 : index
    %1 = vector.load %arg6[%c0_1, %c0_2, %c0_3] : memref<6x32x32xbf16, #tpu.memory_space<vmem>>, vector<6x32x32xbf16>
    %2 = vector.extract_strided_slice %1 {offsets = [0, 0, 0], sizes = [1, 32, 32], strides = [1, 1, 1]} : vector<6x32x32xbf16> to vector<1x32x32xbf16>
    %3 = vector.shape_cast %2 : vector<1x32x32xbf16> to vector<32x32xbf16>
    %4 = vector.extract_strided_slice %1 {offsets = [1, 0, 0], sizes = [1, 32, 32], strides = [1, 1, 1]} : vector<6x32x32xbf16> to vector<1x32x32xbf16>
    %5 = vector.shape_cast %4 : vector<1x32x32xbf16> to vector<32x32xbf16>
    %6 = vector.extract_strided_slice %1 {offsets = [2, 0, 0], sizes = [1, 32, 32], strides = [1, 1, 1]} : vector<6x32x32xbf16> to vector<1x32x32xbf16>
    %7 = vector.shape_cast %6 : vector<1x32x32xbf16> to vector<32x32xbf16>
    %8 = vector.extract_strided_slice %1 {offsets = [3, 0, 0], sizes = [1, 32, 32], strides = [1, 1, 1]} : vector<6x32x32xbf16> to vector<1x32x32xbf16>
    %9 = vector.shape_cast %8 : vector<1x32x32xbf16> to vector<32x32xbf16>
    %10 = vector.extract_strided_slice %1 {offsets = [4, 0, 0], sizes = [1, 32, 32], strides = [1, 1, 1]} : vector<6x32x32xbf16> to vector<1x32x32xbf16>
    %11 = vector.shape_cast %10 : vector<1x32x32xbf16> to vector<32x32xbf16>
    %12 = vector.extract_strided_slice %1 {offsets = [5, 0, 0], sizes = [1, 32, 32], strides = [1, 1, 1]} : vector<6x32x32xbf16> to vector<1x32x32xbf16>
    %13 = vector.shape_cast %12 : vector<1x32x32xbf16> to vector<32x32xbf16>
    %c0_4 = arith.constant 0 : index
    %c0_5 = arith.constant 0 : index
    %14 = vector.load %arg7[%c0_4, %c0_5] : memref<32x64xbf16, #tpu.memory_space<vmem>>, vector<32x64xbf16>
    %c0_6 = arith.constant 0 : index
    %c0_7 = arith.constant 0 : index
    %15 = vector.load %arg8[%c0_6, %c0_7] : memref<64x32xbf16, #tpu.memory_space<vmem>>, vector<64x32xbf16>
    %c0_8 = arith.constant 0 : index
    %c0_9 = arith.constant 0 : index
    %16 = vector.load %arg9[%c0_8, %c0_9] : memref<17x64xf32, #tpu.memory_space<vmem>>, vector<17x64xf32>
    %17 = vector.extract_strided_slice %16 {offsets = [0, 0], sizes = [1, 64], strides = [1, 1]} : vector<17x64xf32> to vector<1x64xf32>
    %18 = vector.shape_cast %17 : vector<1x64xf32> to vector<1x64xf32>
    %19 = vector.broadcast %18 : vector<1x64xf32> to vector<16x64xf32>
    %20 = vector.extract_strided_slice %16 {offsets = [1, 0], sizes = [1, 32], strides = [1, 1]} : vector<17x64xf32> to vector<1x32xf32>
    %21 = vector.shape_cast %20 : vector<1x32xf32> to vector<1x32xf32>
    %22 = vector.broadcast %21 : vector<1x32xf32> to vector<16x32xf32>
    %23 = vector.extract_strided_slice %16 {offsets = [2, 0], sizes = [1, 32], strides = [1, 1]} : vector<17x64xf32> to vector<1x32xf32>
    %24 = vector.shape_cast %23 : vector<1x32xf32> to vector<1x32xf32>
    %25 = vector.broadcast %24 : vector<1x32xf32> to vector<16x32xf32>
    %26 = vector.extract_strided_slice %16 {offsets = [3, 0], sizes = [1, 32], strides = [1, 1]} : vector<17x64xf32> to vector<1x32xf32>
    %27 = vector.shape_cast %26 : vector<1x32xf32> to vector<1x32xf32>
    %28 = vector.broadcast %27 : vector<1x32xf32> to vector<16x32xf32>
    %29 = vector.extract_strided_slice %16 {offsets = [4, 0], sizes = [1, 32], strides = [1, 1]} : vector<17x64xf32> to vector<1x32xf32>
    %30 = vector.shape_cast %29 : vector<1x32xf32> to vector<1x32xf32>
    %31 = vector.broadcast %30 : vector<1x32xf32> to vector<16x32xf32>
    %32 = vector.extract_strided_slice %16 {offsets = [5, 0], sizes = [1, 32], strides = [1, 1]} : vector<17x64xf32> to vector<1x32xf32>
    %33 = vector.shape_cast %32 : vector<1x32xf32> to vector<1x32xf32>
    %34 = vector.broadcast %33 : vector<1x32xf32> to vector<16x32xf32>
    %35 = vector.extract_strided_slice %16 {offsets = [8, 0], sizes = [1, 32], strides = [1, 1]} : vector<17x64xf32> to vector<1x32xf32>
    %36 = vector.shape_cast %35 : vector<1x32xf32> to vector<1x32xf32>
    %37 = vector.broadcast %36 : vector<1x32xf32> to vector<16x32xf32>
    %38 = vector.extract_strided_slice %16 {offsets = [9, 0], sizes = [1, 32], strides = [1, 1]} : vector<17x64xf32> to vector<1x32xf32>
    %39 = vector.shape_cast %38 : vector<1x32xf32> to vector<1x32xf32>
    %40 = vector.broadcast %39 : vector<1x32xf32> to vector<16x32xf32>
    %41 = vector.extract_strided_slice %16 {offsets = [10, 0], sizes = [1, 32], strides = [1, 1]} : vector<17x64xf32> to vector<1x32xf32>
    %42 = vector.shape_cast %41 : vector<1x32xf32> to vector<1x32xf32>
    %43 = vector.broadcast %42 : vector<1x32xf32> to vector<16x32xf32>
    %44 = vector.extract_strided_slice %16 {offsets = [11, 0], sizes = [1, 64], strides = [1, 1]} : vector<17x64xf32> to vector<1x64xf32>
    %45 = vector.shape_cast %44 : vector<1x64xf32> to vector<1x64xf32>
    %46 = vector.broadcast %45 : vector<1x64xf32> to vector<16x64xf32>
    %47 = vector.extract_strided_slice %16 {offsets = [12, 0], sizes = [1, 32], strides = [1, 1]} : vector<17x64xf32> to vector<1x32xf32>
    %48 = vector.shape_cast %47 : vector<1x32xf32> to vector<1x32xf32>
    %49 = vector.broadcast %48 : vector<1x32xf32> to vector<16x32xf32>
    %50 = vector.extract_strided_slice %16 {offsets = [13, 0], sizes = [1, 32], strides = [1, 1]} : vector<17x64xf32> to vector<1x32xf32>
    %51 = vector.shape_cast %50 : vector<1x32xf32> to vector<1x32xf32>
    %52 = vector.broadcast %51 : vector<1x32xf32> to vector<16x32xf32>
    %53 = vector.extract_strided_slice %16 {offsets = [14, 0], sizes = [1, 32], strides = [1, 1]} : vector<17x64xf32> to vector<1x32xf32>
    %54 = vector.shape_cast %53 : vector<1x32xf32> to vector<1x32xf32>
    %55 = vector.broadcast %54 : vector<1x32xf32> to vector<16x32xf32>
    %56 = vector.extract_strided_slice %16 {offsets = [15, 0], sizes = [1, 32], strides = [1, 1]} : vector<17x64xf32> to vector<1x32xf32>
    %57 = vector.shape_cast %56 : vector<1x32xf32> to vector<1x32xf32>
    %58 = vector.broadcast %57 : vector<1x32xf32> to vector<16x32xf32>
    %59 = vector.extract_strided_slice %16 {offsets = [16, 0], sizes = [1, 32], strides = [1, 1]} : vector<17x64xf32> to vector<1x32xf32>
    %60 = vector.shape_cast %59 : vector<1x32xf32> to vector<1x32xf32>
    %61 = vector.broadcast %60 : vector<1x32xf32> to vector<16x32xf32>
    %c0_10 = arith.constant 0 : index
    %c0_11 = arith.constant 0 : index
    %c0_12 = arith.constant 0 : index
    %62 = vector.load %arg1[%c0_10, %c0_11, %c0_12] : memref<1x16x32xbf16, #tpu.memory_space<vmem>>, vector<1x16x32xbf16>
    %63 = arith.extf %62 : vector<1x16x32xbf16> to vector<1x16x32xf32>
    %64 = vector.shape_cast %63 : vector<1x16x32xf32> to vector<16x32xf32>
    %c0_13 = arith.constant 0 : index
    %c0_14 = arith.constant 0 : index
    %c0_15 = arith.constant 0 : index
    %65 = vector.load %arg3[%c0_13, %c0_14, %c0_15] : memref<1x16x32xbf16, #tpu.memory_space<vmem>>, vector<1x16x32xbf16>
    %66 = arith.extf %65 : vector<1x16x32xbf16> to vector<1x16x32xf32>
    %67 = vector.shape_cast %66 : vector<1x16x32xf32> to vector<16x32xf32>
    %c0_16 = arith.constant 0 : index
    %c0_17 = arith.constant 0 : index
    %c0_18 = arith.constant 0 : index
    %68 = vector.load %arg2[%c0_16, %c0_17, %c0_18] : memref<1x16x32xbf16, #tpu.memory_space<vmem>>, vector<1x16x32xbf16>
    %69 = arith.extf %68 : vector<1x16x32xbf16> to vector<1x16x32xf32>
    %c0_19 = arith.constant 0 : index
    %c0_20 = arith.constant 0 : index
    %c0_21 = arith.constant 0 : index
    %70 = vector.load %arg4[%c0_19, %c0_20, %c0_21] : memref<1x16x32xbf16, #tpu.memory_space<vmem>>, vector<1x16x32xbf16>
    %71 = arith.extf %70 : vector<1x16x32xbf16> to vector<1x16x32xf32>
    %72 = arith.addf %69, %71 : vector<1x16x32xf32>
    %73 = vector.shape_cast %72 : vector<1x16x32xf32> to vector<16x32xf32>
    %74 = arith.truncf %73 : vector<16x32xf32> to vector<16x32xbf16>
    %75 = vector.shape_cast %69 : vector<1x16x32xf32> to vector<16x32xf32>
    %76 = arith.truncf %75 : vector<16x32xf32> to vector<16x32xbf16>
    %cst = arith.constant dense<0.000000e+00> : vector<16x32xf32>
    %77 = tpu.matmul %74, %7, %cst {dimension_numbers = #tpu.dot_dimension_numbers<[1], [0], [0], [1], [0, 0, 1, 1], [], []>} : vector<16x32xbf16>, vector<32x32xbf16>, vector<16x32xf32> -> vector<16x32xf32>
    %78 = vector.extract_strided_slice %16 {offsets = [6, 0], sizes = [1, 32], strides = [1, 1]} : vector<17x64xf32> to vector<1x32xf32>
    %79 = vector.shape_cast %78 : vector<1x32xf32> to vector<1x32xf32>
    %80 = vector.broadcast %79 : vector<1x32xf32> to vector<16x32xf32>
    %81 = arith.addf %77, %80 : vector<16x32xf32>
    %cst_22 = arith.constant dense<0.000000e+00> : vector<16x32xf32>
    %82 = tpu.matmul %76, %9, %cst_22 {dimension_numbers = #tpu.dot_dimension_numbers<[1], [0], [0], [1], [0, 0, 1, 1], [], []>} : vector<16x32xbf16>, vector<32x32xbf16>, vector<16x32xf32> -> vector<16x32xf32>
    %83 = vector.extract_strided_slice %16 {offsets = [7, 0], sizes = [1, 32], strides = [1, 1]} : vector<17x64xf32> to vector<1x32xf32>
    %84 = vector.shape_cast %83 : vector<1x32xf32> to vector<1x32xf32>
    %85 = vector.broadcast %84 : vector<1x32xf32> to vector<16x32xf32>
    %86 = arith.addf %82, %85 : vector<16x32xf32>
    %87 = vector.shape_cast %81 : vector<16x32xf32> to vector<1x16x4x8xf32>
    %88 = tpu.transpose %87, [0, 2, 1, 3] : vector<1x16x4x8xf32> -> vector<1x4x16x8xf32>
    %89 = vector.shape_cast %88 : vector<1x4x16x8xf32> to vector<4x16x8xf32>
    %90 = arith.truncf %89 : vector<4x16x8xf32> to vector<4x16x8xbf16>
    %91 = vector.shape_cast %86 : vector<16x32xf32> to vector<1x16x4x8xf32>
    %92 = tpu.transpose %91, [0, 2, 1, 3] : vector<1x16x4x8xf32> -> vector<1x4x16x8xf32>
    %93 = vector.shape_cast %92 : vector<1x4x16x8xf32> to vector<4x16x8xf32>
    %94 = arith.truncf %93 : vector<4x16x8xf32> to vector<4x16x8xbf16>
    %c0_i32 = arith.constant 0 : i32
    %c2_i32 = arith.constant 2 : i32
    %95 = arith.addi %c0_i32, %c2_i32 : i32
    %c1_i32 = arith.constant 1 : i32
    %96 = scf.for %arg11 = %c0_i32 to %95 step %c1_i32 iter_args(%arg12 = %64) -> (vector<16x32xf32>)  : i32 {
      %118 = arith.addf %arg12, %67 : vector<16x32xf32>
      %119 = arith.truncf %118 : vector<16x32xf32> to vector<16x32xbf16>
      %cst_31 = arith.constant dense<0.000000e+00> : vector<16x64xf32>
      %120 = tpu.matmul %119, %0, %cst_31 {dimension_numbers = #tpu.dot_dimension_numbers<[1], [0], [0], [1], [0, 0, 1, 1], [], []>} : vector<16x32xbf16>, vector<32x64xbf16>, vector<16x64xf32> -> vector<16x64xf32>
      %121 = arith.addf %120, %19 : vector<16x64xf32>
      %122 = arith.truncf %arg12 : vector<16x32xf32> to vector<16x32xbf16>
      %cst_32 = arith.constant dense<0.000000e+00> : vector<16x32xf32>
      %123 = tpu.matmul %122, %3, %cst_32 {dimension_numbers = #tpu.dot_dimension_numbers<[1], [0], [0], [1], [0, 0, 1, 1], [], []>} : vector<16x32xbf16>, vector<32x32xbf16>, vector<16x32xf32> -> vector<16x32xf32>
      %124 = arith.addf %123, %22 : vector<16x32xf32>
      %125 = vector.extract_strided_slice %121 {offsets = [0, 0], sizes = [16, 32], strides = [1, 1]} : vector<16x64xf32> to vector<16x32xf32>
      %126 = vector.shape_cast %125 : vector<16x32xf32> to vector<2x8x4x8xf32>
      %127 = tpu.transpose %126, [0, 2, 1, 3] : vector<2x8x4x8xf32> -> vector<2x4x8x8xf32>
      %128 = vector.shape_cast %127 : vector<2x4x8x8xf32> to vector<8x8x8xf32>
      %129 = arith.truncf %128 : vector<8x8x8xf32> to vector<8x8x8xbf16>
      %130 = vector.extract_strided_slice %121 {offsets = [0, 32], sizes = [16, 32], strides = [1, 1]} : vector<16x64xf32> to vector<16x32xf32>
      %131 = vector.shape_cast %130 : vector<16x32xf32> to vector<2x8x4x8xf32>
      %132 = tpu.transpose %131, [0, 2, 1, 3] : vector<2x8x4x8xf32> -> vector<2x4x8x8xf32>
      %133 = vector.shape_cast %132 : vector<2x4x8x8xf32> to vector<8x8x8xf32>
      %134 = arith.truncf %133 : vector<8x8x8xf32> to vector<8x8x8xbf16>
      %135 = vector.shape_cast %124 : vector<16x32xf32> to vector<2x8x4x8xf32>
      %136 = tpu.transpose %135, [0, 2, 1, 3] : vector<2x8x4x8xf32> -> vector<2x4x8x8xf32>
      %137 = vector.shape_cast %136 : vector<2x4x8x8xf32> to vector<8x8x8xf32>
      %138 = arith.truncf %137 : vector<8x8x8xf32> to vector<8x8x8xbf16>
      "tpu.trace_start"() <{level = 10 : i32, message = "blf,bmf->blm"}> : () -> ()
      %cst_33 = arith.constant dense<0.000000e+00> : vector<8x8x8xf32>
      %139 = tpu.matmul %129, %134, %cst_33 {dimension_numbers = #tpu.dot_dimension_numbers<[2], [2], [1], [1], [0, 0, 0, 1, 1, 1], [0], [0]>} : vector<8x8x8xbf16>, vector<8x8x8xbf16>, vector<8x8x8xf32> -> vector<8x8x8xf32>
      "tpu.trace_stop"() : () -> ()
      %cst_34 = arith.constant 0.353553385 : f32
      %140 = vector.broadcast %cst_34 : f32 to vector<8x8x8xf32>
      %141 = arith.mulf %139, %140 : vector<8x8x8xf32>
      %cst_35 = arith.constant dense<0xFF800000> : vector<8x8xf32>
      %142 = vector.multi_reduction <maximumf>, %141, %cst_35 [2] : vector<8x8x8xf32> to vector<8x8xf32>
      %143 = vector.shape_cast %142 : vector<8x8xf32> to vector<8x8x1xf32>
      %144 = vector.broadcast %143 : vector<8x8x1xf32> to vector<8x8x8xf32>
      %145 = arith.subf %141, %144 : vector<8x8x8xf32>
      %146 = math.exp %145 : vector<8x8x8xf32>
      %cst_36 = arith.constant dense<0.000000e+00> : vector<8x8xf32>
      %147 = vector.multi_reduction <add>, %146, %cst_36 [2] : vector<8x8x8xf32> to vector<8x8xf32>
      %148 = vector.shape_cast %147 : vector<8x8xf32> to vector<8x8x1xf32>
      %149 = tpu.reciprocal %148 {approx = true} : vector<8x8x1xf32> -> vector<8x8x1xf32>
      %150 = vector.broadcast %149 : vector<8x8x1xf32> to vector<8x8x8xf32>
      %151 = arith.mulf %146, %150 : vector<8x8x8xf32>
      %152 = arith.truncf %151 : vector<8x8x8xf32> to vector<8x8x8xbf16>
      "tpu.trace_start"() <{level = 10 : i32, message = "blm,bmf->blf"}> : () -> ()
      %cst_37 = arith.constant dense<0.000000e+00> : vector<8x8x8xf32>
      %153 = tpu.matmul %152, %138, %cst_37 {dimension_numbers = #tpu.dot_dimension_numbers<[2], [1], [1], [2], [0, 0, 0, 1, 1, 2], [0], [0]>} : vector<8x8x8xbf16>, vector<8x8x8xbf16>, vector<8x8x8xf32> -> vector<8x8x8xf32>
      "tpu.trace_stop"() : () -> ()
      %154 = vector.shape_cast %153 : vector<8x8x8xf32> to vector<2x4x8x8xf32>
      %155 = tpu.transpose %154, [0, 2, 1, 3] : vector<2x4x8x8xf32> -> vector<2x8x4x8xf32>
      %156 = vector.shape_cast %155 : vector<2x8x4x8xf32> to vector<16x32xf32>
      %157 = arith.truncf %156 : vector<16x32xf32> to vector<16x32xbf16>
      %cst_38 = arith.constant dense<0.000000e+00> : vector<16x32xf32>
      %158 = tpu.matmul %157, %11, %cst_38 {dimension_numbers = #tpu.dot_dimension_numbers<[1], [0], [0], [1], [0, 0, 1, 1], [], []>} : vector<16x32xbf16>, vector<32x32xbf16>, vector<16x32xf32> -> vector<16x32xf32>
      %159 = arith.addf %158, %25 : vector<16x32xf32>
      %160 = arith.addf %arg12, %159 : vector<16x32xf32>
      %cst_39 = arith.constant dense<0.000000e+00> : vector<16xf32>
      %161 = vector.multi_reduction <add>, %160, %cst_39 [1] : vector<16x32xf32> to vector<16xf32>
      %162 = vector.shape_cast %161 : vector<16xf32> to vector<16x1xf32>
      %cst_40 = arith.constant 3.200000e+01 : f32
      %163 = vector.broadcast %cst_40 : f32 to vector<16x1xf32>
      %164 = arith.divf %162, %163 : vector<16x1xf32>
      %165 = vector.broadcast %164 : vector<16x1xf32> to vector<16x32xf32>
      %166 = arith.subf %160, %165 : vector<16x32xf32>
      %167 = arith.mulf %166, %166 : vector<16x32xf32>
      %cst_41 = arith.constant dense<0.000000e+00> : vector<16xf32>
      %168 = vector.multi_reduction <add>, %167, %cst_41 [1] : vector<16x32xf32> to vector<16xf32>
      %169 = vector.shape_cast %168 : vector<16xf32> to vector<16x1xf32>
      %cst_42 = arith.constant 3.200000e+01 : f32
      %170 = vector.broadcast %cst_42 : f32 to vector<16x1xf32>
      %171 = arith.divf %169, %170 : vector<16x1xf32>
      %cst_43 = arith.constant 9.99999974E-6 : f32
      %172 = vector.broadcast %cst_43 : f32 to vector<16x1xf32>
      %173 = arith.addf %171, %172 : vector<16x1xf32>
      %174 = math.rsqrt %173 : vector<16x1xf32>
      %175 = vector.broadcast %174 : vector<16x1xf32> to vector<16x32xf32>
      %176 = arith.mulf %166, %175 : vector<16x32xf32>
      %177 = arith.mulf %176, %28 : vector<16x32xf32>
      %178 = arith.addf %177, %31 : vector<16x32xf32>
      %179 = arith.addf %178, %67 : vector<16x32xf32>
      %180 = arith.truncf %179 : vector<16x32xf32> to vector<16x32xbf16>
      %cst_44 = arith.constant dense<0.000000e+00> : vector<16x32xf32>
      %181 = tpu.matmul %180, %5, %cst_44 {dimension_numbers = #tpu.dot_dimension_numbers<[1], [0], [0], [1], [0, 0, 1, 1], [], []>} : vector<16x32xbf16>, vector<32x32xbf16>, vector<16x32xf32> -> vector<16x32xf32>
      %182 = arith.addf %181, %34 : vector<16x32xf32>
      %183 = vector.shape_cast %182 : vector<16x32xf32> to vector<1x16x4x8xf32>
      %184 = tpu.transpose %183, [0, 2, 1, 3] : vector<1x16x4x8xf32> -> vector<1x4x16x8xf32>
      %185 = vector.shape_cast %184 : vector<1x4x16x8xf32> to vector<4x16x8xf32>
      %186 = arith.truncf %185 : vector<4x16x8xf32> to vector<4x16x8xbf16>
      "tpu.trace_start"() <{level = 10 : i32, message = "bnf,bmf->bnm"}> : () -> ()
      %cst_45 = arith.constant dense<0.000000e+00> : vector<4x16x16xf32>
      %187 = tpu.matmul %186, %90, %cst_45 {dimension_numbers = #tpu.dot_dimension_numbers<[2], [2], [1], [1], [0, 0, 0, 1, 1, 1], [0], [0]>} : vector<4x16x8xbf16>, vector<4x16x8xbf16>, vector<4x16x16xf32> -> vector<4x16x16xf32>
      "tpu.trace_stop"() : () -> ()
      %cst_46 = arith.constant 0.353553385 : f32
      %188 = vector.broadcast %cst_46 : f32 to vector<4x16x16xf32>
      %189 = arith.mulf %187, %188 : vector<4x16x16xf32>
      %cst_47 = arith.constant dense<0xFF800000> : vector<4x16xf32>
      %190 = vector.multi_reduction <maximumf>, %189, %cst_47 [2] : vector<4x16x16xf32> to vector<4x16xf32>
      %191 = vector.shape_cast %190 : vector<4x16xf32> to vector<4x16x1xf32>
      %192 = vector.broadcast %191 : vector<4x16x1xf32> to vector<4x16x16xf32>
      %193 = arith.subf %189, %192 : vector<4x16x16xf32>
      %194 = math.exp %193 : vector<4x16x16xf32>
      %cst_48 = arith.constant dense<0.000000e+00> : vector<4x16xf32>
      %195 = vector.multi_reduction <add>, %194, %cst_48 [2] : vector<4x16x16xf32> to vector<4x16xf32>
      %196 = vector.shape_cast %195 : vector<4x16xf32> to vector<4x16x1xf32>
      %197 = tpu.reciprocal %196 {approx = true} : vector<4x16x1xf32> -> vector<4x16x1xf32>
      %198 = vector.broadcast %197 : vector<4x16x1xf32> to vector<4x16x16xf32>
      %199 = arith.mulf %194, %198 : vector<4x16x16xf32>
      %200 = arith.truncf %199 : vector<4x16x16xf32> to vector<4x16x16xbf16>
      "tpu.trace_start"() <{level = 10 : i32, message = "bnm,bmf->bnf"}> : () -> ()
      %cst_49 = arith.constant dense<0.000000e+00> : vector<4x16x8xf32>
      %201 = tpu.matmul %200, %94, %cst_49 {dimension_numbers = #tpu.dot_dimension_numbers<[2], [1], [1], [2], [0, 0, 0, 1, 1, 2], [0], [0]>} : vector<4x16x16xbf16>, vector<4x16x8xbf16>, vector<4x16x8xf32> -> vector<4x16x8xf32>
      "tpu.trace_stop"() : () -> ()
      %202 = vector.shape_cast %201 : vector<4x16x8xf32> to vector<1x4x16x8xf32>
      %203 = tpu.transpose %202, [0, 2, 1, 3] : vector<1x4x16x8xf32> -> vector<1x16x4x8xf32>
      %204 = vector.shape_cast %203 : vector<1x16x4x8xf32> to vector<16x32xf32>
      %205 = arith.truncf %204 : vector<16x32xf32> to vector<16x32xbf16>
      %cst_50 = arith.constant dense<0.000000e+00> : vector<16x32xf32>
      %206 = tpu.matmul %205, %13, %cst_50 {dimension_numbers = #tpu.dot_dimension_numbers<[1], [0], [0], [1], [0, 0, 1, 1], [], []>} : vector<16x32xbf16>, vector<32x32xbf16>, vector<16x32xf32> -> vector<16x32xf32>
      %207 = arith.addf %206, %37 : vector<16x32xf32>
      %208 = arith.addf %178, %207 : vector<16x32xf32>
      %cst_51 = arith.constant dense<0.000000e+00> : vector<16xf32>
      %209 = vector.multi_reduction <add>, %208, %cst_51 [1] : vector<16x32xf32> to vector<16xf32>
      %210 = vector.shape_cast %209 : vector<16xf32> to vector<16x1xf32>
      %cst_52 = arith.constant 3.200000e+01 : f32
      %211 = vector.broadcast %cst_52 : f32 to vector<16x1xf32>
      %212 = arith.divf %210, %211 : vector<16x1xf32>
      %213 = vector.broadcast %212 : vector<16x1xf32> to vector<16x32xf32>
      %214 = arith.subf %208, %213 : vector<16x32xf32>
      %215 = arith.mulf %214, %214 : vector<16x32xf32>
      %cst_53 = arith.constant dense<0.000000e+00> : vector<16xf32>
      %216 = vector.multi_reduction <add>, %215, %cst_53 [1] : vector<16x32xf32> to vector<16xf32>
      %217 = vector.shape_cast %216 : vector<16xf32> to vector<16x1xf32>
      %cst_54 = arith.constant 3.200000e+01 : f32
      %218 = vector.broadcast %cst_54 : f32 to vector<16x1xf32>
      %219 = arith.divf %217, %218 : vector<16x1xf32>
      %cst_55 = arith.constant 9.99999974E-6 : f32
      %220 = vector.broadcast %cst_55 : f32 to vector<16x1xf32>
      %221 = arith.addf %219, %220 : vector<16x1xf32>
      %222 = math.rsqrt %221 : vector<16x1xf32>
      %223 = vector.broadcast %222 : vector<16x1xf32> to vector<16x32xf32>
      %224 = arith.mulf %214, %223 : vector<16x32xf32>
      %225 = arith.mulf %224, %40 : vector<16x32xf32>
      %226 = arith.addf %225, %43 : vector<16x32xf32>
      %227 = arith.truncf %226 : vector<16x32xf32> to vector<16x32xbf16>
      %cst_56 = arith.constant dense<0.000000e+00> : vector<16x64xf32>
      %228 = tpu.matmul %227, %14, %cst_56 {dimension_numbers = #tpu.dot_dimension_numbers<[1], [0], [0], [1], [0, 0, 1, 1], [], []>} : vector<16x32xbf16>, vector<32x64xbf16>, vector<16x64xf32> -> vector<16x64xf32>
      %229 = arith.addf %228, %46 : vector<16x64xf32>
      %cst_57 = arith.constant 0.000000e+00 : f32
      %230 = vector.broadcast %cst_57 : f32 to vector<16x64xf32>
      %231 = arith.maximumf %229, %230 : vector<16x64xf32>
      %232 = arith.truncf %231 : vector<16x64xf32> to vector<16x64xbf16>
      %cst_58 = arith.constant dense<0.000000e+00> : vector<16x32xf32>
      %233 = tpu.matmul %232, %15, %cst_58 {dimension_numbers = #tpu.dot_dimension_numbers<[1], [0], [0], [1], [0, 0, 1, 1], [], []>} : vector<16x64xbf16>, vector<64x32xbf16>, vector<16x32xf32> -> vector<16x32xf32>
      %234 = arith.addf %233, %49 : vector<16x32xf32>
      %235 = arith.addf %226, %234 : vector<16x32xf32>
      %cst_59 = arith.constant dense<0.000000e+00> : vector<16xf32>
      %236 = vector.multi_reduction <add>, %235, %cst_59 [1] : vector<16x32xf32> to vector<16xf32>
      %237 = vector.shape_cast %236 : vector<16xf32> to vector<16x1xf32>
      %cst_60 = arith.constant 3.200000e+01 : f32
      %238 = vector.broadcast %cst_60 : f32 to vector<16x1xf32>
      %239 = arith.divf %237, %238 : vector<16x1xf32>
      %240 = vector.broadcast %239 : vector<16x1xf32> to vector<16x32xf32>
      %241 = arith.subf %235, %240 : vector<16x32xf32>
      %242 = arith.mulf %241, %241 : vector<16x32xf32>
      %cst_61 = arith.constant dense<0.000000e+00> : vector<16xf32>
      %243 = vector.multi_reduction <add>, %242, %cst_61 [1] : vector<16x32xf32> to vector<16xf32>
      %244 = vector.shape_cast %243 : vector<16xf32> to vector<16x1xf32>
      %cst_62 = arith.constant 3.200000e+01 : f32
      %245 = vector.broadcast %cst_62 : f32 to vector<16x1xf32>
      %246 = arith.divf %244, %245 : vector<16x1xf32>
      %cst_63 = arith.constant 9.99999974E-6 : f32
      %247 = vector.broadcast %cst_63 : f32 to vector<16x1xf32>
      %248 = arith.addf %246, %247 : vector<16x1xf32>
      %249 = math.rsqrt %248 : vector<16x1xf32>
      %250 = vector.broadcast %249 : vector<16x1xf32> to vector<16x32xf32>
      %251 = arith.mulf %241, %250 : vector<16x32xf32>
      %252 = arith.mulf %251, %52 : vector<16x32xf32>
      %253 = arith.addf %252, %55 : vector<16x32xf32>
      scf.yield %253 : vector<16x32xf32>
    }
    %cst_23 = arith.constant dense<0.000000e+00> : vector<16xf32>
    %97 = vector.multi_reduction <add>, %96, %cst_23 [1] : vector<16x32xf32> to vector<16xf32>
    %98 = vector.shape_cast %97 : vector<16xf32> to vector<16x1xf32>
    %cst_24 = arith.constant 3.200000e+01 : f32
    %99 = vector.broadcast %cst_24 : f32 to vector<16x1xf32>
    %100 = arith.divf %98, %99 : vector<16x1xf32>
    %101 = vector.broadcast %100 : vector<16x1xf32> to vector<16x32xf32>
    %102 = arith.subf %96, %101 : vector<16x32xf32>
    %103 = arith.mulf %102, %102 : vector<16x32xf32>
    %cst_25 = arith.constant dense<0.000000e+00> : vector<16xf32>
    %104 = vector.multi_reduction <add>, %103, %cst_25 [1] : vector<16x32xf32> to vector<16xf32>
    %105 = vector.shape_cast %104 : vector<16xf32> to vector<16x1xf32>
    %cst_26 = arith.constant 3.200000e+01 : f32
    %106 = vector.broadcast %cst_26 : f32 to vector<16x1xf32>
    %107 = arith.divf %105, %106 : vector<16x1xf32>
    %cst_27 = arith.constant 9.99999974E-6 : f32
    %108 = vector.broadcast %cst_27 : f32 to vector<16x1xf32>
    %109 = arith.addf %107, %108 : vector<16x1xf32>
    %110 = math.rsqrt %109 : vector<16x1xf32>
    %111 = vector.broadcast %110 : vector<16x1xf32> to vector<16x32xf32>
    %112 = arith.mulf %102, %111 : vector<16x32xf32>
    %113 = arith.mulf %112, %58 : vector<16x32xf32>
    %114 = arith.addf %113, %61 : vector<16x32xf32>
    %115 = vector.shape_cast %114 : vector<16x32xf32> to vector<1x16x32xf32>
    %116 = arith.truncf %115 : vector<1x16x32xf32> to vector<1x16x32xbf16>
    %c0_28 = arith.constant 0 : index
    %c0_29 = arith.constant 0 : index
    %c0_30 = arith.constant 0 : index
    %117 = vector.load %arg10[%c0_28, %c0_29, %c0_30] : memref<1x16x32xbf16, #tpu.memory_space<vmem>>, vector<1x16x32xbf16>
    tpu.vector_store %arg10[%c0_28, %c0_29, %c0_30], %116 {strides = array<i32>} : memref<1x16x32xbf16, #tpu.memory_space<vmem>>, vector<1x16x32xbf16>,
    return
  }
  func.func @transform_0(%arg0: i32) -> (i32, i32, i32) {
    %c0_i32 = arith.constant 0 : i32
    %c0_i32_0 = arith.constant 0 : i32
    %c0_i32_1 = arith.constant 0 : i32
    return %arg0, %c0_i32, %c0_i32_0 : i32, i32, i32
  }
  func.func @transform_1(%arg0: i32) -> (i32, i32, i32) {
    %c0_i32 = arith.constant 0 : i32
    %c0_i32_0 = arith.constant 0 : i32
    %c0_i32_1 = arith.constant 0 : i32
    return %arg0, %c0_i32, %c0_i32_0 : i32, i32, i32
  }
  func.func @transform_2(%arg0: i32) -> (i32, i32, i32) {
    %c0_i32 = arith.constant 0 : i32
    %c0_i32_0 = arith.constant 0 : i32
    %c0_i32_1 = arith.constant 0 : i32
    return %arg0, %c0_i32, %c0_i32_0 : i32, i32, i32
  }
  func.func @transform_3(%arg0: i32) -> (i32, i32, i32) {
    %c0_i32 = arith.constant 0 : i32
    %c0_i32_0 = arith.constant 0 : i32
    %c0_i32_1 = arith.constant 0 : i32
    return %arg0, %c0_i32, %c0_i32_0 : i32, i32, i32
  }
  func.func @transform_4(%arg0: i32) -> (i32, i32) {
    %c0_i32 = arith.constant 0 : i32
    %c0_i32_0 = arith.constant 0 : i32
    %c0_i32_1 = arith.constant 0 : i32
    return %c0_i32, %c0_i32_0 : i32, i32
  }
  func.func @transform_5(%arg0: i32) -> (i32, i32, i32) {
    %c0_i32 = arith.constant 0 : i32
    %c0_i32_0 = arith.constant 0 : i32
    %c0_i32_1 = arith.constant 0 : i32
    %c0_i32_2 = arith.constant 0 : i32
    return %c0_i32, %c0_i32_0, %c0_i32_1 : i32, i32, i32
  }
  func.func @transform_6(%arg0: i32) -> (i32, i32) {
    %c0_i32 = arith.constant 0 : i32
    %c0_i32_0 = arith.constant 0 : i32
    %c0_i32_1 = arith.constant 0 : i32
    return %c0_i32, %c0_i32_0 : i32, i32
  }
  func.func @transform_7(%arg0: i32) -> (i32, i32) {
    %c0_i32 = arith.constant 0 : i32
    %c0_i32_0 = arith.constant 0 : i32
    %c0_i32_1 = arith.constant 0 : i32
    return %c0_i32, %c0_i32_0 : i32, i32
  }
  func.func @transform_8(%arg0: i32) -> (i32, i32) {
    %c0_i32 = arith.constant 0 : i32
    %c0_i32_0 = arith.constant 0 : i32
    %c0_i32_1 = arith.constant 0 : i32
    return %c0_i32, %c0_i32_0 : i32, i32
  }
  func.func @transform_9(%arg0: i32) -> (i32, i32, i32) {
    %c0_i32 = arith.constant 0 : i32
    %c0_i32_0 = arith.constant 0 : i32
    %c0_i32_1 = arith.constant 0 : i32
    return %arg0, %c0_i32, %c0_i32_0 : i32, i32, i32
  }
}

</mosaic_0001>

<llo_original>
// kernel: tpu_custom_call.1
$region0: #{tpu_custom_call.1}
  #allocation0 [shape = 'u32[]', space=smem, size = 0x4, offset = 0x4, fixed_abs, tag = 'smem constant byte address 0x4 - core index']
  #allocation1 [shape = 'u32[72,128]{1,0:T(1,128)}', space=vmem, size = 0x9000, scoped, tag = 'internal scratch']
  %s0 = inlined_call_operand.vmem [shape: bf16[2,16,32], index: 0, kind: input, shape index: {}]
  %s1 = inlined_call_operand.hbm [shape: bf16[2,16,32], index: 1, kind: input, shape index: {}]
  %s2 = inlined_call_operand.hbm [shape: bf16[2,16,32], index: 2, kind: input, shape index: {}]
  %s3 = inlined_call_operand.hbm [shape: bf16[2,16,32], index: 3, kind: input, shape index: {}]
  %s4 = inlined_call_operand.hbm [shape: bf16[32,64], index: 4, kind: input, shape index: {}]
  %s5 = inlined_call_operand.hbm [shape: bf16[6,32,32], index: 5, kind: input, shape index: {}]
  %s6 = inlined_call_operand.hbm [shape: bf16[32,64], index: 6, kind: input, shape index: {}]
  %s7 = inlined_call_operand.vmem [shape: bf16[64,32], index: 7, kind: input, shape index: {}]
  %s8 = inlined_call_operand.vmem [shape: f32[17,64], index: 8, kind: input, shape index: {}]
  %s9 = inlined_call_operand.hbm [shape: bf16[2,16,32], index: 9, kind: output, shape index: {}]
  %s10 = sld [smem:[#allocation0]]
  $region100: #{tpu_custom_call.1} parent=0
    _
  %s12 = ssub.s32 1, %s10
  %s13 = scalar_select 0, %s12, %s10
  $region1: #{tpu_custom_call.1} parent=0
    #allocation2 [shape = 'u8[8192]{0}', space=vmem, size = 0x2000, scoped, tag = 'input window, operand 1']
    #allocation3 [shape = 's32[2]{0}', space=sflag, size = 0x8, scoped, tag = 'scoped memory for tpu_custom_call.1']
    #allocation4 [shape = 's32[2]{0}', space=sflag, size = 0x8, scoped, tag = 'scoped memory for tpu_custom_call.1']
    #allocation5 [shape = 'u8[8192]{0}', space=vmem, size = 0x2000, scoped, tag = 'input window, operand 2']
    #allocation6 [shape = 's32[2]{0}', space=sflag, size = 0x8, scoped, tag = 'scoped memory for tpu_custom_call.1']
    #allocation7 [shape = 'u8[8192]{0}', space=vmem, size = 0x2000, scoped, tag = 'input window, operand 3']
    #allocation8 [shape = 'u8[8192]{0}', space=vmem, size = 0x2000, scoped, tag = 'input window, operand 4, single buffered']
    #allocation9 [shape = 's32[1]{0}', space=sflag, size = 0x4, scoped, tag = 'scoped memory for tpu_custom_call.1']
    #allocation10 [shape = 'u8[49152]{0}', space=vmem, size = 0xc000, scoped, tag = 'input window, operand 5, single buffered']
    #allocation11 [shape = 'u8[8192]{0}', space=vmem, size = 0x2000, scoped, tag = 'input window, operand 6, single buffered']
    #allocation12 [shape = 's32[1]{0}', space=sflag, size = 0x4, scoped, tag = 'scoped memory for tpu_custom_call.1']
    #allocation13 [shape = 'u8[8192]{0}', space=vmem, size = 0x2000, scoped, tag = 'output window, operand 0']
    %14 = vsyncpa [#allocation3], 0
    %s15 = scalar_lea.sflag [#allocation3], 1
    %16 = vsyncpa %s15, 0
    %17 = vsyncpa [#allocation6], 0
    %s18 = scalar_lea.sflag [#allocation6], 1
    %19 = vsyncpa %s18, 0
    %20 = vsyncpa [#allocation9], 0
    %21 = vsyncpa [#allocation12], 0
    %22 = vsyncpa [#allocation4], 0
    %s23 = scalar_lea.sflag [#allocation4], 1
    %24 = vsyncpa %s23, 0
    loop: start=0, step=1, limit=4
    $region2: #{tpu_custom_call.1} parent=1 // loop_pre_header
      _
    $region3: #{tpu_custom_call.1} parent=1 // loop_header
      %s26 = sphi 0, %s30
      %p27 = scmp.ge.s32.totalorder %s26, 4
      %s36 = sphi 0, %s38
      %s39 = sphi 0, %s36
      %s40 = sphi 0, %s39
      %s56 = sphi 0, %s40
      %s62 = sphi 0, %s64
      %s65 = sphi 0, %s62
      %s66 = sphi 0, %s65
      %s82 = sphi 0, %s66
      %s88 = sphi 0, %s90
      %s91 = sphi 0, %s88
      %s92 = sphi 0, %s91
      %s108 = sphi 0, %s92
      %s114 = sphi 0, %s116
      %s117 = sphi 0, %s114
      %s118 = sphi 0, %s117
      %s134 = sphi 0, %s118
      %s138 = sphi 0, %s138
      %s140 = sphi 0, %s138
      %s141 = sphi 0, %s140
      %s155 = sphi 0, %s141
      %s159 = sphi 0, %s159
      %s161 = sphi 0, %s159
      %s162 = sphi 0, %s161
      %s176 = sphi 0, %s162
      %s180 = sphi 0, %s180
      %s182 = sphi 0, %s180
      %s183 = sphi 0, %s182
      %s197 = sphi 0, %s183
      %s201 = sphi 0, %s201
      %s203 = sphi 0, %s201
      %s204 = sphi 0, %s203
      %s218 = sphi 0, %s204
      %s222 = sphi 0, %s222
      %s224 = sphi 0, %s222
      %s225 = sphi 0, %s224
      %s239 = sphi 0, %s225
      %s245 = sphi 0, %s247
      %s248 = sphi 0, %s245
      %s249 = sphi 0, %s248
      %s265 = sphi 0, %s249
    $region4: #{tpu_custom_call.1} parent=1 // loop_header_branch
      %29 = sbr.rel (%p27) target = $region8
    $region5: #{tpu_custom_call.1} parent=1 // loop_body
      %s31 = ssub.s32 %s26, 1
      %s32 = ssub.s32 %s26, 2
      %s33 = sadd.s32 %s26, 1
      %s34 = ssub.s32 %s26, %s33
      %p35 = scmp.eq.s32.totalorder %s34, 0
      %s37 = sadd.s32 %s36, 1
      %s38 = scalar_select %p35, %s36, %s37
      %p41 = pneg %p35
      %p42 = scmp.eq.s32.totalorder %s26, 1
      %p43 = por %p41, %p42
      %p44 = scmp.ne.s32.totalorder %s36, %s39
      %p45 = scmp.eq.s32.totalorder %s26, 0
      %p46 = por %p44, %p45
      %p47 = scmp.ne.s32.totalorder %s36, %s39
      %p48 = scmp.eq.s32.totalorder %s31, 1
      %p49 = por %p47, %p48
      %p50 = scmp.ne.s32.totalorder %s39, %s40
      %p51 = scmp.eq.s32.totalorder %s31, 0
      %p52 = por %p50, %p51
      %p53 = scmp.ne.s32.totalorder %s39, %s40
      %p54 = scmp.eq.s32.totalorder %s32, 1
      %p55 = por %p53, %p54
      %p57 = scmp.ne.s32.totalorder %s40, %s56
      %p58 = scmp.eq.s32.totalorder %s32, 0
      %p59 = por %p57, %p58
      %s60 = ssub.s32 %s26, %s33
      %p61 = scmp.eq.s32.totalorder %s60, 0
      %s63 = sadd.s32 %s62, 1
      %s64 = scalar_select %p61, %s62, %s63
      %p67 = pneg %p61
      %p68 = scmp.eq.s32.totalorder %s26, 1
      %p69 = por %p67, %p68
      %p70 = scmp.ne.s32.totalorder %s62, %s65
      %p71 = scmp.eq.s32.totalorder %s26, 0
      %p72 = por %p70, %p71
      %p73 = scmp.ne.s32.totalorder %s62, %s65
      %p74 = scmp.eq.s32.totalorder %s31, 1
      %p75 = por %p73, %p74
      %p76 = scmp.ne.s32.totalorder %s65, %s66
      %p77 = scmp.eq.s32.totalorder %s31, 0
      %p78 = por %p76, %p77
      %p79 = scmp.ne.s32.totalorder %s65, %s66
      %p80 = scmp.eq.s32.totalorder %s32, 1
      %p81 = por %p79, %p80
      %p83 = scmp.ne.s32.totalorder %s66, %s82
      %p84 = scmp.eq.s32.totalorder %s32, 0
      %p85 = por %p83, %p84
      %s86 = ssub.s32 %s26, %s33
      %p87 = scmp.eq.s32.totalorder %s86, 0
      %s89 = sadd.s32 %s88, 1
      %s90 = scalar_select %p87, %s88, %s89
      %p93 = pneg %p87
      %p94 = scmp.eq.s32.totalorder %s26, 1
      %p95 = por %p93, %p94
      %p96 = scmp.ne.s32.totalorder %s88, %s91
      %p97 = scmp.eq.s32.totalorder %s26, 0
      %p98 = por %p96, %p97
      %p99 = scmp.ne.s32.totalorder %s88, %s91
      %p100 = scmp.eq.s32.totalorder %s31, 1
      %p101 = por %p99, %p100
      %p102 = scmp.ne.s32.totalorder %s91, %s92
      %p103 = scmp.eq.s32.totalorder %s31, 0
      %p104 = por %p102, %p103
      %p105 = scmp.ne.s32.totalorder %s91, %s92
      %p106 = scmp.eq.s32.totalorder %s32, 1
      %p107 = por %p105, %p106
      %p109 = scmp.ne.s32.totalorder %s92, %s108
      %p110 = scmp.eq.s32.totalorder %s32, 0
      %p111 = por %p109, %p110
      %s112 = ssub.s32 %s26, %s33
      %p113 = scmp.eq.s32.totalorder %s112, 0
      %s115 = sadd.s32 %s114, 1
      %s116 = scalar_select %p113, %s114, %s115
      %p119 = pneg %p113
      %p120 = scmp.eq.s32.totalorder %s26, 1
      %p121 = por %p119, %p120
      %p122 = scmp.ne.s32.totalorder %s114, %s117
      %p123 = scmp.eq.s32.totalorder %s26, 0
      %p124 = por %p122, %p123
      %p125 = scmp.ne.s32.totalorder %s114, %s117
      %p126 = scmp.eq.s32.totalorder %s31, 1
      %p127 = por %p125, %p126
      %p128 = scmp.ne.s32.totalorder %s117, %s118
      %p129 = scmp.eq.s32.totalorder %s31, 0
      %p130 = por %p128, %p129
      %p131 = scmp.ne.s32.totalorder %s117, %s118
      %p132 = scmp.eq.s32.totalorder %s32, 1
      %p133 = por %p131, %p132
      %p135 = scmp.ne.s32.totalorder %s118, %s134
      %p136 = scmp.eq.s32.totalorder %s32, 0
      %p137 = por %p135, %p136
      %s139 = sadd.s32 %s138, 1
      %p142 = scmp.eq.s32.totalorder %s26, 1
      %p143 = scmp.ne.s32.totalorder %s138, %s140
      %p144 = scmp.eq.s32.totalorder %s26, 0
      %p145 = por %p143, %p144
      %p146 = scmp.ne.s32.totalorder %s138, %s140
      %p147 = scmp.eq.s32.totalorder %s31, 1
      %p148 = por %p146, %p147
      %p149 = scmp.ne.s32.totalorder %s140, %s141
      %p150 = scmp.eq.s32.totalorder %s31, 0
      %p151 = por %p149, %p150
      %p152 = scmp.ne.s32.totalorder %s140, %s141
      %p153 = scmp.eq.s32.totalorder %s32, 1
      %p154 = por %p152, %p153
      %p156 = scmp.ne.s32.totalorder %s141, %s155
      %p157 = scmp.eq.s32.totalorder %s32, 0
      %p158 = por %p156, %p157
      %s160 = sadd.s32 %s159, 1
      %p163 = scmp.eq.s32.totalorder %s26, 1
      %p164 = scmp.ne.s32.totalorder %s159, %s161
      %p165 = scmp.eq.s32.totalorder %s26, 0
      %p166 = por %p164, %p165
      %p167 = scmp.ne.s32.totalorder %s159, %s161
      %p168 = scmp.eq.s32.totalorder %s31, 1
      %p169 = por %p167, %p168
      %p170 = scmp.ne.s32.totalorder %s161, %s162
      %p171 = scmp.eq.s32.totalorder %s31, 0
      %p172 = por %p170, %p171
      %p173 = scmp.ne.s32.totalorder %s161, %s162
      %p174 = scmp.eq.s32.totalorder %s32, 1
      %p175 = por %p173, %p174
      %p177 = scmp.ne.s32.totalorder %s162, %s176
      %p178 = scmp.eq.s32.totalorder %s32, 0
      %p179 = por %p177, %p178
      %s181 = sadd.s32 %s180, 1
      %p184 = scmp.eq.s32.totalorder %s26, 1
      %p185 = scmp.ne.s32.totalorder %s180, %s182
      %p186 = scmp.eq.s32.totalorder %s26, 0
      %p187 = por %p185, %p186
      %p188 = scmp.ne.s32.totalorder %s180, %s182
      %p189 = scmp.eq.s32.totalorder %s31, 1
      %p190 = por %p188, %p189
      %p191 = scmp.ne.s32.totalorder %s182, %s183
      %p192 = scmp.eq.s32.totalorder %s31, 0
      %p193 = por %p191, %p192
      %p194 = scmp.ne.s32.totalorder %s182, %s183
      %p195 = scmp.eq.s32.totalorder %s32, 1
      %p196 = por %p194, %p195
      %p198 = scmp.ne.s32.totalorder %s183, %s197
      %p199 = scmp.eq.s32.totalorder %s32, 0
      %p200 = por %p198, %p199
      %s202 = sadd.s32 %s201, 1
      %p205 = scmp.eq.s32.totalorder %s26, 1
      %p206 = scmp.ne.s32.totalorder %s201, %s203
      %p207 = scmp.eq.s32.totalorder %s26, 0
      %p208 = por %p206, %p207
      %p209 = scmp.ne.s32.totalorder %s201, %s203
      %p210 = scmp.eq.s32.totalorder %s31, 1
      %p211 = por %p209, %p210
      %p212 = scmp.ne.s32.totalorder %s203, %s204
      %p213 = scmp.eq.s32.totalorder %s31, 0
      %p214 = por %p212, %p213
      %p215 = scmp.ne.s32.totalorder %s203, %s204
      %p216 = scmp.eq.s32.totalorder %s32, 1
      %p217 = por %p215, %p216
      %p219 = scmp.ne.s32.totalorder %s204, %s218
      %p220 = scmp.eq.s32.totalorder %s32, 0
      %p221 = por %p219, %p220
      %s223 = sadd.s32 %s222, 1
      %p226 = scmp.eq.s32.totalorder %s26, 1
      %p227 = scmp.ne.s32.totalorder %s222, %s224
      %p228 = scmp.eq.s32.totalorder %s26, 0
      %p229 = por %p227, %p228
      %p230 = scmp.ne.s32.totalorder %s222, %s224
      %p231 = scmp.eq.s32.totalorder %s31, 1
      %p232 = por %p230, %p231
      %p233 = scmp.ne.s32.totalorder %s224, %s225
      %p234 = scmp.eq.s32.totalorder %s31, 0
      %p235 = por %p233, %p234
      %p236 = scmp.ne.s32.totalorder %s224, %s225
      %p237 = scmp.eq.s32.totalorder %s32, 1
      %p238 = por %p236, %p237
      %p240 = scmp.ne.s32.totalorder %s225, %s239
      %p241 = scmp.eq.s32.totalorder %s32, 0
      %p242 = por %p240, %p241
      %s243 = ssub.s32 %s26, %s33
      %p244 = scmp.eq.s32.totalorder %s243, 0
      %s246 = sadd.s32 %s245, 1
      %s247 = scalar_select %p244, %s245, %s246
      %p250 = pneg %p244
      %p251 = scmp.eq.s32.totalorder %s26, 1
      %p252 = por %p250, %p251
      %p253 = scmp.ne.s32.totalorder %s245, %s248
      %p254 = scmp.eq.s32.totalorder %s26, 0
      %p255 = por %p253, %p254
      %p256 = scmp.ne.s32.totalorder %s245, %s248
      %p257 = scmp.eq.s32.totalorder %s31, 1
      %p258 = por %p256, %p257
      %p259 = scmp.ne.s32.totalorder %s248, %s249
      %p260 = scmp.eq.s32.totalorder %s31, 0
      %p261 = por %p259, %p260
      %p262 = scmp.ne.s32.totalorder %s248, %s249
      %p263 = scmp.eq.s32.totalorder %s32, 1
      %p264 = por %p262, %p263
      %p266 = scmp.ne.s32.totalorder %s249, %s265
      %p267 = scmp.eq.s32.totalorder %s32, 0
      %p268 = por %p266, %p267
      %p269 = scmp.le.s32.totalorder 1, %s26
      %p270 = scmp.lt.s32.totalorder %s26, 3
      %p271 = pnand %p269, %p270
      %p272 = pneg %p271
      // Predicated region
      $region9: #{tpu_custom_call.1} parent=5 // pred_check
        _
      $region10: #{tpu_custom_call.1} parent=5 // pred_check_branch
        %274 = sbr.rel (%p271) target = $region12
      $region11: #{tpu_custom_call.1} parent=5 // pred_region
        %s275 = ssub.s32 %s26, 1
        // Predicated region
        $region13: #{tpu_custom_call.1} parent=11 // pred_check
          %p276 = pneg %p151
        $region14: #{tpu_custom_call.1} parent=11 // pred_check_branch
          %278 = sbr.rel (%p276) target = $region16
        $region15: #{tpu_custom_call.1} parent=11 // pred_region
          %280 = vsyncadd [#allocation9], 0
          %s281 = sshll.u32 %s4, 4
          %s282 = int_to_ptr.hbm [resolvable:$true] %s281
          %s283 = sshll.u32 [#allocation8], 4
          %s284 = int_to_ptr.vmem [resolvable:$true] %s283
          %289 = dma.hbm_to_vmem [thread:$0]  %s282, 256, %s284, [#allocation9], 64, 64, 4
        $region16: #{tpu_custom_call.1} parent=11 // pred_fallthru
          _
        // Predicated region
        $region17: #{tpu_custom_call.1} parent=11 // pred_check
          %p290 = pneg %p172
        $region18: #{tpu_custom_call.1} parent=11 // pred_check_branch
          %292 = sbr.rel (%p290) target = $region20
        $region19: #{tpu_custom_call.1} parent=11 // pred_region
          %294 = vsyncadd [#allocation9], 0
          %s295 = sshll.u32 %s5, 4
          %s296 = int_to_ptr.hbm [resolvable:$true] %s295
          %s297 = sshll.u32 [#allocation10], 4
          %s298 = int_to_ptr.vmem [resolvable:$true] %s297
          %303 = dma.hbm_to_vmem [thread:$0]  %s296, 1536, %s298, [#allocation9], 64, 64, 4
        $region20: #{tpu_custom_call.1} parent=11 // pred_fallthru
          _
        // Predicated region
        $region21: #{tpu_custom_call.1} parent=11 // pred_check
          %p304 = pneg %p193
        $region22: #{tpu_custom_call.1} parent=11 // pred_check_branch
          %306 = sbr.rel (%p304) target = $region24
        $region23: #{tpu_custom_call.1} parent=11 // pred_region
          %308 = vsyncadd [#allocation12], 0
          %s309 = sshll.u32 %s6, 4
          %s310 = int_to_ptr.hbm [resolvable:$true] %s309
          %s311 = sshll.u32 [#allocation11], 4
          %s312 = int_to_ptr.vmem [resolvable:$true] %s311
          %317 = dma.hbm_to_vmem [thread:$0]  %s310, 256, %s312, [#allocation12], 64, 64, 4
        $region24: #{tpu_custom_call.1} parent=11 // pred_fallthru
          _
        // Predicated region
        $region25: #{tpu_custom_call.1} parent=11 // pred_check
          %p318 = pneg %p214
        $region26: #{tpu_custom_call.1} parent=11 // pred_check_branch
          %320 = sbr.rel (%p318) target = $region28
        $region27: #{tpu_custom_call.1} parent=11 // pred_region
          _
        $region28: #{tpu_custom_call.1} parent=11 // pred_fallthru
          _
        // Predicated region
        $region29: #{tpu_custom_call.1} parent=11 // pred_check
          %p321 = pneg %p235
        $region30: #{tpu_custom_call.1} parent=11 // pred_check_branch
          %323 = sbr.rel (%p321) target = $region32
        $region31: #{tpu_custom_call.1} parent=11 // pred_region
          _
        $region32: #{tpu_custom_call.1} parent=11 // pred_fallthru
          _
      $region12: #{tpu_custom_call.1} parent=5 // pred_fallthru
        _
      %p324 = scmp.lt.s32.totalorder %s26, 2
      // Predicated region
      $region33: #{tpu_custom_call.1} parent=5 // pred_check
        %p325 = pneg %p324
      $region34: #{tpu_custom_call.1} parent=5 // pred_check_branch
        %327 = sbr.rel (%p325) target = $region36
      $region35: #{tpu_custom_call.1} parent=5 // pred_region
        // Predicated region
        $region37: #{tpu_custom_call.1} parent=35 // pred_check
          %p328 = pneg %p46
        $region38: #{tpu_custom_call.1} parent=35 // pred_check_branch
          %330 = sbr.rel (%p328) target = $region40
        $region39: #{tpu_custom_call.1} parent=35 // pred_region
          %p331 = scmp.lt.s32.totalorder %s26, 1
          %s332 = scalar_select %p331, %s26, 1
          %s333 = smul.addr %s332, 2
          %s334 = smul.addr %s333, 4
          %s335 = scalar_lea.vmem %s0, %s334
        $region40: #{tpu_custom_call.1} parent=35 // pred_fallthru
          _
        // Predicated region
        $region41: #{tpu_custom_call.1} parent=35 // pred_check
          %p336 = pneg %p72
        $region42: #{tpu_custom_call.1} parent=35 // pred_check_branch
          %338 = sbr.rel (%p336) target = $region44
        $region43: #{tpu_custom_call.1} parent=35 // pred_region
          %s339 = sand.u32 %s62, 1
          %s340 = scalar_lea.sflag [#allocation3], %s339
          %s341 = sand.u32 %s62, 1
          %s342 = smul.addr %s341, 8
          %s343 = scalar_lea.vmem [#allocation2], %s342
          %345 = vsyncadd %s340, 0
          %s346 = smul.addr %s26, 2
          %s347 = smul.addr %s346, 4
          %s348 = scalar_lea.hbm %s1, %s347
          %s349 = sshll.u32 %s348, 4
          %s350 = int_to_ptr.hbm [resolvable:$true] %s349
          %s351 = sshll.u32 %s343, 4
          %s352 = int_to_ptr.vmem [resolvable:$true] %s351
          %357 = dma.hbm_to_vmem [thread:$0]  %s350, 128, %s352, %s340, 64, 64, 4
        $region44: #{tpu_custom_call.1} parent=35 // pred_fallthru
          _
        // Predicated region
        $region45: #{tpu_custom_call.1} parent=35 // pred_check
          %p358 = pneg %p98
        $region46: #{tpu_custom_call.1} parent=35 // pred_check_branch
          %360 = sbr.rel (%p358) target = $region48
        $region47: #{tpu_custom_call.1} parent=35 // pred_region
          %s361 = sand.u32 %s26, 1
          %s362 = scalar_lea.sflag [#allocation6], %s361
          %s363 = sand.u32 %s88, 1
          %s364 = smul.addr %s363, 8
          %s365 = scalar_lea.vmem [#allocation5], %s364
          %367 = vsyncadd %s362, 0
          %s368 = smul.addr %s26, 2
          %s369 = smul.addr %s368, 4
          %s370 = scalar_lea.hbm %s2, %s369
          %s371 = sshll.u32 %s370, 4
          %s372 = int_to_ptr.hbm [resolvable:$true] %s371
          %s373 = sshll.u32 %s365, 4
          %s374 = int_to_ptr.vmem [resolvable:$true] %s373
          %379 = dma.hbm_to_vmem [thread:$0]  %s372, 128, %s374, %s362, 64, 64, 4
        $region48: #{tpu_custom_call.1} parent=35 // pred_fallthru
          _
        // Predicated region
        $region49: #{tpu_custom_call.1} parent=35 // pred_check
          %p380 = pneg %p124
        $region50: #{tpu_custom_call.1} parent=35 // pred_check_branch
          %382 = sbr.rel (%p380) target = $region52
        $region51: #{tpu_custom_call.1} parent=35 // pred_region
          %s383 = sand.u32 %s26, 1
          %s384 = scalar_lea.sflag [#allocation6], %s383
          %s385 = sand.u32 %s114, 1
          %s386 = smul.addr %s385, 8
          %s387 = scalar_lea.vmem [#allocation7], %s386
          %389 = vsyncadd %s384, 0
          %s390 = smul.addr %s26, 2
          %s391 = smul.addr %s390, 4
          %s392 = scalar_lea.hbm %s3, %s391
          %s393 = sshll.u32 %s392, 4
          %s394 = int_to_ptr.hbm [resolvable:$true] %s393
          %s395 = sshll.u32 %s387, 4
          %s396 = int_to_ptr.vmem [resolvable:$true] %s395
          %401 = dma.hbm_to_vmem [thread:$0]  %s394, 128, %s396, %s384, 64, 64, 4
        $region52: #{tpu_custom_call.1} parent=35 // pred_fallthru
          _
      $region36: #{tpu_custom_call.1} parent=5 // pred_fallthru
        _
      %p402 = scmp.le.s32.totalorder 1, %s26
      %p403 = scmp.lt.s32.totalorder %s26, 3
      %p404 = pnand %p402, %p403
      %p405 = pneg %p404
      // Predicated region
      $region53: #{tpu_custom_call.1} parent=5 // pred_check
        _
      $region54: #{tpu_custom_call.1} parent=5 // pred_check_branch
        %407 = sbr.rel (%p404) target = $region56
      $region55: #{tpu_custom_call.1} parent=5 // pred_region
        %s408 = ssub.s32 %s26, 1
        %s409 = sand.u32 %s65, 1
        %s410 = scalar_lea.sflag [#allocation3], %s409
        %s411 = sand.u32 %s65, 1
        %s412 = smul.addr %s411, 8
        %s413 = scalar_lea.vmem [#allocation2], %s412
        // Predicated region
        $region57: #{tpu_custom_call.1} parent=55 // pred_check
          %p414 = pneg %p78
        $region58: #{tpu_custom_call.1} parent=55 // pred_check_branch
          %416 = sbr.rel (%p414) target = $region60
        $region59: #{tpu_custom_call.1} parent=55 // pred_region
          %418 = dma.done %s410, 128
        $region60: #{tpu_custom_call.1} parent=55 // pred_fallthru
          _
        %s419 = sand.u32 %s31, 1
        %s420 = scalar_lea.sflag [#allocation6], %s419
        %s421 = sand.u32 %s91, 1
        %s422 = smul.addr %s421, 8
        %s423 = scalar_lea.vmem [#allocation5], %s422
        // Predicated region
        $region61: #{tpu_custom_call.1} parent=55 // pred_check
          %p424 = pneg %p104
        $region62: #{tpu_custom_call.1} parent=55 // pred_check_branch
          %426 = sbr.rel (%p424) target = $region64
        $region63: #{tpu_custom_call.1} parent=55 // pred_region
          %428 = dma.done %s420, 128
        $region64: #{tpu_custom_call.1} parent=55 // pred_fallthru
          _
        %s429 = sand.u32 %s31, 1
        %s430 = scalar_lea.sflag [#allocation6], %s429
        %s431 = sand.u32 %s117, 1
        %s432 = smul.addr %s431, 8
        %s433 = scalar_lea.vmem [#allocation7], %s432
        // Predicated region
        $region65: #{tpu_custom_call.1} parent=55 // pred_check
          %p434 = pneg %p130
        $region66: #{tpu_custom_call.1} parent=55 // pred_check_branch
          %436 = sbr.rel (%p434) target = $region68
        $region67: #{tpu_custom_call.1} parent=55 // pred_region
          %438 = dma.done %s430, 128
        $region68: #{tpu_custom_call.1} parent=55 // pred_fallthru
          _
        // Predicated region
        $region69: #{tpu_custom_call.1} parent=55 // pred_check
          %p439 = pneg %p151
        $region70: #{tpu_custom_call.1} parent=55 // pred_check_branch
          %441 = sbr.rel (%p439) target = $region72
        $region71: #{tpu_custom_call.1} parent=55 // pred_region
          %443 = dma.done [#allocation9], 256
        $region72: #{tpu_custom_call.1} parent=55 // pred_fallthru
          _
        // Predicated region
        $region73: #{tpu_custom_call.1} parent=55 // pred_check
          %p444 = pneg %p172
        $region74: #{tpu_custom_call.1} parent=55 // pred_check_branch
          %446 = sbr.rel (%p444) target = $region76
        $region75: #{tpu_custom_call.1} parent=55 // pred_region
          %448 = dma.done [#allocation9], 1536
        $region76: #{tpu_custom_call.1} parent=55 // pred_fallthru
          _
        // Predicated region
        $region77: #{tpu_custom_call.1} parent=55 // pred_check
          %p449 = pneg %p193
        $region78: #{tpu_custom_call.1} parent=55 // pred_check_branch
          %451 = sbr.rel (%p449) target = $region80
        $region79: #{tpu_custom_call.1} parent=55 // pred_region
          %453 = dma.done [#allocation12], 256
        $region80: #{tpu_custom_call.1} parent=55 // pred_fallthru
          _
        %p454 = scmp.lt.s32.totalorder %s31, 1
        %s455 = scalar_select %p454, %s31, 1
        %s456 = smul.addr %s455, 2
        %s457 = smul.addr %s456, 4
        %s458 = scalar_lea.vmem %s0, %s457
        %p459 = pneg %p52
        %p460 = pneg %p49
        %s461 = sand.u32 %s65, 1
        %s462 = scalar_lea.sflag [#allocation3], %s461
        %s463 = sand.u32 %s65, 1
        %s464 = smul.addr %s463, 8
        %s465 = scalar_lea.vmem [#allocation2], %s464
        %p466 = pneg %p78
        %p467 = pneg %p75
        %s468 = sand.u32 %s31, 1
        %s469 = scalar_lea.sflag [#allocation6], %s468
        %s470 = sand.u32 %s91, 1
        %s471 = smul.addr %s470, 8
        %s472 = scalar_lea.vmem [#allocation5], %s471
        %p473 = pneg %p104
        %p474 = pneg %p101
        %s475 = sand.u32 %s31, 1
        %s476 = scalar_lea.sflag [#allocation6], %s475
        %s477 = sand.u32 %s117, 1
        %s478 = smul.addr %s477, 8
        %s479 = scalar_lea.vmem [#allocation7], %s478
        %p480 = pneg %p130
        %p481 = pneg %p127
        %p482 = pneg %p151
        %p483 = pneg %p148
        %p484 = pneg %p172
        %p485 = pneg %p169
        %p486 = pneg %p193
        %p487 = pneg %p190
        %p488 = pneg %p214
        %p489 = pneg %p211
        %p490 = pneg %p235
        %p491 = pneg %p232
        %p492 = pneg %p261
        %p493 = pneg %p258
        %s494 = sand.u32 %s248, 1
        %s495 = scalar_lea.sflag [#allocation4], %s494
        %s496 = sand.u32 %s248, 1
        %s497 = smul.addr %s496, 8
        %s498 = scalar_lea.vmem [#allocation13], %s497
        %p499 = scmp.lt.s32.totalorder %s31, 1
        %s500 = scalar_select %p499, %s31, 1
        %s501 = smul.addr %s500, 2
        %s502 = smul.addr %s501, 4
        %s503 = scalar_lea.vmem %s0, %s502
        %v505 = vld [vmem:[#allocation8] sm:$0xf]
        %v506 = vld [vmem:[#allocation8 + $0x4] sm:$0xf]
        %v507 = vld [vmem:[#allocation8 + $0x8] sm:$0xf]
        %v508 = vld [vmem:[#allocation8 + $0xc] sm:$0xf]
        %v509 = vld [vmem:[#allocation10] sm:$0xf]
        %v510 = vld [vmem:[#allocation10 + $0x4] sm:$0xf]
        %v511 = vld [vmem:[#allocation10 + $0x8] sm:$0xf]
        %v512 = vld [vmem:[#allocation10 + $0xc] sm:$0xf]
        %v513 = vld [vmem:[#allocation10 + $0x10] sm:$0xf]
        %v514 = vld [vmem:[#allocation10 + $0x14] sm:$0xf]
        %v515 = vld [vmem:[#allocation10 + $0x18] sm:$0xf]
        %v516 = vld [vmem:[#allocation10 + $0x1c] sm:$0xf]
        %v517 = vld [vmem:[#allocation10 + $0x20] sm:$0xf]
        %v518 = vld [vmem:[#allocation10 + $0x24] sm:$0xf]
        %v519 = vld [vmem:[#allocation10 + $0x28] sm:$0xf]
        %v520 = vld [vmem:[#allocation10 + $0x2c] sm:$0xf]
        %v521 = vld [vmem:[#allocation10 + $0x30] sm:$0xf]
        %v522 = vld [vmem:[#allocation10 + $0x34] sm:$0xf]
        %v523 = vld [vmem:[#allocation10 + $0x38] sm:$0xf]
        %v524 = vld [vmem:[#allocation10 + $0x3c] sm:$0xf]
        %v525 = vld [vmem:[#allocation10 + $0x40] sm:$0xf]
        %v526 = vld [vmem:[#allocation10 + $0x44] sm:$0xf]
        %v527 = vld [vmem:[#allocation10 + $0x48] sm:$0xf]
        %v528 = vld [vmem:[#allocation10 + $0x4c] sm:$0xf]
        %v529 = vld [vmem:[#allocation10 + $0x50] sm:$0xf]
        %v530 = vld [vmem:[#allocation10 + $0x54] sm:$0xf]
        %v531 = vld [vmem:[#allocation10 + $0x58] sm:$0xf]
        %v532 = vld [vmem:[#allocation10 + $0x5c] sm:$0xf]
        %v533 = vld [vmem:[#allocation11] sm:$0xf]
        %v534 = vld [vmem:[#allocation11 + $0x4] sm:$0xf]
        %v535 = vld [vmem:[#allocation11 + $0x8] sm:$0xf]
        %v536 = vld [vmem:[#allocation11 + $0xc] sm:$0xf]
        %v537 = vld [vmem:[%s7] sm:$0xf]
        %v538 = vld [vmem:[%s7 + $0x4] sm:$0xf]
        %v539 = vld [vmem:[%s7 + $0x8] sm:$0xf]
        %v540 = vld [vmem:[%s7 + $0xc] sm:$0xf]
        %v541 = vld [vmem:[%s7 + $0x10] sm:$0xf]
        %v542 = vld [vmem:[%s7 + $0x14] sm:$0xf]
        %v543 = vld [vmem:[%s7 + $0x18] sm:$0xf]
        %v544 = vld [vmem:[%s7 + $0x1c] sm:$0xf]
        %v545 = vld [vmem:[%s8] sm:$0xff]
        %v546 = vld [vmem:[%s8 + $0x8] sm:$0xff]
        %v547 = vld [vmem:[%s8 + $0x10] sm:$0x1]
        %v548 = vperm.slane %v545, 0
        %v549 = vperm.slane %v545, 1
        %v550 = vperm.slane %v545, 2
        %v551 = vperm.slane %v545, 3
        %v552 = vperm.slane %v545, 4
        %v553 = vperm.slane %v545, 5
        %v554 = vperm.slane %v546, 0
        %v555 = vperm.slane %v546, 1
        %v556 = vperm.slane %v546, 2
        %v557 = vperm.slane %v546, 3
        %v558 = vperm.slane %v546, 4
        %v559 = vperm.slane %v546, 5
        %v560 = vperm.slane %v546, 6
        %v561 = vperm.slane %v546, 7
        %v562 = vperm.slane %v547, 0
        %v563 = vld [vmem:[%s503] sm:$0xf]
        %v564 = vld [vmem:[%s503 + $0x4] sm:$0xf]
        %v565 = vunpack.c.l.bf16 %v563
        %v566 = vunpack.c.l.bf16 %v564
        %v567 = vld [vmem:[%s423] sm:$0xf]
        %v568 = vld [vmem:[%s423 + $0x4] sm:$0xf]
        %v569 = vunpack.c.l.bf16 %v567
        %v570 = vunpack.c.l.bf16 %v568
        %v571 = vld [vmem:[%s413] sm:$0xf]
        %v572 = vld [vmem:[%s413 + $0x4] sm:$0xf]
        %v573 = vunpack.c.l.bf16 %v571
        %v574 = vunpack.c.l.bf16 %v572
        %v575 = vld [vmem:[%s433] sm:$0xf]
        %v576 = vld [vmem:[%s433 + $0x4] sm:$0xf]
        %v577 = vunpack.c.l.bf16 %v575
        %v578 = vunpack.c.l.bf16 %v576
        %v579 = vadd.f32 %v573, %v577
        %v580 = vadd.f32 %v574, %v578
        %v581 = vpack.c.bf16 %v580, %v579
        %v582 = vpack.c.bf16 %v574, %v573
        %v583 = vperm.slane %v545, 6
        %v588 = vunpack.c.l.b16 %v517
        %v589 = vunpack.c.l.b16 %v518
        %v590 = vunpack.c.l.b16 %v519
        %v591 = vunpack.c.l.b16 %v520
        %v592 = vpack.c.b16 %v589, %v588
        %v593 = vpack.c.b16 %v591, %v590
        %vm596 = vcmask 261120
        %v598 = vsel %vm596, %v581, 0
        %600 = vmatpush.bf16.msra.mxu0 0
        %601 = vmatpush.bf16.msra.mxu0 0
        %602 = vmatpush.bf16.msra.mxu0 0
        %603 = vmatpush.bf16.msra.mxu0 0
        %604 = vmatpush.bf16.msra.mxu0 0
        %605 = vmatpush.bf16.msra.mxu0 0
        %606 = vmatpush.bf16.msra.mxu0 %v593
        %607 = vmatpush.bf16.msra.mxu0 %v592
        %608 = vmatmul.bf16.gmra.mxu0 %v598
        %v609 = vpop.f32.mrf.mxu0
        %v610 = vadd.f32 %v583, %v609
        %v611 = vpop.f32.mrf.mxu0
        %v612 = vadd.f32 %v583, %v611
        %613 = vdwg.mxu0
        %v614 = vperm.slane %v545, 7
        %v619 = vunpack.c.l.b16 %v521
        %v620 = vunpack.c.l.b16 %v522
        %v621 = vunpack.c.l.b16 %v523
        %v622 = vunpack.c.l.b16 %v524
        %v623 = vpack.c.b16 %v620, %v619
        %v624 = vpack.c.b16 %v622, %v621
        %v628 = vsel %vm596, %v582, 0
        %630 = vmatpush.bf16.msra.mxu0 0
        %631 = vmatpush.bf16.msra.mxu0 0
        %632 = vmatpush.bf16.msra.mxu0 0
        %633 = vmatpush.bf16.msra.mxu0 0
        %634 = vmatpush.bf16.msra.mxu0 0
        %635 = vmatpush.bf16.msra.mxu0 0
        %636 = vmatpush.bf16.msra.mxu0 %v624
        %637 = vmatpush.bf16.msra.mxu0 %v623
        %638 = vmatmul.bf16.gmra.mxu0 %v628
        %v639 = vpop.f32.mrf.mxu0
        %v640 = vadd.f32 %v614, %v639
        %v641 = vpop.f32.mrf.mxu0
        %v642 = vadd.f32 %v614, %v641
        %643 = vdwg.mxu0
        %646 = vrot.lane.b32.xlu0 %v610, 120
        %v647 = vpop.permute.xlu0 %646
        %648 = vrot.lane.b32.xlu0 %v612, 120
        %v649 = vpop.permute.xlu0 %648
        %652 = vrot.lane.b32.xlu0 %v610, 112
        %v653 = vpop.permute.xlu0 %652
        %654 = vrot.lane.b32.xlu0 %v612, 112
        %v655 = vpop.permute.xlu0 %654
        %658 = vrot.lane.b32.xlu0 %v610, 104
        %v659 = vpop.permute.xlu0 %658
        %660 = vrot.lane.b32.xlu0 %v612, 104
        %v661 = vpop.permute.xlu0 %660
        %v664 = vrot.slane %v653, 4
        %vm665 = vcmask 1047556
        %v666 = vsel %vm665, %v664, %v610
        %v667 = vrot.slane %v610, 4
        %v668 = vsel %vm665, %v653, %v667
        %v670 = vunpack.c.l.s4 1983009808
        %v671 = vunpack.c.0.s8 %v670
        %v672 = vperm.slane %v666, %v671
        %v674 = vunpack.c.l.s4 1983009808
        %v675 = vunpack.c.0.s8 %v674
        %v676 = vperm.slane %v668, %v675
        %v677 = vrot.slane %v659, 4
        %v678 = vsel %vm665, %v677, %v647
        %v679 = vrot.slane %v647, 4
        %v680 = vsel %vm665, %v659, %v679
        %v682 = vunpack.c.l.s4 1983009808
        %v683 = vunpack.c.0.s8 %v682
        %v684 = vperm.slane %v678, %v683
        %v686 = vunpack.c.l.s4 1983009808
        %v687 = vunpack.c.0.s8 %v686
        %v688 = vperm.slane %v680, %v687
        %v689 = vrot.slane %v684, 4
        %v690 = vsel %vm665, %v689, %v672
        %v691 = vrot.slane %v672, 4
        %v692 = vsel %vm665, %v684, %v691
        %v694 = vunpack.c.l.s4 1934713408
        %v695 = vunpack.c.0.s8 %v694
        %v696 = vperm.slane %v690, %v695
        %v698 = vunpack.c.l.s4 1934713408
        %v699 = vunpack.c.0.s8 %v698
        %v700 = vperm.slane %v692, %v699
        %v701 = vrot.slane %v688, 4
        %v702 = vsel %vm665, %v701, %v676
        %v703 = vrot.slane %v676, 4
        %v704 = vsel %vm665, %v688, %v703
        %v706 = vunpack.c.l.s4 1934713408
        %v707 = vunpack.c.0.s8 %v706
        %v708 = vperm.slane %v702, %v707
        %v710 = vunpack.c.l.s4 1934713408
        %v711 = vunpack.c.0.s8 %v710
        %v712 = vperm.slane %v704, %v711
        %v713 = vrot.slane %v696, 4
        %v714 = vsel %vm665, 0.0, %v713
        %v715 = vrot.slane %v700, 4
        %v716 = vsel %vm665, 0.0, %v715
        %v717 = vrot.slane %v708, 4
        %v718 = vsel %vm665, 0.0, %v717
        %v719 = vrot.slane %v712, 4
        %v720 = vsel %vm665, 0.0, %v719
        %v721 = vrot.slane %v655, 4
        %v722 = vsel %vm665, %v721, %v612
        %v723 = vrot.slane %v612, 4
        %v724 = vsel %vm665, %v655, %v723
        %v726 = vunpack.c.l.s4 1983009808
        %v727 = vunpack.c.0.s8 %v726
        %v728 = vperm.slane %v722, %v727
        %v730 = vunpack.c.l.s4 1983009808
        %v731 = vunpack.c.0.s8 %v730
        %v732 = vperm.slane %v724, %v731
        %v733 = vrot.slane %v661, 4
        %v734 = vsel %vm665, %v733, %v649
        %v735 = vrot.slane %v649, 4
        %v736 = vsel %vm665, %v661, %v735
        %v738 = vunpack.c.l.s4 1983009808
        %v739 = vunpack.c.0.s8 %v738
        %v740 = vperm.slane %v734, %v739
        %v742 = vunpack.c.l.s4 1983009808
        %v743 = vunpack.c.0.s8 %v742
        %v744 = vperm.slane %v736, %v743
        %v745 = vrot.slane %v740, 4
        %v746 = vsel %vm665, %v745, %v728
        %v747 = vrot.slane %v728, 4
        %v748 = vsel %vm665, %v740, %v747
        %v750 = vunpack.c.l.s4 1934713408
        %v751 = vunpack.c.0.s8 %v750
        %v752 = vperm.slane %v746, %v751
        %v754 = vunpack.c.l.s4 1934713408
        %v755 = vunpack.c.0.s8 %v754
        %v756 = vperm.slane %v748, %v755
        %v757 = vrot.slane %v744, 4
        %v758 = vsel %vm665, %v757, %v732
        %v759 = vrot.slane %v732, 4
        %v760 = vsel %vm665, %v744, %v759
        %v762 = vunpack.c.l.s4 1934713408
        %v763 = vunpack.c.0.s8 %v762
        %v764 = vperm.slane %v758, %v763
        %v766 = vunpack.c.l.s4 1934713408
        %v767 = vunpack.c.0.s8 %v766
        %v768 = vperm.slane %v760, %v767
        %v769 = vrot.slane %v752, 4
        %v770 = vsel %vm665, 0.0, %v769
        %v771 = vrot.slane %v756, 4
        %v772 = vsel %vm665, 0.0, %v771
        %v773 = vrot.slane %v764, 4
        %v774 = vsel %vm665, 0.0, %v773
        %v775 = vrot.slane %v768, 4
        %v776 = vsel %vm665, 0.0, %v775
        %v777 = vsel %vm665, %v715, %v696
        %v779 = vunpack.c.l.s4 1983009808
        %v780 = vunpack.c.0.s8 %v779
        %v781 = vperm.slane %v777, %v780
        %v782 = vrot.slane %v716, 4
        %v783 = vsel %vm665, %v782, %v714
        %v785 = vunpack.c.l.s4 1983009808
        %v786 = vunpack.c.0.s8 %v785
        %v787 = vperm.slane %v783, %v786
        %v788 = vsel %vm665, %v719, %v708
        %v790 = vunpack.c.l.s4 1983009808
        %v791 = vunpack.c.0.s8 %v790
        %v792 = vperm.slane %v788, %v791
        %v793 = vrot.slane %v720, 4
        %v794 = vsel %vm665, %v793, %v718
        %v796 = vunpack.c.l.s4 1983009808
        %v797 = vunpack.c.0.s8 %v796
        %v798 = vperm.slane %v794, %v797
        %v799 = vrot.slane %v787, 4
        %v800 = vsel %vm665, %v799, %v781
        %v801 = vrot.slane %v781, 4
        %v802 = vsel %vm665, %v787, %v801
        %v804 = vunpack.c.l.s4 1934713408
        %v805 = vunpack.c.0.s8 %v804
        %v806 = vperm.slane %v800, %v805
        %v808 = vunpack.c.l.s4 1934713408
        %v809 = vunpack.c.0.s8 %v808
        %v810 = vperm.slane %v802, %v809
        %v811 = vrot.slane %v798, 4
        %v812 = vsel %vm665, %v811, %v792
        %v813 = vrot.slane %v792, 4
        %v814 = vsel %vm665, %v798, %v813
        %v816 = vunpack.c.l.s4 1934713408
        %v817 = vunpack.c.0.s8 %v816
        %v818 = vperm.slane %v812, %v817
        %v820 = vunpack.c.l.s4 1934713408
        %v821 = vunpack.c.0.s8 %v820
        %v822 = vperm.slane %v814, %v821
        %v823 = vrot.slane %v818, 4
        %v824 = vsel %vm665, %v823, %v806
        %v825 = vrot.slane %v806, 4
        %v826 = vsel %vm665, %v818, %v825
        %v827 = vrot.slane %v822, 4
        %v828 = vsel %vm665, %v827, %v810
        %v829 = vrot.slane %v810, 4
        %v830 = vsel %vm665, %v822, %v829
        %v831 = vsel %vm665, %v771, %v752
        %v833 = vunpack.c.l.s4 1983009808
        %v834 = vunpack.c.0.s8 %v833
        %v835 = vperm.slane %v831, %v834
        %v836 = vrot.slane %v772, 4
        %v837 = vsel %vm665, %v836, %v770
        %v839 = vunpack.c.l.s4 1983009808
        %v840 = vunpack.c.0.s8 %v839
        %v841 = vperm.slane %v837, %v840
        %v842 = vsel %vm665, %v775, %v764
        %v844 = vunpack.c.l.s4 1983009808
        %v845 = vunpack.c.0.s8 %v844
        %v846 = vperm.slane %v842, %v845
        %v847 = vrot.slane %v776, 4
        %v848 = vsel %vm665, %v847, %v774
        %v850 = vunpack.c.l.s4 1983009808
        %v851 = vunpack.c.0.s8 %v850
        %v852 = vperm.slane %v848, %v851
        %v853 = vrot.slane %v841, 4
        %v854 = vsel %vm665, %v853, %v835
        %v855 = vrot.slane %v835, 4
        %v856 = vsel %vm665, %v841, %v855
        %v858 = vunpack.c.l.s4 1934713408
        %v859 = vunpack.c.0.s8 %v858
        %v860 = vperm.slane %v854, %v859
        %v862 = vunpack.c.l.s4 1934713408
        %v863 = vunpack.c.0.s8 %v862
        %v864 = vperm.slane %v856, %v863
        %v865 = vrot.slane %v852, 4
        %v866 = vsel %vm665, %v865, %v846
        %v867 = vrot.slane %v846, 4
        %v868 = vsel %vm665, %v852, %v867
        %v870 = vunpack.c.l.s4 1934713408
        %v871 = vunpack.c.0.s8 %v870
        %v872 = vperm.slane %v866, %v871
        %v874 = vunpack.c.l.s4 1934713408
        %v875 = vunpack.c.0.s8 %v874
        %v876 = vperm.slane %v868, %v875
        %v877 = vrot.slane %v872, 4
        %v878 = vsel %vm665, %v877, %v860
        %v879 = vrot.slane %v860, 4
        %v880 = vsel %vm665, %v872, %v879
        %v881 = vrot.slane %v876, 4
        %v882 = vsel %vm665, %v881, %v864
        %v883 = vrot.slane %v864, 4
        %v884 = vsel %vm665, %v876, %v883
        %v885 = vpack.c.bf16 %v824, %v824
        %v886 = vpack.c.bf16 %v878, %v878
        %v887 = vpack.c.bf16 %v826, %v826
        %v888 = vpack.c.bf16 %v880, %v880
        %v889 = vpack.c.bf16 %v828, %v828
        %v890 = vpack.c.bf16 %v882, %v882
        %v891 = vpack.c.bf16 %v830, %v830
        %v892 = vpack.c.bf16 %v884, %v884
        %895 = vrot.lane.b32.xlu0 %v640, 120
        %v896 = vpop.permute.xlu0 %895
        %897 = vrot.lane.b32.xlu0 %v642, 120
        %v898 = vpop.permute.xlu0 %897
        %901 = vrot.lane.b32.xlu0 %v640, 112
        %v902 = vpop.permute.xlu0 %901
        %903 = vrot.lane.b32.xlu0 %v642, 112
        %v904 = vpop.permute.xlu0 %903
        %907 = vrot.lane.b32.xlu0 %v640, 104
        %v908 = vpop.permute.xlu0 %907
        %909 = vrot.lane.b32.xlu0 %v642, 104
        %v910 = vpop.permute.xlu0 %909
        %v913 = vrot.slane %v902, 4
        %v914 = vsel %vm665, %v913, %v640
        %v915 = vrot.slane %v640, 4
        %v916 = vsel %vm665, %v902, %v915
        %v918 = vunpack.c.l.s4 1983009808
        %v919 = vunpack.c.0.s8 %v918
        %v920 = vperm.slane %v914, %v919
        %v922 = vunpack.c.l.s4 1983009808
        %v923 = vunpack.c.0.s8 %v922
        %v924 = vperm.slane %v916, %v923
        %v925 = vrot.slane %v908, 4
        %v926 = vsel %vm665, %v925, %v896
        %v927 = vrot.slane %v896, 4
        %v928 = vsel %vm665, %v908, %v927
        %v930 = vunpack.c.l.s4 1983009808
        %v931 = vunpack.c.0.s8 %v930
        %v932 = vperm.slane %v926, %v931
        %v934 = vunpack.c.l.s4 1983009808
        %v935 = vunpack.c.0.s8 %v934
        %v936 = vperm.slane %v928, %v935
        %v937 = vrot.slane %v932, 4
        %v938 = vsel %vm665, %v937, %v920
        %v939 = vrot.slane %v920, 4
        %v940 = vsel %vm665, %v932, %v939
        %v942 = vunpack.c.l.s4 1934713408
        %v943 = vunpack.c.0.s8 %v942
        %v944 = vperm.slane %v938, %v943
        %v946 = vunpack.c.l.s4 1934713408
        %v947 = vunpack.c.0.s8 %v946
        %v948 = vperm.slane %v940, %v947
        %v949 = vrot.slane %v936, 4
        %v950 = vsel %vm665, %v949, %v924
        %v951 = vrot.slane %v924, 4
        %v952 = vsel %vm665, %v936, %v951
        %v954 = vunpack.c.l.s4 1934713408
        %v955 = vunpack.c.0.s8 %v954
        %v956 = vperm.slane %v950, %v955
        %v958 = vunpack.c.l.s4 1934713408
        %v959 = vunpack.c.0.s8 %v958
        %v960 = vperm.slane %v952, %v959
        %v961 = vrot.slane %v944, 4
        %v962 = vsel %vm665, 0.0, %v961
        %v963 = vrot.slane %v948, 4
        %v964 = vsel %vm665, 0.0, %v963
        %v965 = vrot.slane %v956, 4
        %v966 = vsel %vm665, 0.0, %v965
        %v967 = vrot.slane %v960, 4
        %v968 = vsel %vm665, 0.0, %v967
        %v969 = vrot.slane %v904, 4
        %v970 = vsel %vm665, %v969, %v642
        %v971 = vrot.slane %v642, 4
        %v972 = vsel %vm665, %v904, %v971
        %v974 = vunpack.c.l.s4 1983009808
        %v975 = vunpack.c.0.s8 %v974
        %v976 = vperm.slane %v970, %v975
        %v978 = vunpack.c.l.s4 1983009808
        %v979 = vunpack.c.0.s8 %v978
        %v980 = vperm.slane %v972, %v979
        %v981 = vrot.slane %v910, 4
        %v982 = vsel %vm665, %v981, %v898
        %v983 = vrot.slane %v898, 4
        %v984 = vsel %vm665, %v910, %v983
        %v986 = vunpack.c.l.s4 1983009808
        %v987 = vunpack.c.0.s8 %v986
        %v988 = vperm.slane %v982, %v987
        %v990 = vunpack.c.l.s4 1983009808
        %v991 = vunpack.c.0.s8 %v990
        %v992 = vperm.slane %v984, %v991
        %v993 = vrot.slane %v988, 4
        %v994 = vsel %vm665, %v993, %v976
        %v995 = vrot.slane %v976, 4
        %v996 = vsel %vm665, %v988, %v995
        %v998 = vunpack.c.l.s4 1934713408
        %v999 = vunpack.c.0.s8 %v998
        %v1000 = vperm.slane %v994, %v999
        %v1002 = vunpack.c.l.s4 1934713408
        %v1003 = vunpack.c.0.s8 %v1002
        %v1004 = vperm.slane %v996, %v1003
        %v1005 = vrot.slane %v992, 4
        %v1006 = vsel %vm665, %v1005, %v980
        %v1007 = vrot.slane %v980, 4
        %v1008 = vsel %vm665, %v992, %v1007
        %v1010 = vunpack.c.l.s4 1934713408
        %v1011 = vunpack.c.0.s8 %v1010
        %v1012 = vperm.slane %v1006, %v1011
        %v1014 = vunpack.c.l.s4 1934713408
        %v1015 = vunpack.c.0.s8 %v1014
        %v1016 = vperm.slane %v1008, %v1015
        %v1017 = vrot.slane %v1000, 4
        %v1018 = vsel %vm665, 0.0, %v1017
        %v1019 = vrot.slane %v1004, 4
        %v1020 = vsel %vm665, 0.0, %v1019
        %v1021 = vrot.slane %v1012, 4
        %v1022 = vsel %vm665, 0.0, %v1021
        %v1023 = vrot.slane %v1016, 4
        %v1024 = vsel %vm665, 0.0, %v1023
        %v1025 = vsel %vm665, %v963, %v944
        %v1027 = vunpack.c.l.s4 1983009808
        %v1028 = vunpack.c.0.s8 %v1027
        %v1029 = vperm.slane %v1025, %v1028
        %v1030 = vrot.slane %v964, 4
        %v1031 = vsel %vm665, %v1030, %v962
        %v1033 = vunpack.c.l.s4 1983009808
        %v1034 = vunpack.c.0.s8 %v1033
        %v1035 = vperm.slane %v1031, %v1034
        %v1036 = vsel %vm665, %v967, %v956
        %v1038 = vunpack.c.l.s4 1983009808
        %v1039 = vunpack.c.0.s8 %v1038
        %v1040 = vperm.slane %v1036, %v1039
        %v1041 = vrot.slane %v968, 4
        %v1042 = vsel %vm665, %v1041, %v966
        %v1044 = vunpack.c.l.s4 1983009808
        %v1045 = vunpack.c.0.s8 %v1044
        %v1046 = vperm.slane %v1042, %v1045
        %v1047 = vrot.slane %v1035, 4
        %v1048 = vsel %vm665, %v1047, %v1029
        %v1049 = vrot.slane %v1029, 4
        %v1050 = vsel %vm665, %v1035, %v1049
        %v1052 = vunpack.c.l.s4 1934713408
        %v1053 = vunpack.c.0.s8 %v1052
        %v1054 = vperm.slane %v1048, %v1053
        %v1056 = vunpack.c.l.s4 1934713408
        %v1057 = vunpack.c.0.s8 %v1056
        %v1058 = vperm.slane %v1050, %v1057
        %v1059 = vrot.slane %v1046, 4
        %v1060 = vsel %vm665, %v1059, %v1040
        %v1061 = vrot.slane %v1040, 4
        %v1062 = vsel %vm665, %v1046, %v1061
        %v1064 = vunpack.c.l.s4 1934713408
        %v1065 = vunpack.c.0.s8 %v1064
        %v1066 = vperm.slane %v1060, %v1065
        %v1068 = vunpack.c.l.s4 1934713408
        %v1069 = vunpack.c.0.s8 %v1068
        %v1070 = vperm.slane %v1062, %v1069
        %v1071 = vrot.slane %v1066, 4
        %v1072 = vsel %vm665, %v1071, %v1054
        %v1073 = vrot.slane %v1054, 4
        %v1074 = vsel %vm665, %v1066, %v1073
        %v1075 = vrot.slane %v1070, 4
        %v1076 = vsel %vm665, %v1075, %v1058
        %v1077 = vrot.slane %v1058, 4
        %v1078 = vsel %vm665, %v1070, %v1077
        %v1079 = vsel %vm665, %v1019, %v1000
        %v1081 = vunpack.c.l.s4 1983009808
        %v1082 = vunpack.c.0.s8 %v1081
        %v1083 = vperm.slane %v1079, %v1082
        %v1084 = vrot.slane %v1020, 4
        %v1085 = vsel %vm665, %v1084, %v1018
        %v1087 = vunpack.c.l.s4 1983009808
        %v1088 = vunpack.c.0.s8 %v1087
        %v1089 = vperm.slane %v1085, %v1088
        %v1090 = vsel %vm665, %v1023, %v1012
        %v1092 = vunpack.c.l.s4 1983009808
        %v1093 = vunpack.c.0.s8 %v1092
        %v1094 = vperm.slane %v1090, %v1093
        %v1095 = vrot.slane %v1024, 4
        %v1096 = vsel %vm665, %v1095, %v1022
        %v1098 = vunpack.c.l.s4 1983009808
        %v1099 = vunpack.c.0.s8 %v1098
        %v1100 = vperm.slane %v1096, %v1099
        %v1101 = vrot.slane %v1089, 4
        %v1102 = vsel %vm665, %v1101, %v1083
        %v1103 = vrot.slane %v1083, 4
        %v1104 = vsel %vm665, %v1089, %v1103
        %v1106 = vunpack.c.l.s4 1934713408
        %v1107 = vunpack.c.0.s8 %v1106
        %v1108 = vperm.slane %v1102, %v1107
        %v1110 = vunpack.c.l.s4 1934713408
        %v1111 = vunpack.c.0.s8 %v1110
        %v1112 = vperm.slane %v1104, %v1111
        %v1113 = vrot.slane %v1100, 4
        %v1114 = vsel %vm665, %v1113, %v1094
        %v1115 = vrot.slane %v1094, 4
        %v1116 = vsel %vm665, %v1100, %v1115
        %v1118 = vunpack.c.l.s4 1934713408
        %v1119 = vunpack.c.0.s8 %v1118
        %v1120 = vperm.slane %v1114, %v1119
        %v1122 = vunpack.c.l.s4 1934713408
        %v1123 = vunpack.c.0.s8 %v1122
        %v1124 = vperm.slane %v1116, %v1123
        %v1125 = vrot.slane %v1120, 4
        %v1126 = vsel %vm665, %v1125, %v1108
        %v1127 = vrot.slane %v1108, 4
        %v1128 = vsel %vm665, %v1120, %v1127
        %v1129 = vrot.slane %v1124, 4
        %v1130 = vsel %vm665, %v1129, %v1112
        %v1131 = vrot.slane %v1112, 4
        %v1132 = vsel %vm665, %v1124, %v1131
        %v1133 = vpack.c.bf16 %v1072, %v1072
        %v1134 = vpack.c.bf16 %v1126, %v1126
        %v1135 = vpack.c.bf16 %v1074, %v1074
        %v1136 = vpack.c.bf16 %v1128, %v1128
        %v1137 = vpack.c.bf16 %v1076, %v1076
        %v1138 = vpack.c.bf16 %v1130, %v1130
        %v1139 = vpack.c.bf16 %v1078, %v1078
        %v1140 = vpack.c.bf16 %v1132, %v1132
        loop: start=0, step=1, limit=2
        $region81: #{tpu_custom_call.1} parent=55 // loop_pre_header
          _
        $region82: #{tpu_custom_call.1} parent=55 // loop_header
          %s1142 = sphi 0, %s1146
          %p1143 = scmp.ge.s32.totalorder %s1142, 2
          %v1147 = vphi %v565, %v3777
          %v1148 = vphi %v566, %v3778
        $region83: #{tpu_custom_call.1} parent=55 // loop_header_branch
          %1145 = sbr.rel (%p1143) target = $region87
        $region84: #{tpu_custom_call.1} parent=55 // loop_body
          %v1149 = vadd.f32 %v1147, %v569
          %v1150 = vadd.f32 %v1148, %v570
          %v1151 = vpack.c.bf16 %v1150, %v1149
          %v1156 = vunpack.c.l.b16 %v505
          %v1157 = vunpack.c.l.b16 %v506
          %v1158 = vunpack.c.l.b16 %v507
          %v1159 = vunpack.c.l.b16 %v508
          %v1160 = vpack.c.b16 %v1157, %v1156
          %v1161 = vpack.c.b16 %v1159, %v1158
          %v1165 = vsel %vm596, %v1151, 0
          %1167 = vmatpush.bf16.msra.mxu0 0
          %1168 = vmatpush.bf16.msra.mxu0 0
          %1169 = vmatpush.bf16.msra.mxu0 0
          %1170 = vmatpush.bf16.msra.mxu0 0
          %1171 = vmatpush.bf16.msra.mxu0 0
          %1172 = vmatpush.bf16.msra.mxu0 0
          %1173 = vmatpush.bf16.msra.mxu0 %v1161
          %1174 = vmatpush.bf16.msra.mxu0 %v1160
          %1175 = vmatmul.bf16.gmra.mxu0 %v1165
          %v1176 = vpop.f32.mrf.mxu0
          %v1177 = vadd.f32 %v548, %v1176
          %v1178 = vpop.f32.mrf.mxu0
          %v1179 = vadd.f32 %v548, %v1178
          %1180 = vdwg.mxu0
          %v1181 = vpack.c.bf16 %v1148, %v1147
          %v1186 = vunpack.c.l.b16 %v509
          %v1187 = vunpack.c.l.b16 %v510
          %v1188 = vunpack.c.l.b16 %v511
          %v1189 = vunpack.c.l.b16 %v512
          %v1190 = vpack.c.b16 %v1187, %v1186
          %v1191 = vpack.c.b16 %v1189, %v1188
          %v1195 = vsel %vm596, %v1181, 0
          %1197 = vmatpush.bf16.msra.mxu0 0
          %1198 = vmatpush.bf16.msra.mxu0 0
          %1199 = vmatpush.bf16.msra.mxu0 0
          %1200 = vmatpush.bf16.msra.mxu0 0
          %1201 = vmatpush.bf16.msra.mxu0 0
          %1202 = vmatpush.bf16.msra.mxu0 0
          %1203 = vmatpush.bf16.msra.mxu0 %v1191
          %1204 = vmatpush.bf16.msra.mxu0 %v1190
          %1205 = vmatmul.bf16.gmra.mxu0 %v1195
          %v1206 = vpop.f32.mrf.mxu0
          %v1207 = vadd.f32 %v549, %v1206
          %v1208 = vpop.f32.mrf.mxu0
          %v1209 = vadd.f32 %v549, %v1208
          %1210 = vdwg.mxu0
          %1213 = vrot.lane.b32.xlu0 %v1177, 120
          %v1214 = vpop.permute.xlu0 %1213
          %1215 = vrot.lane.b32.xlu0 %v1179, 120
          %v1216 = vpop.permute.xlu0 %1215
          %1219 = vrot.lane.b32.xlu0 %v1177, 112
          %v1220 = vpop.permute.xlu0 %1219
          %1221 = vrot.lane.b32.xlu0 %v1179, 112
          %v1222 = vpop.permute.xlu0 %1221
          %1225 = vrot.lane.b32.xlu0 %v1177, 104
          %v1226 = vpop.permute.xlu0 %1225
          %1227 = vrot.lane.b32.xlu0 %v1179, 104
          %v1228 = vpop.permute.xlu0 %1227
          %v1231 = vrot.slane %v1220, 4
          %v1232 = vsel %vm665, %v1231, %v1177
          %v1233 = vrot.slane %v1177, 4
          %v1234 = vsel %vm665, %v1220, %v1233
          %v1236 = vunpack.c.l.s4 1983009808
          %v1237 = vunpack.c.0.s8 %v1236
          %v1238 = vperm.slane %v1232, %v1237
          %v1240 = vunpack.c.l.s4 1983009808
          %v1241 = vunpack.c.0.s8 %v1240
          %v1242 = vperm.slane %v1234, %v1241
          %v1243 = vrot.slane %v1226, 4
          %v1244 = vsel %vm665, %v1243, %v1214
          %v1245 = vrot.slane %v1214, 4
          %v1246 = vsel %vm665, %v1226, %v1245
          %v1248 = vunpack.c.l.s4 1983009808
          %v1249 = vunpack.c.0.s8 %v1248
          %v1250 = vperm.slane %v1244, %v1249
          %v1252 = vunpack.c.l.s4 1983009808
          %v1253 = vunpack.c.0.s8 %v1252
          %v1254 = vperm.slane %v1246, %v1253
          %v1255 = vrot.slane %v1250, 4
          %v1256 = vsel %vm665, %v1255, %v1238
          %v1257 = vrot.slane %v1238, 4
          %v1258 = vsel %vm665, %v1250, %v1257
          %v1260 = vunpack.c.l.s4 1934713408
          %v1261 = vunpack.c.0.s8 %v1260
          %v1262 = vperm.slane %v1256, %v1261
          %v1264 = vunpack.c.l.s4 1934713408
          %v1265 = vunpack.c.0.s8 %v1264
          %v1266 = vperm.slane %v1258, %v1265
          %v1267 = vrot.slane %v1254, 4
          %v1268 = vsel %vm665, %v1267, %v1242
          %v1269 = vrot.slane %v1242, 4
          %v1270 = vsel %vm665, %v1254, %v1269
          %v1272 = vunpack.c.l.s4 1934713408
          %v1273 = vunpack.c.0.s8 %v1272
          %v1274 = vperm.slane %v1268, %v1273
          %v1276 = vunpack.c.l.s4 1934713408
          %v1277 = vunpack.c.0.s8 %v1276
          %v1278 = vperm.slane %v1270, %v1277
          %v1279 = vrot.slane %v1262, 4
          %v1280 = vsel %vm665, 0.0, %v1279
          %v1281 = vrot.slane %v1266, 4
          %v1282 = vsel %vm665, 0.0, %v1281
          %v1283 = vrot.slane %v1274, 4
          %v1284 = vsel %vm665, 0.0, %v1283
          %v1285 = vrot.slane %v1278, 4
          %v1286 = vsel %vm665, 0.0, %v1285
          %v1287 = vrot.slane %v1222, 4
          %v1288 = vsel %vm665, %v1287, %v1179
          %v1289 = vrot.slane %v1179, 4
          %v1290 = vsel %vm665, %v1222, %v1289
          %v1292 = vunpack.c.l.s4 1983009808
          %v1293 = vunpack.c.0.s8 %v1292
          %v1294 = vperm.slane %v1288, %v1293
          %v1296 = vunpack.c.l.s4 1983009808
          %v1297 = vunpack.c.0.s8 %v1296
          %v1298 = vperm.slane %v1290, %v1297
          %v1299 = vrot.slane %v1228, 4
          %v1300 = vsel %vm665, %v1299, %v1216
          %v1301 = vrot.slane %v1216, 4
          %v1302 = vsel %vm665, %v1228, %v1301
          %v1304 = vunpack.c.l.s4 1983009808
          %v1305 = vunpack.c.0.s8 %v1304
          %v1306 = vperm.slane %v1300, %v1305
          %v1308 = vunpack.c.l.s4 1983009808
          %v1309 = vunpack.c.0.s8 %v1308
          %v1310 = vperm.slane %v1302, %v1309
          %v1311 = vrot.slane %v1306, 4
          %v1312 = vsel %vm665, %v1311, %v1294
          %v1313 = vrot.slane %v1294, 4
          %v1314 = vsel %vm665, %v1306, %v1313
          %v1316 = vunpack.c.l.s4 1934713408
          %v1317 = vunpack.c.0.s8 %v1316
          %v1318 = vperm.slane %v1312, %v1317
          %v1320 = vunpack.c.l.s4 1934713408
          %v1321 = vunpack.c.0.s8 %v1320
          %v1322 = vperm.slane %v1314, %v1321
          %v1323 = vrot.slane %v1310, 4
          %v1324 = vsel %vm665, %v1323, %v1298
          %v1325 = vrot.slane %v1298, 4
          %v1326 = vsel %vm665, %v1310, %v1325
          %v1328 = vunpack.c.l.s4 1934713408
          %v1329 = vunpack.c.0.s8 %v1328
          %v1330 = vperm.slane %v1324, %v1329
          %v1332 = vunpack.c.l.s4 1934713408
          %v1333 = vunpack.c.0.s8 %v1332
          %v1334 = vperm.slane %v1326, %v1333
          %v1335 = vrot.slane %v1318, 4
          %v1336 = vsel %vm665, 0.0, %v1335
          %v1337 = vrot.slane %v1322, 4
          %v1338 = vsel %vm665, 0.0, %v1337
          %v1339 = vrot.slane %v1330, 4
          %v1340 = vsel %vm665, 0.0, %v1339
          %v1341 = vrot.slane %v1334, 4
          %v1342 = vsel %vm665, 0.0, %v1341
          %v1343 = vsel %vm665, %v1281, %v1262
          %v1345 = vunpack.c.l.s4 1983009808
          %v1346 = vunpack.c.0.s8 %v1345
          %v1347 = vperm.slane %v1343, %v1346
          %v1348 = vrot.slane %v1282, 4
          %v1349 = vsel %vm665, %v1348, %v1280
          %v1351 = vunpack.c.l.s4 1983009808
          %v1352 = vunpack.c.0.s8 %v1351
          %v1353 = vperm.slane %v1349, %v1352
          %v1354 = vsel %vm665, %v1285, %v1274
          %v1356 = vunpack.c.l.s4 1983009808
          %v1357 = vunpack.c.0.s8 %v1356
          %v1358 = vperm.slane %v1354, %v1357
          %v1359 = vrot.slane %v1286, 4
          %v1360 = vsel %vm665, %v1359, %v1284
          %v1362 = vunpack.c.l.s4 1983009808
          %v1363 = vunpack.c.0.s8 %v1362
          %v1364 = vperm.slane %v1360, %v1363
          %v1365 = vrot.slane %v1353, 4
          %v1366 = vsel %vm665, %v1365, %v1347
          %v1367 = vrot.slane %v1347, 4
          %v1368 = vsel %vm665, %v1353, %v1367
          %v1370 = vunpack.c.l.s4 1934713408
          %v1371 = vunpack.c.0.s8 %v1370
          %v1372 = vperm.slane %v1366, %v1371
          %v1374 = vunpack.c.l.s4 1934713408
          %v1375 = vunpack.c.0.s8 %v1374
          %v1376 = vperm.slane %v1368, %v1375
          %v1377 = vrot.slane %v1364, 4
          %v1378 = vsel %vm665, %v1377, %v1358
          %v1379 = vrot.slane %v1358, 4
          %v1380 = vsel %vm665, %v1364, %v1379
          %v1382 = vunpack.c.l.s4 1934713408
          %v1383 = vunpack.c.0.s8 %v1382
          %v1384 = vperm.slane %v1378, %v1383
          %v1386 = vunpack.c.l.s4 1934713408
          %v1387 = vunpack.c.0.s8 %v1386
          %v1388 = vperm.slane %v1380, %v1387
          %v1389 = vrot.slane %v1384, 4
          %v1390 = vsel %vm665, %v1389, %v1372
          %v1391 = vrot.slane %v1372, 4
          %v1392 = vsel %vm665, %v1384, %v1391
          %v1393 = vrot.slane %v1388, 4
          %v1394 = vsel %vm665, %v1393, %v1376
          %v1395 = vrot.slane %v1376, 4
          %v1396 = vsel %vm665, %v1388, %v1395
          %v1397 = vsel %vm665, %v1337, %v1318
          %v1399 = vunpack.c.l.s4 1983009808
          %v1400 = vunpack.c.0.s8 %v1399
          %v1401 = vperm.slane %v1397, %v1400
          %v1402 = vrot.slane %v1338, 4
          %v1403 = vsel %vm665, %v1402, %v1336
          %v1405 = vunpack.c.l.s4 1983009808
          %v1406 = vunpack.c.0.s8 %v1405
          %v1407 = vperm.slane %v1403, %v1406
          %v1408 = vsel %vm665, %v1341, %v1330
          %v1410 = vunpack.c.l.s4 1983009808
          %v1411 = vunpack.c.0.s8 %v1410
          %v1412 = vperm.slane %v1408, %v1411
          %v1413 = vrot.slane %v1342, 4
          %v1414 = vsel %vm665, %v1413, %v1340
          %v1416 = vunpack.c.l.s4 1983009808
          %v1417 = vunpack.c.0.s8 %v1416
          %v1418 = vperm.slane %v1414, %v1417
          %v1419 = vrot.slane %v1407, 4
          %v1420 = vsel %vm665, %v1419, %v1401
          %v1421 = vrot.slane %v1401, 4
          %v1422 = vsel %vm665, %v1407, %v1421
          %v1424 = vunpack.c.l.s4 1934713408
          %v1425 = vunpack.c.0.s8 %v1424
          %v1426 = vperm.slane %v1420, %v1425
          %v1428 = vunpack.c.l.s4 1934713408
          %v1429 = vunpack.c.0.s8 %v1428
          %v1430 = vperm.slane %v1422, %v1429
          %v1431 = vrot.slane %v1418, 4
          %v1432 = vsel %vm665, %v1431, %v1412
          %v1433 = vrot.slane %v1412, 4
          %v1434 = vsel %vm665, %v1418, %v1433
          %v1436 = vunpack.c.l.s4 1934713408
          %v1437 = vunpack.c.0.s8 %v1436
          %v1438 = vperm.slane %v1432, %v1437
          %v1440 = vunpack.c.l.s4 1934713408
          %v1441 = vunpack.c.0.s8 %v1440
          %v1442 = vperm.slane %v1434, %v1441
          %v1443 = vrot.slane %v1438, 4
          %v1444 = vsel %vm665, %v1443, %v1426
          %v1445 = vrot.slane %v1426, 4
          %v1446 = vsel %vm665, %v1438, %v1445
          %v1447 = vrot.slane %v1442, 4
          %v1448 = vsel %vm665, %v1447, %v1430
          %v1449 = vrot.slane %v1430, 4
          %v1450 = vsel %vm665, %v1442, %v1449
          %v1451 = vpack.c.bf16 %v1390, %v1390
          %v1452 = vpack.c.bf16 %v1392, %v1392
          %v1453 = vpack.c.bf16 %v1394, %v1394
          %v1454 = vpack.c.bf16 %v1396, %v1396
          %v1455 = vpack.c.bf16 %v1444, %v1444
          %v1456 = vpack.c.bf16 %v1446, %v1446
          %v1457 = vpack.c.bf16 %v1448, %v1448
          %v1458 = vpack.c.bf16 %v1450, %v1450
          %1459 = vrot.lane.b32.xlu0 %v1177, 96
          %v1460 = vpop.permute.xlu0 %1459
          %1461 = vrot.lane.b32.xlu0 %v1179, 96
          %v1462 = vpop.permute.xlu0 %1461
          %1463 = vrot.lane.b32.xlu0 %v1214, 96
          %v1464 = vpop.permute.xlu0 %1463
          %1465 = vrot.lane.b32.xlu0 %v1216, 96
          %v1466 = vpop.permute.xlu0 %1465
          %1467 = vrot.lane.b32.xlu0 %v1220, 96
          %v1468 = vpop.permute.xlu0 %1467
          %1469 = vrot.lane.b32.xlu0 %v1222, 96
          %v1470 = vpop.permute.xlu0 %1469
          %1471 = vrot.lane.b32.xlu0 %v1226, 96
          %v1472 = vpop.permute.xlu0 %1471
          %1473 = vrot.lane.b32.xlu0 %v1228, 96
          %v1474 = vpop.permute.xlu0 %1473
          %v1483 = vrot.slane %v1468, 4
          %v1484 = vsel %vm665, %v1483, %v1460
          %v1485 = vrot.slane %v1460, 4
          %v1486 = vsel %vm665, %v1468, %v1485
          %v1488 = vunpack.c.l.s4 1983009808
          %v1489 = vunpack.c.0.s8 %v1488
          %v1490 = vperm.slane %v1484, %v1489
          %v1492 = vunpack.c.l.s4 1983009808
          %v1493 = vunpack.c.0.s8 %v1492
          %v1494 = vperm.slane %v1486, %v1493
          %v1495 = vrot.slane %v1472, 4
          %v1496 = vsel %vm665, %v1495, %v1464
          %v1497 = vrot.slane %v1464, 4
          %v1498 = vsel %vm665, %v1472, %v1497
          %v1500 = vunpack.c.l.s4 1983009808
          %v1501 = vunpack.c.0.s8 %v1500
          %v1502 = vperm.slane %v1496, %v1501
          %v1504 = vunpack.c.l.s4 1983009808
          %v1505 = vunpack.c.0.s8 %v1504
          %v1506 = vperm.slane %v1498, %v1505
          %v1507 = vrot.slane %v1502, 4
          %v1508 = vsel %vm665, %v1507, %v1490
          %v1509 = vrot.slane %v1490, 4
          %v1510 = vsel %vm665, %v1502, %v1509
          %v1512 = vunpack.c.l.s4 1934713408
          %v1513 = vunpack.c.0.s8 %v1512
          %v1514 = vperm.slane %v1508, %v1513
          %v1516 = vunpack.c.l.s4 1934713408
          %v1517 = vunpack.c.0.s8 %v1516
          %v1518 = vperm.slane %v1510, %v1517
          %v1519 = vrot.slane %v1506, 4
          %v1520 = vsel %vm665, %v1519, %v1494
          %v1521 = vrot.slane %v1494, 4
          %v1522 = vsel %vm665, %v1506, %v1521
          %v1524 = vunpack.c.l.s4 1934713408
          %v1525 = vunpack.c.0.s8 %v1524
          %v1526 = vperm.slane %v1520, %v1525
          %v1528 = vunpack.c.l.s4 1934713408
          %v1529 = vunpack.c.0.s8 %v1528
          %v1530 = vperm.slane %v1522, %v1529
          %v1531 = vrot.slane %v1514, 4
          %v1532 = vsel %vm665, 0.0, %v1531
          %v1533 = vrot.slane %v1518, 4
          %v1534 = vsel %vm665, 0.0, %v1533
          %v1535 = vrot.slane %v1526, 4
          %v1536 = vsel %vm665, 0.0, %v1535
          %v1537 = vrot.slane %v1530, 4
          %v1538 = vsel %vm665, 0.0, %v1537
          %v1539 = vrot.slane %v1470, 4
          %v1540 = vsel %vm665, %v1539, %v1462
          %v1541 = vrot.slane %v1462, 4
          %v1542 = vsel %vm665, %v1470, %v1541
          %v1544 = vunpack.c.l.s4 1983009808
          %v1545 = vunpack.c.0.s8 %v1544
          %v1546 = vperm.slane %v1540, %v1545
          %v1548 = vunpack.c.l.s4 1983009808
          %v1549 = vunpack.c.0.s8 %v1548
          %v1550 = vperm.slane %v1542, %v1549
          %v1551 = vrot.slane %v1474, 4
          %v1552 = vsel %vm665, %v1551, %v1466
          %v1553 = vrot.slane %v1466, 4
          %v1554 = vsel %vm665, %v1474, %v1553
          %v1556 = vunpack.c.l.s4 1983009808
          %v1557 = vunpack.c.0.s8 %v1556
          %v1558 = vperm.slane %v1552, %v1557
          %v1560 = vunpack.c.l.s4 1983009808
          %v1561 = vunpack.c.0.s8 %v1560
          %v1562 = vperm.slane %v1554, %v1561
          %v1563 = vrot.slane %v1558, 4
          %v1564 = vsel %vm665, %v1563, %v1546
          %v1565 = vrot.slane %v1546, 4
          %v1566 = vsel %vm665, %v1558, %v1565
          %v1568 = vunpack.c.l.s4 1934713408
          %v1569 = vunpack.c.0.s8 %v1568
          %v1570 = vperm.slane %v1564, %v1569
          %v1572 = vunpack.c.l.s4 1934713408
          %v1573 = vunpack.c.0.s8 %v1572
          %v1574 = vperm.slane %v1566, %v1573
          %v1575 = vrot.slane %v1562, 4
          %v1576 = vsel %vm665, %v1575, %v1550
          %v1577 = vrot.slane %v1550, 4
          %v1578 = vsel %vm665, %v1562, %v1577
          %v1580 = vunpack.c.l.s4 1934713408
          %v1581 = vunpack.c.0.s8 %v1580
          %v1582 = vperm.slane %v1576, %v1581
          %v1584 = vunpack.c.l.s4 1934713408
          %v1585 = vunpack.c.0.s8 %v1584
          %v1586 = vperm.slane %v1578, %v1585
          %v1587 = vrot.slane %v1570, 4
          %v1588 = vsel %vm665, 0.0, %v1587
          %v1589 = vrot.slane %v1574, 4
          %v1590 = vsel %vm665, 0.0, %v1589
          %v1591 = vrot.slane %v1582, 4
          %v1592 = vsel %vm665, 0.0, %v1591
          %v1593 = vrot.slane %v1586, 4
          %v1594 = vsel %vm665, 0.0, %v1593
          %v1595 = vsel %vm665, %v1533, %v1514
          %v1597 = vunpack.c.l.s4 1983009808
          %v1598 = vunpack.c.0.s8 %v1597
          %v1599 = vperm.slane %v1595, %v1598
          %v1600 = vrot.slane %v1534, 4
          %v1601 = vsel %vm665, %v1600, %v1532
          %v1603 = vunpack.c.l.s4 1983009808
          %v1604 = vunpack.c.0.s8 %v1603
          %v1605 = vperm.slane %v1601, %v1604
          %v1606 = vsel %vm665, %v1537, %v1526
          %v1608 = vunpack.c.l.s4 1983009808
          %v1609 = vunpack.c.0.s8 %v1608
          %v1610 = vperm.slane %v1606, %v1609
          %v1611 = vrot.slane %v1538, 4
          %v1612 = vsel %vm665, %v1611, %v1536
          %v1614 = vunpack.c.l.s4 1983009808
          %v1615 = vunpack.c.0.s8 %v1614
          %v1616 = vperm.slane %v1612, %v1615
          %v1617 = vrot.slane %v1605, 4
          %v1618 = vsel %vm665, %v1617, %v1599
          %v1619 = vrot.slane %v1599, 4
          %v1620 = vsel %vm665, %v1605, %v1619
          %v1622 = vunpack.c.l.s4 1934713408
          %v1623 = vunpack.c.0.s8 %v1622
          %v1624 = vperm.slane %v1618, %v1623
          %v1626 = vunpack.c.l.s4 1934713408
          %v1627 = vunpack.c.0.s8 %v1626
          %v1628 = vperm.slane %v1620, %v1627
          %v1629 = vrot.slane %v1616, 4
          %v1630 = vsel %vm665, %v1629, %v1610
          %v1631 = vrot.slane %v1610, 4
          %v1632 = vsel %vm665, %v1616, %v1631
          %v1634 = vunpack.c.l.s4 1934713408
          %v1635 = vunpack.c.0.s8 %v1634
          %v1636 = vperm.slane %v1630, %v1635
          %v1638 = vunpack.c.l.s4 1934713408
          %v1639 = vunpack.c.0.s8 %v1638
          %v1640 = vperm.slane %v1632, %v1639
          %v1641 = vrot.slane %v1636, 4
          %v1642 = vsel %vm665, %v1641, %v1624
          %v1643 = vrot.slane %v1624, 4
          %v1644 = vsel %vm665, %v1636, %v1643
          %v1645 = vrot.slane %v1640, 4
          %v1646 = vsel %vm665, %v1645, %v1628
          %v1647 = vrot.slane %v1628, 4
          %v1648 = vsel %vm665, %v1640, %v1647
          %v1649 = vsel %vm665, %v1589, %v1570
          %v1651 = vunpack.c.l.s4 1983009808
          %v1652 = vunpack.c.0.s8 %v1651
          %v1653 = vperm.slane %v1649, %v1652
          %v1654 = vrot.slane %v1590, 4
          %v1655 = vsel %vm665, %v1654, %v1588
          %v1657 = vunpack.c.l.s4 1983009808
          %v1658 = vunpack.c.0.s8 %v1657
          %v1659 = vperm.slane %v1655, %v1658
          %v1660 = vsel %vm665, %v1593, %v1582
          %v1662 = vunpack.c.l.s4 1983009808
          %v1663 = vunpack.c.0.s8 %v1662
          %v1664 = vperm.slane %v1660, %v1663
          %v1665 = vrot.slane %v1594, 4
          %v1666 = vsel %vm665, %v1665, %v1592
          %v1668 = vunpack.c.l.s4 1983009808
          %v1669 = vunpack.c.0.s8 %v1668
          %v1670 = vperm.slane %v1666, %v1669
          %v1671 = vrot.slane %v1659, 4
          %v1672 = vsel %vm665, %v1671, %v1653
          %v1673 = vrot.slane %v1653, 4
          %v1674 = vsel %vm665, %v1659, %v1673
          %v1676 = vunpack.c.l.s4 1934713408
          %v1677 = vunpack.c.0.s8 %v1676
          %v1678 = vperm.slane %v1672, %v1677
          %v1680 = vunpack.c.l.s4 1934713408
          %v1681 = vunpack.c.0.s8 %v1680
          %v1682 = vperm.slane %v1674, %v1681
          %v1683 = vrot.slane %v1670, 4
          %v1684 = vsel %vm665, %v1683, %v1664
          %v1685 = vrot.slane %v1664, 4
          %v1686 = vsel %vm665, %v1670, %v1685
          %v1688 = vunpack.c.l.s4 1934713408
          %v1689 = vunpack.c.0.s8 %v1688
          %v1690 = vperm.slane %v1684, %v1689
          %v1692 = vunpack.c.l.s4 1934713408
          %v1693 = vunpack.c.0.s8 %v1692
          %v1694 = vperm.slane %v1686, %v1693
          %v1695 = vrot.slane %v1690, 4
          %v1696 = vsel %vm665, %v1695, %v1678
          %v1697 = vrot.slane %v1678, 4
          %v1698 = vsel %vm665, %v1690, %v1697
          %v1699 = vrot.slane %v1694, 4
          %v1700 = vsel %vm665, %v1699, %v1682
          %v1701 = vrot.slane %v1682, 4
          %v1702 = vsel %vm665, %v1694, %v1701
          %v1703 = vpack.c.bf16 %v1642, %v1642
          %v1704 = vpack.c.bf16 %v1644, %v1644
          %v1705 = vpack.c.bf16 %v1646, %v1646
          %v1706 = vpack.c.bf16 %v1648, %v1648
          %v1707 = vpack.c.bf16 %v1696, %v1696
          %v1708 = vpack.c.bf16 %v1698, %v1698
          %v1709 = vpack.c.bf16 %v1700, %v1700
          %v1710 = vpack.c.bf16 %v1702, %v1702
          %1713 = vrot.lane.b32.xlu0 %v1207, 120
          %v1714 = vpop.permute.xlu0 %1713
          %1715 = vrot.lane.b32.xlu0 %v1209, 120
          %v1716 = vpop.permute.xlu0 %1715
          %1719 = vrot.lane.b32.xlu0 %v1207, 112
          %v1720 = vpop.permute.xlu0 %1719
          %1721 = vrot.lane.b32.xlu0 %v1209, 112
          %v1722 = vpop.permute.xlu0 %1721
          %1725 = vrot.lane.b32.xlu0 %v1207, 104
          %v1726 = vpop.permute.xlu0 %1725
          %1727 = vrot.lane.b32.xlu0 %v1209, 104
          %v1728 = vpop.permute.xlu0 %1727
          %v1731 = vrot.slane %v1720, 4
          %v1732 = vsel %vm665, %v1731, %v1207
          %v1733 = vrot.slane %v1207, 4
          %v1734 = vsel %vm665, %v1720, %v1733
          %v1736 = vunpack.c.l.s4 1983009808
          %v1737 = vunpack.c.0.s8 %v1736
          %v1738 = vperm.slane %v1732, %v1737
          %v1740 = vunpack.c.l.s4 1983009808
          %v1741 = vunpack.c.0.s8 %v1740
          %v1742 = vperm.slane %v1734, %v1741
          %v1743 = vrot.slane %v1726, 4
          %v1744 = vsel %vm665, %v1743, %v1714
          %v1745 = vrot.slane %v1714, 4
          %v1746 = vsel %vm665, %v1726, %v1745
          %v1748 = vunpack.c.l.s4 1983009808
          %v1749 = vunpack.c.0.s8 %v1748
          %v1750 = vperm.slane %v1744, %v1749
          %v1752 = vunpack.c.l.s4 1983009808
          %v1753 = vunpack.c.0.s8 %v1752
          %v1754 = vperm.slane %v1746, %v1753
          %v1755 = vrot.slane %v1750, 4
          %v1756 = vsel %vm665, %v1755, %v1738
          %v1757 = vrot.slane %v1738, 4
          %v1758 = vsel %vm665, %v1750, %v1757
          %v1760 = vunpack.c.l.s4 1934713408
          %v1761 = vunpack.c.0.s8 %v1760
          %v1762 = vperm.slane %v1756, %v1761
          %v1764 = vunpack.c.l.s4 1934713408
          %v1765 = vunpack.c.0.s8 %v1764
          %v1766 = vperm.slane %v1758, %v1765
          %v1767 = vrot.slane %v1754, 4
          %v1768 = vsel %vm665, %v1767, %v1742
          %v1769 = vrot.slane %v1742, 4
          %v1770 = vsel %vm665, %v1754, %v1769
          %v1772 = vunpack.c.l.s4 1934713408
          %v1773 = vunpack.c.0.s8 %v1772
          %v1774 = vperm.slane %v1768, %v1773
          %v1776 = vunpack.c.l.s4 1934713408
          %v1777 = vunpack.c.0.s8 %v1776
          %v1778 = vperm.slane %v1770, %v1777
          %v1779 = vrot.slane %v1762, 4
          %v1780 = vsel %vm665, 0.0, %v1779
          %v1781 = vrot.slane %v1766, 4
          %v1782 = vsel %vm665, 0.0, %v1781
          %v1783 = vrot.slane %v1774, 4
          %v1784 = vsel %vm665, 0.0, %v1783
          %v1785 = vrot.slane %v1778, 4
          %v1786 = vsel %vm665, 0.0, %v1785
          %v1787 = vrot.slane %v1722, 4
          %v1788 = vsel %vm665, %v1787, %v1209
          %v1789 = vrot.slane %v1209, 4
          %v1790 = vsel %vm665, %v1722, %v1789
          %v1792 = vunpack.c.l.s4 1983009808
          %v1793 = vunpack.c.0.s8 %v1792
          %v1794 = vperm.slane %v1788, %v1793
          %v1796 = vunpack.c.l.s4 1983009808
          %v1797 = vunpack.c.0.s8 %v1796
          %v1798 = vperm.slane %v1790, %v1797
          %v1799 = vrot.slane %v1728, 4
          %v1800 = vsel %vm665, %v1799, %v1716
          %v1801 = vrot.slane %v1716, 4
          %v1802 = vsel %vm665, %v1728, %v1801
          %v1804 = vunpack.c.l.s4 1983009808
          %v1805 = vunpack.c.0.s8 %v1804
          %v1806 = vperm.slane %v1800, %v1805
          %v1808 = vunpack.c.l.s4 1983009808
          %v1809 = vunpack.c.0.s8 %v1808
          %v1810 = vperm.slane %v1802, %v1809
          %v1811 = vrot.slane %v1806, 4
          %v1812 = vsel %vm665, %v1811, %v1794
          %v1813 = vrot.slane %v1794, 4
          %v1814 = vsel %vm665, %v1806, %v1813
          %v1816 = vunpack.c.l.s4 1934713408
          %v1817 = vunpack.c.0.s8 %v1816
          %v1818 = vperm.slane %v1812, %v1817
          %v1820 = vunpack.c.l.s4 1934713408
          %v1821 = vunpack.c.0.s8 %v1820
          %v1822 = vperm.slane %v1814, %v1821
          %v1823 = vrot.slane %v1810, 4
          %v1824 = vsel %vm665, %v1823, %v1798
          %v1825 = vrot.slane %v1798, 4
          %v1826 = vsel %vm665, %v1810, %v1825
          %v1828 = vunpack.c.l.s4 1934713408
          %v1829 = vunpack.c.0.s8 %v1828
          %v1830 = vperm.slane %v1824, %v1829
          %v1832 = vunpack.c.l.s4 1934713408
          %v1833 = vunpack.c.0.s8 %v1832
          %v1834 = vperm.slane %v1826, %v1833
          %v1835 = vrot.slane %v1818, 4
          %v1836 = vsel %vm665, 0.0, %v1835
          %v1837 = vrot.slane %v1822, 4
          %v1838 = vsel %vm665, 0.0, %v1837
          %v1839 = vrot.slane %v1830, 4
          %v1840 = vsel %vm665, 0.0, %v1839
          %v1841 = vrot.slane %v1834, 4
          %v1842 = vsel %vm665, 0.0, %v1841
          %v1843 = vsel %vm665, %v1781, %v1762
          %v1845 = vunpack.c.l.s4 1983009808
          %v1846 = vunpack.c.0.s8 %v1845
          %v1847 = vperm.slane %v1843, %v1846
          %v1848 = vrot.slane %v1782, 4
          %v1849 = vsel %vm665, %v1848, %v1780
          %v1851 = vunpack.c.l.s4 1983009808
          %v1852 = vunpack.c.0.s8 %v1851
          %v1853 = vperm.slane %v1849, %v1852
          %v1854 = vsel %vm665, %v1785, %v1774
          %v1856 = vunpack.c.l.s4 1983009808
          %v1857 = vunpack.c.0.s8 %v1856
          %v1858 = vperm.slane %v1854, %v1857
          %v1859 = vrot.slane %v1786, 4
          %v1860 = vsel %vm665, %v1859, %v1784
          %v1862 = vunpack.c.l.s4 1983009808
          %v1863 = vunpack.c.0.s8 %v1862
          %v1864 = vperm.slane %v1860, %v1863
          %v1865 = vrot.slane %v1853, 4
          %v1866 = vsel %vm665, %v1865, %v1847
          %v1867 = vrot.slane %v1847, 4
          %v1868 = vsel %vm665, %v1853, %v1867
          %v1870 = vunpack.c.l.s4 1934713408
          %v1871 = vunpack.c.0.s8 %v1870
          %v1872 = vperm.slane %v1866, %v1871
          %v1874 = vunpack.c.l.s4 1934713408
          %v1875 = vunpack.c.0.s8 %v1874
          %v1876 = vperm.slane %v1868, %v1875
          %v1877 = vrot.slane %v1864, 4
          %v1878 = vsel %vm665, %v1877, %v1858
          %v1879 = vrot.slane %v1858, 4
          %v1880 = vsel %vm665, %v1864, %v1879
          %v1882 = vunpack.c.l.s4 1934713408
          %v1883 = vunpack.c.0.s8 %v1882
          %v1884 = vperm.slane %v1878, %v1883
          %v1886 = vunpack.c.l.s4 1934713408
          %v1887 = vunpack.c.0.s8 %v1886
          %v1888 = vperm.slane %v1880, %v1887
          %v1889 = vrot.slane %v1884, 4
          %v1890 = vsel %vm665, %v1889, %v1872
          %v1891 = vrot.slane %v1872, 4
          %v1892 = vsel %vm665, %v1884, %v1891
          %v1893 = vrot.slane %v1888, 4
          %v1894 = vsel %vm665, %v1893, %v1876
          %v1895 = vrot.slane %v1876, 4
          %v1896 = vsel %vm665, %v1888, %v1895
          %v1897 = vsel %vm665, %v1837, %v1818
          %v1899 = vunpack.c.l.s4 1983009808
          %v1900 = vunpack.c.0.s8 %v1899
          %v1901 = vperm.slane %v1897, %v1900
          %v1902 = vrot.slane %v1838, 4
          %v1903 = vsel %vm665, %v1902, %v1836
          %v1905 = vunpack.c.l.s4 1983009808
          %v1906 = vunpack.c.0.s8 %v1905
          %v1907 = vperm.slane %v1903, %v1906
          %v1908 = vsel %vm665, %v1841, %v1830
          %v1910 = vunpack.c.l.s4 1983009808
          %v1911 = vunpack.c.0.s8 %v1910
          %v1912 = vperm.slane %v1908, %v1911
          %v1913 = vrot.slane %v1842, 4
          %v1914 = vsel %vm665, %v1913, %v1840
          %v1916 = vunpack.c.l.s4 1983009808
          %v1917 = vunpack.c.0.s8 %v1916
          %v1918 = vperm.slane %v1914, %v1917
          %v1919 = vrot.slane %v1907, 4
          %v1920 = vsel %vm665, %v1919, %v1901
          %v1921 = vrot.slane %v1901, 4
          %v1922 = vsel %vm665, %v1907, %v1921
          %v1924 = vunpack.c.l.s4 1934713408
          %v1925 = vunpack.c.0.s8 %v1924
          %v1926 = vperm.slane %v1920, %v1925
          %v1928 = vunpack.c.l.s4 1934713408
          %v1929 = vunpack.c.0.s8 %v1928
          %v1930 = vperm.slane %v1922, %v1929
          %v1931 = vrot.slane %v1918, 4
          %v1932 = vsel %vm665, %v1931, %v1912
          %v1933 = vrot.slane %v1912, 4
          %v1934 = vsel %vm665, %v1918, %v1933
          %v1936 = vunpack.c.l.s4 1934713408
          %v1937 = vunpack.c.0.s8 %v1936
          %v1938 = vperm.slane %v1932, %v1937
          %v1940 = vunpack.c.l.s4 1934713408
          %v1941 = vunpack.c.0.s8 %v1940
          %v1942 = vperm.slane %v1934, %v1941
          %v1943 = vrot.slane %v1938, 4
          %v1944 = vsel %vm665, %v1943, %v1926
          %v1945 = vrot.slane %v1926, 4
          %v1946 = vsel %vm665, %v1938, %v1945
          %v1947 = vrot.slane %v1942, 4
          %v1948 = vsel %vm665, %v1947, %v1930
          %v1949 = vrot.slane %v1930, 4
          %v1950 = vsel %vm665, %v1942, %v1949
          %v1951 = vpack.c.bf16 %v1890, %v1890
          %v1952 = vpack.c.bf16 %v1892, %v1892
          %v1953 = vpack.c.bf16 %v1894, %v1894
          %v1954 = vpack.c.bf16 %v1896, %v1896
          %v1955 = vpack.c.bf16 %v1944, %v1944
          %v1956 = vpack.c.bf16 %v1946, %v1946
          %v1957 = vpack.c.bf16 %v1948, %v1948
          %v1958 = vpack.c.bf16 %v1950, %v1950
          %vm1959 = vcmask 64512
          %v1961 = vsel %vm1959, %v1451, 0
          %v1964 = vsel %vm1959, %v1703, 0
          %1966 = vmatpush.bf16.xpose.msra.mxu0 0
          %1967 = vmatpush.bf16.xpose.msra.mxu0 0
          %1968 = vmatpush.bf16.xpose.msra.mxu0 0
          %1969 = vmatpush.bf16.xpose.msra.mxu0 0
          %1970 = vmatpush.bf16.xpose.msra.mxu0 0
          %1971 = vmatpush.bf16.xpose.msra.mxu0 0
          %1972 = vmatpush.bf16.xpose.msra.mxu0 0
          %1973 = vmatpush.bf16.xpose.msra.mxu0 %v1964
          %1974 = vmatmul.bf16.gmra.mxu0 %v1961
          %v1975 = vpop.f32.mrf.mxu0
          %v1976 = vadd.f32 0.0, %v1975
          %v1977 = vpop.f32.mrf.mxu0
          %1978 = vdwg.mxu0
          %v1980 = vsel %vm1959, %v1452, 0
          %v1983 = vsel %vm1959, %v1704, 0
          %1985 = vmatpush.bf16.xpose.msra.mxu0 0
          %1986 = vmatpush.bf16.xpose.msra.mxu0 0
          %1987 = vmatpush.bf16.xpose.msra.mxu0 0
          %1988 = vmatpush.bf16.xpose.msra.mxu0 0
          %1989 = vmatpush.bf16.xpose.msra.mxu0 0
          %1990 = vmatpush.bf16.xpose.msra.mxu0 0
          %1991 = vmatpush.bf16.xpose.msra.mxu0 0
          %1992 = vmatpush.bf16.xpose.msra.mxu0 %v1983
          %1993 = vmatmul.bf16.gmra.mxu0 %v1980
          %v1994 = vpop.f32.mrf.mxu0
          %v1995 = vadd.f32 0.0, %v1994
          %v1996 = vpop.f32.mrf.mxu0
          %1997 = vdwg.mxu0
          %v1999 = vsel %vm1959, %v1453, 0
          %v2002 = vsel %vm1959, %v1705, 0
          %2004 = vmatpush.bf16.xpose.msra.mxu0 0
          %2005 = vmatpush.bf16.xpose.msra.mxu0 0
          %2006 = vmatpush.bf16.xpose.msra.mxu0 0
          %2007 = vmatpush.bf16.xpose.msra.mxu0 0
          %2008 = vmatpush.bf16.xpose.msra.mxu0 0
          %2009 = vmatpush.bf16.xpose.msra.mxu0 0
          %2010 = vmatpush.bf16.xpose.msra.mxu0 0
          %2011 = vmatpush.bf16.xpose.msra.mxu0 %v2002
          %2012 = vmatmul.bf16.gmra.mxu0 %v1999
          %v2013 = vpop.f32.mrf.mxu0
          %v2014 = vadd.f32 0.0, %v2013
          %v2015 = vpop.f32.mrf.mxu0
          %2016 = vdwg.mxu0
          %v2018 = vsel %vm1959, %v1454, 0
          %v2021 = vsel %vm1959, %v1706, 0
          %2023 = vmatpush.bf16.xpose.msra.mxu0 0
          %2024 = vmatpush.bf16.xpose.msra.mxu0 0
          %2025 = vmatpush.bf16.xpose.msra.mxu0 0
          %2026 = vmatpush.bf16.xpose.msra.mxu0 0
          %2027 = vmatpush.bf16.xpose.msra.mxu0 0
          %2028 = vmatpush.bf16.xpose.msra.mxu0 0
          %2029 = vmatpush.bf16.xpose.msra.mxu0 0
          %2030 = vmatpush.bf16.xpose.msra.mxu0 %v2021
          %2031 = vmatmul.bf16.gmra.mxu0 %v2018
          %v2032 = vpop.f32.mrf.mxu0
          %v2033 = vadd.f32 0.0, %v2032
          %v2034 = vpop.f32.mrf.mxu0
          %2035 = vdwg.mxu0
          %v2037 = vsel %vm1959, %v1455, 0
          %v2040 = vsel %vm1959, %v1707, 0
          %2042 = vmatpush.bf16.xpose.msra.mxu0 0
          %2043 = vmatpush.bf16.xpose.msra.mxu0 0
          %2044 = vmatpush.bf16.xpose.msra.mxu0 0
          %2045 = vmatpush.bf16.xpose.msra.mxu0 0
          %2046 = vmatpush.bf16.xpose.msra.mxu0 0
          %2047 = vmatpush.bf16.xpose.msra.mxu0 0
          %2048 = vmatpush.bf16.xpose.msra.mxu0 0
          %2049 = vmatpush.bf16.xpose.msra.mxu0 %v2040
          %2050 = vmatmul.bf16.gmra.mxu0 %v2037
          %v2051 = vpop.f32.mrf.mxu0
          %v2052 = vadd.f32 0.0, %v2051
          %v2053 = vpop.f32.mrf.mxu0
          %2054 = vdwg.mxu0
          %v2056 = vsel %vm1959, %v1456, 0
          %v2059 = vsel %vm1959, %v1708, 0
          %2061 = vmatpush.bf16.xpose.msra.mxu0 0
          %2062 = vmatpush.bf16.xpose.msra.mxu0 0
          %2063 = vmatpush.bf16.xpose.msra.mxu0 0
          %2064 = vmatpush.bf16.xpose.msra.mxu0 0
          %2065 = vmatpush.bf16.xpose.msra.mxu0 0
          %2066 = vmatpush.bf16.xpose.msra.mxu0 0
          %2067 = vmatpush.bf16.xpose.msra.mxu0 0
          %2068 = vmatpush.bf16.xpose.msra.mxu0 %v2059
          %2069 = vmatmul.bf16.gmra.mxu0 %v2056
          %v2070 = vpop.f32.mrf.mxu0
          %v2071 = vadd.f32 0.0, %v2070
          %v2072 = vpop.f32.mrf.mxu0
          %2073 = vdwg.mxu0
          %v2075 = vsel %vm1959, %v1457, 0
          %v2078 = vsel %vm1959, %v1709, 0
          %2080 = vmatpush.bf16.xpose.msra.mxu0 0
          %2081 = vmatpush.bf16.xpose.msra.mxu0 0
          %2082 = vmatpush.bf16.xpose.msra.mxu0 0
          %2083 = vmatpush.bf16.xpose.msra.mxu0 0
          %2084 = vmatpush.bf16.xpose.msra.mxu0 0
          %2085 = vmatpush.bf16.xpose.msra.mxu0 0
          %2086 = vmatpush.bf16.xpose.msra.mxu0 0
          %2087 = vmatpush.bf16.xpose.msra.mxu0 %v2078
          %2088 = vmatmul.bf16.gmra.mxu0 %v2075
          %v2089 = vpop.f32.mrf.mxu0
          %v2090 = vadd.f32 0.0, %v2089
          %v2091 = vpop.f32.mrf.mxu0
          %2092 = vdwg.mxu0
          %v2094 = vsel %vm1959, %v1458, 0
          %v2097 = vsel %vm1959, %v1710, 0
          %2099 = vmatpush.bf16.xpose.msra.mxu0 0
          %2100 = vmatpush.bf16.xpose.msra.mxu0 0
          %2101 = vmatpush.bf16.xpose.msra.mxu0 0
          %2102 = vmatpush.bf16.xpose.msra.mxu0 0
          %2103 = vmatpush.bf16.xpose.msra.mxu0 0
          %2104 = vmatpush.bf16.xpose.msra.mxu0 0
          %2105 = vmatpush.bf16.xpose.msra.mxu0 0
          %2106 = vmatpush.bf16.xpose.msra.mxu0 %v2097
          %2107 = vmatmul.bf16.gmra.mxu0 %v2094
          %v2108 = vpop.f32.mrf.mxu0
          %v2109 = vadd.f32 0.0, %v2108
          %v2110 = vpop.f32.mrf.mxu0
          %2111 = vdwg.mxu0
          %v2112 = vmul.f32 %v1976, 0.35355338
          %v2113 = vmul.f32 %v1995, 0.35355338
          %v2114 = vmul.f32 %v2014, 0.35355338
          %v2115 = vmul.f32 %v2033, 0.35355338
          %v2116 = vmul.f32 %v2052, 0.35355338
          %v2117 = vmul.f32 %v2071, 0.35355338
          %v2118 = vmul.f32 %v2090, 0.35355338
          %v2119 = vmul.f32 %v2109, 0.35355338
          %v2120 = vsel %vm1959, %v2112, -inf
          %2121 = vmax.xlane.f32.xlu0 %v2120
          %v2122 = vpop.xlane.xlu0 %2121
          %v2123 = vsel %vm1959, %v2113, -inf
          %2124 = vmax.xlane.f32.xlu0 %v2123
          %v2125 = vpop.xlane.xlu0 %2124
          %v2126 = vsel %vm1959, %v2114, -inf
          %2127 = vmax.xlane.f32.xlu0 %v2126
          %v2128 = vpop.xlane.xlu0 %2127
          %v2129 = vsel %vm1959, %v2115, -inf
          %2130 = vmax.xlane.f32.xlu0 %v2129
          %v2131 = vpop.xlane.xlu0 %2130
          %v2132 = vsel %vm1959, %v2116, -inf
          %2133 = vmax.xlane.f32.xlu0 %v2132
          %v2134 = vpop.xlane.xlu0 %2133
          %v2135 = vsel %vm1959, %v2117, -inf
          %2136 = vmax.xlane.f32.xlu0 %v2135
          %v2137 = vpop.xlane.xlu0 %2136
          %v2138 = vsel %vm1959, %v2118, -inf
          %2139 = vmax.xlane.f32.xlu0 %v2138
          %v2140 = vpop.xlane.xlu0 %2139
          %v2141 = vsel %vm1959, %v2119, -inf
          %2142 = vmax.xlane.f32.xlu0 %v2141
          %v2143 = vpop.xlane.xlu0 %2142
          %v2144 = vsub.f32 %v2112, %v2122
          %v2145 = vsub.f32 %v2113, %v2125
          %v2146 = vsub.f32 %v2114, %v2128
          %v2147 = vsub.f32 %v2115, %v2131
          %v2148 = vsub.f32 %v2116, %v2134
          %v2149 = vsub.f32 %v2117, %v2137
          %v2150 = vsub.f32 %v2118, %v2140
          %v2151 = vsub.f32 %v2119, %v2143
          %v2152 = vmul.f32 %v2144, 1.442695
          %v2153 = vpow.pop %v2152
          %v2154 = vmul.f32 %v2145, 1.442695
          %v2155 = vpow.pop %v2154
          %v2156 = vmul.f32 %v2146, 1.442695
          %v2157 = vpow.pop %v2156
          %v2158 = vmul.f32 %v2147, 1.442695
          %v2159 = vpow.pop %v2158
          %v2160 = vmul.f32 %v2148, 1.442695
          %v2161 = vpow.pop %v2160
          %v2162 = vmul.f32 %v2149, 1.442695
          %v2163 = vpow.pop %v2162
          %v2164 = vmul.f32 %v2150, 1.442695
          %v2165 = vpow.pop %v2164
          %v2166 = vmul.f32 %v2151, 1.442695
          %v2167 = vpow.pop %v2166
          %v2168 = vsel %vm1959, %v2153, 0.0
          %2169 = vadd.xlane.f32.xlu0 %v2168
          %v2170 = vpop.xlane.xlu0 %2169
          %v2171 = vsel %vm1959, %v2155, 0.0
          %2172 = vadd.xlane.f32.xlu0 %v2171
          %v2173 = vpop.xlane.xlu0 %2172
          %v2174 = vsel %vm1959, %v2157, 0.0
          %2175 = vadd.xlane.f32.xlu0 %v2174
          %v2176 = vpop.xlane.xlu0 %2175
          %v2177 = vsel %vm1959, %v2159, 0.0
          %2178 = vadd.xlane.f32.xlu0 %v2177
          %v2179 = vpop.xlane.xlu0 %2178
          %v2180 = vsel %vm1959, %v2161, 0.0
          %2181 = vadd.xlane.f32.xlu0 %v2180
          %v2182 = vpop.xlane.xlu0 %2181
          %v2183 = vsel %vm1959, %v2163, 0.0
          %2184 = vadd.xlane.f32.xlu0 %v2183
          %v2185 = vpop.xlane.xlu0 %2184
          %v2186 = vsel %vm1959, %v2165, 0.0
          %2187 = vadd.xlane.f32.xlu0 %v2186
          %v2188 = vpop.xlane.xlu0 %2187
          %v2189 = vsel %vm1959, %v2167, 0.0
          %2190 = vadd.xlane.f32.xlu0 %v2189
          %v2191 = vpop.xlane.xlu0 %2190
          %v2192 = vrcp.pop %v2170
          %v2193 = vrcp.pop %v2173
          %v2194 = vrcp.pop %v2176
          %v2195 = vrcp.pop %v2179
          %v2196 = vrcp.pop %v2182
          %v2197 = vrcp.pop %v2185
          %v2198 = vrcp.pop %v2188
          %v2199 = vrcp.pop %v2191
          %v2200 = vmul.f32 %v2153, %v2192
          %v2201 = vmul.f32 %v2155, %v2193
          %v2202 = vmul.f32 %v2157, %v2194
          %v2203 = vmul.f32 %v2159, %v2195
          %v2204 = vmul.f32 %v2161, %v2196
          %v2205 = vmul.f32 %v2163, %v2197
          %v2206 = vmul.f32 %v2165, %v2198
          %v2207 = vmul.f32 %v2167, %v2199
          %v2208 = vpack.c.bf16 %v2200, %v2200
          %v2209 = vpack.c.bf16 %v2201, %v2201
          %v2210 = vpack.c.bf16 %v2202, %v2202
          %v2211 = vpack.c.bf16 %v2203, %v2203
          %v2212 = vpack.c.bf16 %v2204, %v2204
          %v2213 = vpack.c.bf16 %v2205, %v2205
          %v2214 = vpack.c.bf16 %v2206, %v2206
          %v2215 = vpack.c.bf16 %v2207, %v2207
          %v2217 = vsel %vm1959, %v2208, 0
          %vm2219 = vcmask 1043456
          %v2221 = vsel %vm2219, %v1951, 0
          %2223 = vmatpush.bf16.msra.mxu0 0
          %2224 = vmatpush.bf16.msra.mxu0 0
          %2225 = vmatpush.bf16.msra.mxu0 0
          %2226 = vmatpush.bf16.msra.mxu0 0
          %2227 = vmatpush.bf16.msra.mxu0 0
          %2228 = vmatpush.bf16.msra.mxu0 0
          %2229 = vmatpush.bf16.msra.mxu0 0
          %2230 = vmatpush.bf16.msra.mxu0 %v2221
          %2231 = vmatmul.bf16.gmra.mxu0 %v2217
          %v2232 = vpop.f32.mrf.mxu0
          %v2233 = vadd.f32 0.0, %v2232
          %v2234 = vpop.f32.mrf.mxu0
          %2235 = vdwg.mxu0
          %v2237 = vsel %vm1959, %v2209, 0
          %v2240 = vsel %vm2219, %v1952, 0
          %2242 = vmatpush.bf16.msra.mxu0 0
          %2243 = vmatpush.bf16.msra.mxu0 0
          %2244 = vmatpush.bf16.msra.mxu0 0
          %2245 = vmatpush.bf16.msra.mxu0 0
          %2246 = vmatpush.bf16.msra.mxu0 0
          %2247 = vmatpush.bf16.msra.mxu0 0
          %2248 = vmatpush.bf16.msra.mxu0 0
          %2249 = vmatpush.bf16.msra.mxu0 %v2240
          %2250 = vmatmul.bf16.gmra.mxu0 %v2237
          %v2251 = vpop.f32.mrf.mxu0
          %v2252 = vadd.f32 0.0, %v2251
          %v2253 = vpop.f32.mrf.mxu0
          %2254 = vdwg.mxu0
          %v2256 = vsel %vm1959, %v2210, 0
          %v2259 = vsel %vm2219, %v1953, 0
          %2261 = vmatpush.bf16.msra.mxu0 0
          %2262 = vmatpush.bf16.msra.mxu0 0
          %2263 = vmatpush.bf16.msra.mxu0 0
          %2264 = vmatpush.bf16.msra.mxu0 0
          %2265 = vmatpush.bf16.msra.mxu0 0
          %2266 = vmatpush.bf16.msra.mxu0 0
          %2267 = vmatpush.bf16.msra.mxu0 0
          %2268 = vmatpush.bf16.msra.mxu0 %v2259
          %2269 = vmatmul.bf16.gmra.mxu0 %v2256
          %v2270 = vpop.f32.mrf.mxu0
          %v2271 = vadd.f32 0.0, %v2270
          %v2272 = vpop.f32.mrf.mxu0
          %2273 = vdwg.mxu0
          %v2275 = vsel %vm1959, %v2211, 0
          %v2278 = vsel %vm2219, %v1954, 0
          %2280 = vmatpush.bf16.msra.mxu0 0
          %2281 = vmatpush.bf16.msra.mxu0 0
          %2282 = vmatpush.bf16.msra.mxu0 0
          %2283 = vmatpush.bf16.msra.mxu0 0
          %2284 = vmatpush.bf16.msra.mxu0 0
          %2285 = vmatpush.bf16.msra.mxu0 0
          %2286 = vmatpush.bf16.msra.mxu0 0
          %2287 = vmatpush.bf16.msra.mxu0 %v2278
          %2288 = vmatmul.bf16.gmra.mxu0 %v2275
          %v2289 = vpop.f32.mrf.mxu0
          %v2290 = vadd.f32 0.0, %v2289
          %v2291 = vpop.f32.mrf.mxu0
          %2292 = vdwg.mxu0
          %v2294 = vsel %vm1959, %v2212, 0
          %v2297 = vsel %vm2219, %v1955, 0
          %2299 = vmatpush.bf16.msra.mxu0 0
          %2300 = vmatpush.bf16.msra.mxu0 0
          %2301 = vmatpush.bf16.msra.mxu0 0
          %2302 = vmatpush.bf16.msra.mxu0 0
          %2303 = vmatpush.bf16.msra.mxu0 0
          %2304 = vmatpush.bf16.msra.mxu0 0
          %2305 = vmatpush.bf16.msra.mxu0 0
          %2306 = vmatpush.bf16.msra.mxu0 %v2297
          %2307 = vmatmul.bf16.gmra.mxu0 %v2294
          %v2308 = vpop.f32.mrf.mxu0
          %v2309 = vadd.f32 0.0, %v2308
          %v2310 = vpop.f32.mrf.mxu0
          %2311 = vdwg.mxu0
          %v2313 = vsel %vm1959, %v2213, 0
          %v2316 = vsel %vm2219, %v1956, 0
          %2318 = vmatpush.bf16.msra.mxu0 0
          %2319 = vmatpush.bf16.msra.mxu0 0
          %2320 = vmatpush.bf16.msra.mxu0 0
          %2321 = vmatpush.bf16.msra.mxu0 0
          %2322 = vmatpush.bf16.msra.mxu0 0
          %2323 = vmatpush.bf16.msra.mxu0 0
          %2324 = vmatpush.bf16.msra.mxu0 0
          %2325 = vmatpush.bf16.msra.mxu0 %v2316
          %2326 = vmatmul.bf16.gmra.mxu0 %v2313
          %v2327 = vpop.f32.mrf.mxu0
          %v2328 = vadd.f32 0.0, %v2327
          %v2329 = vpop.f32.mrf.mxu0
          %2330 = vdwg.mxu0
          %v2332 = vsel %vm1959, %v2214, 0
          %v2335 = vsel %vm2219, %v1957, 0
          %2337 = vmatpush.bf16.msra.mxu0 0
          %2338 = vmatpush.bf16.msra.mxu0 0
          %2339 = vmatpush.bf16.msra.mxu0 0
          %2340 = vmatpush.bf16.msra.mxu0 0
          %2341 = vmatpush.bf16.msra.mxu0 0
          %2342 = vmatpush.bf16.msra.mxu0 0
          %2343 = vmatpush.bf16.msra.mxu0 0
          %2344 = vmatpush.bf16.msra.mxu0 %v2335
          %2345 = vmatmul.bf16.gmra.mxu0 %v2332
          %v2346 = vpop.f32.mrf.mxu0
          %v2347 = vadd.f32 0.0, %v2346
          %v2348 = vpop.f32.mrf.mxu0
          %2349 = vdwg.mxu0
          %v2351 = vsel %vm1959, %v2215, 0
          %v2354 = vsel %vm2219, %v1958, 0
          %2356 = vmatpush.bf16.msra.mxu0 0
          %2357 = vmatpush.bf16.msra.mxu0 0
          %2358 = vmatpush.bf16.msra.mxu0 0
          %2359 = vmatpush.bf16.msra.mxu0 0
          %2360 = vmatpush.bf16.msra.mxu0 0
          %2361 = vmatpush.bf16.msra.mxu0 0
          %2362 = vmatpush.bf16.msra.mxu0 0
          %2363 = vmatpush.bf16.msra.mxu0 %v2354
          %2364 = vmatmul.bf16.gmra.mxu0 %v2351
          %v2365 = vpop.f32.mrf.mxu0
          %v2366 = vadd.f32 0.0, %v2365
          %v2367 = vpop.f32.mrf.mxu0
          %2368 = vdwg.mxu0
          %v2369 = vrot.slane %v2271, 4
          %v2370 = vsel %vm665, %v2369, %v2233
          %v2371 = vrot.slane %v2233, 4
          %v2372 = vsel %vm665, %v2271, %v2371
          %v2374 = vunpack.c.l.s4 1983009808
          %v2375 = vunpack.c.0.s8 %v2374
          %v2376 = vperm.slane %v2370, %v2375
          %v2378 = vunpack.c.l.s4 1983009808
          %v2379 = vunpack.c.0.s8 %v2378
          %v2380 = vperm.slane %v2372, %v2379
          %v2381 = vrot.slane %v2290, 4
          %v2382 = vsel %vm665, %v2381, %v2252
          %v2383 = vrot.slane %v2252, 4
          %v2384 = vsel %vm665, %v2290, %v2383
          %v2386 = vunpack.c.l.s4 1983009808
          %v2387 = vunpack.c.0.s8 %v2386
          %v2388 = vperm.slane %v2382, %v2387
          %v2390 = vunpack.c.l.s4 1983009808
          %v2391 = vunpack.c.0.s8 %v2390
          %v2392 = vperm.slane %v2384, %v2391
          %v2393 = vrot.slane %v2388, 4
          %v2394 = vsel %vm665, %v2393, %v2376
          %v2395 = vrot.slane %v2376, 4
          %v2396 = vsel %vm665, %v2388, %v2395
          %v2398 = vunpack.c.l.s4 1934713408
          %v2399 = vunpack.c.0.s8 %v2398
          %v2400 = vperm.slane %v2394, %v2399
          %v2402 = vunpack.c.l.s4 1934713408
          %v2403 = vunpack.c.0.s8 %v2402
          %v2404 = vperm.slane %v2396, %v2403
          %v2405 = vrot.slane %v2392, 4
          %v2406 = vsel %vm665, %v2405, %v2380
          %v2407 = vrot.slane %v2380, 4
          %v2408 = vsel %vm665, %v2392, %v2407
          %v2410 = vunpack.c.l.s4 1934713408
          %v2411 = vunpack.c.0.s8 %v2410
          %v2412 = vperm.slane %v2406, %v2411
          %v2414 = vunpack.c.l.s4 1934713408
          %v2415 = vunpack.c.0.s8 %v2414
          %v2416 = vperm.slane %v2408, %v2415
          %v2417 = vrot.slane %v2400, 4
          %v2418 = vsel %vm665, 0.0, %v2417
          %v2419 = vrot.slane %v2404, 4
          %v2420 = vsel %vm665, 0.0, %v2419
          %v2421 = vrot.slane %v2412, 4
          %v2422 = vsel %vm665, 0.0, %v2421
          %v2423 = vrot.slane %v2416, 4
          %v2424 = vsel %vm665, 0.0, %v2423
          %v2425 = vrot.slane %v2347, 4
          %v2426 = vsel %vm665, %v2425, %v2309
          %v2427 = vrot.slane %v2309, 4
          %v2428 = vsel %vm665, %v2347, %v2427
          %v2430 = vunpack.c.l.s4 1983009808
          %v2431 = vunpack.c.0.s8 %v2430
          %v2432 = vperm.slane %v2426, %v2431
          %v2434 = vunpack.c.l.s4 1983009808
          %v2435 = vunpack.c.0.s8 %v2434
          %v2436 = vperm.slane %v2428, %v2435
          %v2437 = vrot.slane %v2366, 4
          %v2438 = vsel %vm665, %v2437, %v2328
          %v2439 = vrot.slane %v2328, 4
          %v2440 = vsel %vm665, %v2366, %v2439
          %v2442 = vunpack.c.l.s4 1983009808
          %v2443 = vunpack.c.0.s8 %v2442
          %v2444 = vperm.slane %v2438, %v2443
          %v2446 = vunpack.c.l.s4 1983009808
          %v2447 = vunpack.c.0.s8 %v2446
          %v2448 = vperm.slane %v2440, %v2447
          %v2449 = vrot.slane %v2444, 4
          %v2450 = vsel %vm665, %v2449, %v2432
          %v2451 = vrot.slane %v2432, 4
          %v2452 = vsel %vm665, %v2444, %v2451
          %v2454 = vunpack.c.l.s4 1934713408
          %v2455 = vunpack.c.0.s8 %v2454
          %v2456 = vperm.slane %v2450, %v2455
          %v2458 = vunpack.c.l.s4 1934713408
          %v2459 = vunpack.c.0.s8 %v2458
          %v2460 = vperm.slane %v2452, %v2459
          %v2461 = vrot.slane %v2448, 4
          %v2462 = vsel %vm665, %v2461, %v2436
          %v2463 = vrot.slane %v2436, 4
          %v2464 = vsel %vm665, %v2448, %v2463
          %v2466 = vunpack.c.l.s4 1934713408
          %v2467 = vunpack.c.0.s8 %v2466
          %v2468 = vperm.slane %v2462, %v2467
          %v2470 = vunpack.c.l.s4 1934713408
          %v2471 = vunpack.c.0.s8 %v2470
          %v2472 = vperm.slane %v2464, %v2471
          %v2473 = vrot.slane %v2456, 4
          %v2474 = vsel %vm665, 0.0, %v2473
          %v2475 = vrot.slane %v2460, 4
          %v2476 = vsel %vm665, 0.0, %v2475
          %v2477 = vrot.slane %v2468, 4
          %v2478 = vsel %vm665, 0.0, %v2477
          %v2479 = vrot.slane %v2472, 4
          %v2480 = vsel %vm665, 0.0, %v2479
          %v2481 = vsel %vm665, %v2419, %v2400
          %v2483 = vunpack.c.l.s4 1983009808
          %v2484 = vunpack.c.0.s8 %v2483
          %v2485 = vperm.slane %v2481, %v2484
          %v2486 = vrot.slane %v2420, 4
          %v2487 = vsel %vm665, %v2486, %v2418
          %v2489 = vunpack.c.l.s4 1983009808
          %v2490 = vunpack.c.0.s8 %v2489
          %v2491 = vperm.slane %v2487, %v2490
          %v2492 = vsel %vm665, %v2423, %v2412
          %v2494 = vunpack.c.l.s4 1983009808
          %v2495 = vunpack.c.0.s8 %v2494
          %v2496 = vperm.slane %v2492, %v2495
          %v2497 = vrot.slane %v2424, 4
          %v2498 = vsel %vm665, %v2497, %v2422
          %v2500 = vunpack.c.l.s4 1983009808
          %v2501 = vunpack.c.0.s8 %v2500
          %v2502 = vperm.slane %v2498, %v2501
          %v2503 = vrot.slane %v2491, 4
          %v2504 = vsel %vm665, %v2503, %v2485
          %v2505 = vrot.slane %v2485, 4
          %v2506 = vsel %vm665, %v2491, %v2505
          %v2508 = vunpack.c.l.s4 1934713408
          %v2509 = vunpack.c.0.s8 %v2508
          %v2510 = vperm.slane %v2504, %v2509
          %v2512 = vunpack.c.l.s4 1934713408
          %v2513 = vunpack.c.0.s8 %v2512
          %v2514 = vperm.slane %v2506, %v2513
          %v2515 = vrot.slane %v2502, 4
          %v2516 = vsel %vm665, %v2515, %v2496
          %v2517 = vrot.slane %v2496, 4
          %v2518 = vsel %vm665, %v2502, %v2517
          %v2520 = vunpack.c.l.s4 1934713408
          %v2521 = vunpack.c.0.s8 %v2520
          %v2522 = vperm.slane %v2516, %v2521
          %v2524 = vunpack.c.l.s4 1934713408
          %v2525 = vunpack.c.0.s8 %v2524
          %v2526 = vperm.slane %v2518, %v2525
          %v2527 = vrot.slane %v2522, 4
          %v2528 = vsel %vm665, %v2527, %v2510
          %v2529 = vrot.slane %v2510, 4
          %v2530 = vsel %vm665, %v2522, %v2529
          %v2531 = vrot.slane %v2526, 4
          %v2532 = vsel %vm665, %v2531, %v2514
          %v2533 = vrot.slane %v2514, 4
          %v2534 = vsel %vm665, %v2526, %v2533
          %v2535 = vsel %vm665, %v2475, %v2456
          %v2537 = vunpack.c.l.s4 1983009808
          %v2538 = vunpack.c.0.s8 %v2537
          %v2539 = vperm.slane %v2535, %v2538
          %v2540 = vrot.slane %v2476, 4
          %v2541 = vsel %vm665, %v2540, %v2474
          %v2543 = vunpack.c.l.s4 1983009808
          %v2544 = vunpack.c.0.s8 %v2543
          %v2545 = vperm.slane %v2541, %v2544
          %v2546 = vsel %vm665, %v2479, %v2468
          %v2548 = vunpack.c.l.s4 1983009808
          %v2549 = vunpack.c.0.s8 %v2548
          %v2550 = vperm.slane %v2546, %v2549
          %v2551 = vrot.slane %v2480, 4
          %v2552 = vsel %vm665, %v2551, %v2478
          %v2554 = vunpack.c.l.s4 1983009808
          %v2555 = vunpack.c.0.s8 %v2554
          %v2556 = vperm.slane %v2552, %v2555
          %v2557 = vrot.slane %v2545, 4
          %v2558 = vsel %vm665, %v2557, %v2539
          %v2559 = vrot.slane %v2539, 4
          %v2560 = vsel %vm665, %v2545, %v2559
          %v2562 = vunpack.c.l.s4 1934713408
          %v2563 = vunpack.c.0.s8 %v2562
          %v2564 = vperm.slane %v2558, %v2563
          %v2566 = vunpack.c.l.s4 1934713408
          %v2567 = vunpack.c.0.s8 %v2566
          %v2568 = vperm.slane %v2560, %v2567
          %v2569 = vrot.slane %v2556, 4
          %v2570 = vsel %vm665, %v2569, %v2550
          %v2571 = vrot.slane %v2550, 4
          %v2572 = vsel %vm665, %v2556, %v2571
          %v2574 = vunpack.c.l.s4 1934713408
          %v2575 = vunpack.c.0.s8 %v2574
          %v2576 = vperm.slane %v2570, %v2575
          %v2578 = vunpack.c.l.s4 1934713408
          %v2579 = vunpack.c.0.s8 %v2578
          %v2580 = vperm.slane %v2572, %v2579
          %v2581 = vrot.slane %v2576, 4
          %v2582 = vsel %vm665, %v2581, %v2564
          %v2583 = vrot.slane %v2564, 4
          %v2584 = vsel %vm665, %v2576, %v2583
          %v2585 = vrot.slane %v2580, 4
          %v2586 = vsel %vm665, %v2585, %v2568
          %v2587 = vrot.slane %v2568, 4
          %v2588 = vsel %vm665, %v2580, %v2587
          %2591 = vrot.lane.b32.xlu0 %v2530, 8
          %v2592 = vpop.permute.xlu0 %2591
          %2593 = vrot.lane.b32.xlu0 %v2584, 8
          %v2594 = vpop.permute.xlu0 %2593
          %2599 = vrot.lane.b32.xlu0 %v2532, 16
          %v2600 = vpop.permute.xlu0 %2599
          %2601 = vrot.lane.b32.xlu0 %v2586, 16
          %v2602 = vpop.permute.xlu0 %2601
          %2607 = vrot.lane.b32.xlu0 %v2534, 24
          %v2608 = vpop.permute.xlu0 %2607
          %2609 = vrot.lane.b32.xlu0 %v2588, 24
          %v2610 = vpop.permute.xlu0 %2609
          %v2613 = vsel %vm1959, %v2528, %v2592
          %v2614 = vsel %vm1959, %v2582, %v2594
          %vm2615 = vcmask 130048
          %v2616 = vsel %vm2615, %v2613, %v2600
          %v2617 = vsel %vm2615, %v2614, %v2602
          %vm2618 = vcmask 195584
          %v2619 = vsel %vm2618, %v2616, %v2608
          %v2620 = vsel %vm2618, %v2617, %v2610
          %v2621 = vpack.c.bf16 %v2620, %v2619
          %v2626 = vunpack.c.l.b16 %v525
          %v2627 = vunpack.c.l.b16 %v526
          %v2628 = vunpack.c.l.b16 %v527
          %v2629 = vunpack.c.l.b16 %v528
          %v2630 = vpack.c.b16 %v2627, %v2626
          %v2631 = vpack.c.b16 %v2629, %v2628
          %v2635 = vsel %vm596, %v2621, 0
          %2637 = vmatpush.bf16.msra.mxu0 0
          %2638 = vmatpush.bf16.msra.mxu0 0
          %2639 = vmatpush.bf16.msra.mxu0 0
          %2640 = vmatpush.bf16.msra.mxu0 0
          %2641 = vmatpush.bf16.msra.mxu0 0
          %2642 = vmatpush.bf16.msra.mxu0 0
          %2643 = vmatpush.bf16.msra.mxu0 %v2631
          %2644 = vmatpush.bf16.msra.mxu0 %v2630
          %2645 = vmatmul.bf16.gmra.mxu0 %v2635
          %v2646 = vpop.f32.mrf.mxu0
          %v2647 = vadd.f32 %v550, %v2646
          %v2648 = vpop.f32.mrf.mxu0
          %v2649 = vadd.f32 %v550, %v2648
          %2650 = vdwg.mxu0
          %v2651 = vadd.f32 %v1147, %v2647
          %v2652 = vadd.f32 %v1148, %v2649
          %v2653 = vsel %vm596, %v2651, 0.0
          %2654 = vadd.xlane.f32.xlu0 %v2653
          %v2655 = vpop.xlane.xlu0 %2654
          %v2656 = vsel %vm596, %v2652, 0.0
          %2657 = vadd.xlane.f32.xlu0 %v2656
          %v2658 = vpop.xlane.xlu0 %2657
          %v2659 = vrcp.pop 32.0
          %v2660 = vmul.f32 32.0, %v2659
          %v2661 = vsub.f32 1.0, %v2660
          %v2662 = vmul.f32 %v2659, %v2661
          %v2663 = vadd.f32 %v2659, %v2662
          %vm2664 = vweird.f32 %v2659
          %v2665 = vsel %vm2664, %v2659, %v2663
          %v2666 = vmul.f32 %v2655, %v2665
          %v2667 = vmul.f32 %v2658, %v2665
          %v2668 = vsub.f32 %v2651, %v2666
          %v2669 = vsub.f32 %v2652, %v2667
          %v2670 = vmul.f32 %v2668, %v2668
          %v2671 = vmul.f32 %v2669, %v2669
          %v2672 = vsel %vm596, %v2670, 0.0
          %2673 = vadd.xlane.f32.xlu0 %v2672
          %v2674 = vpop.xlane.xlu0 %2673
          %v2675 = vsel %vm596, %v2671, 0.0
          %2676 = vadd.xlane.f32.xlu0 %v2675
          %v2677 = vpop.xlane.xlu0 %2676
          %v2678 = vmul.f32 %v2674, %v2665
          %v2679 = vmul.f32 %v2677, %v2665
          %v2680 = vadd.f32 %v2678, 1e-05
          %v2681 = vadd.f32 %v2679, 1e-05
          %v2682 = vrsqrt.pop %v2680
          %v2683 = vmul.f32 %v2682, %v2680
          %v2684 = vmul.f32 %v2683, %v2682
          %v2685 = vmul.f32 0.5, %v2684
          %v2686 = vsub.f32 1.5, %v2685
          %v2687 = vmul.f32 %v2682, %v2686
          %vm2688 = vweird.f32 %v2680
          %vm2689 = vweird.f32 %v2682
          %vm2690 = vmor %vm2688, %vm2689
          %v2691 = vsel %vm2690, %v2682, %v2687
          %v2692 = vrsqrt.pop %v2681
          %v2693 = vmul.f32 %v2692, %v2681
          %v2694 = vmul.f32 %v2693, %v2692
          %v2695 = vmul.f32 0.5, %v2694
          %v2696 = vsub.f32 1.5, %v2695
          %v2697 = vmul.f32 %v2692, %v2696
          %vm2698 = vweird.f32 %v2681
          %vm2699 = vweird.f32 %v2692
          %vm2700 = vmor %vm2698, %vm2699
          %v2701 = vsel %vm2700, %v2692, %v2697
          %v2702 = vmul.f32 %v2668, %v2691
          %v2703 = vmul.f32 %v2669, %v2701
          %v2704 = vmul.f32 %v2702, %v551
          %v2705 = vmul.f32 %v2703, %v551
          %v2706 = vadd.f32 %v2704, %v552
          %v2707 = vadd.f32 %v2705, %v552
          %v2708 = vadd.f32 %v2706, %v569
          %v2709 = vadd.f32 %v2707, %v570
          %v2710 = vpack.c.bf16 %v2709, %v2708
          %v2715 = vunpack.c.l.b16 %v513
          %v2716 = vunpack.c.l.b16 %v514
          %v2717 = vunpack.c.l.b16 %v515
          %v2718 = vunpack.c.l.b16 %v516
          %v2719 = vpack.c.b16 %v2716, %v2715
          %v2720 = vpack.c.b16 %v2718, %v2717
          %v2724 = vsel %vm596, %v2710, 0
          %2726 = vmatpush.bf16.msra.mxu0 0
          %2727 = vmatpush.bf16.msra.mxu0 0
          %2728 = vmatpush.bf16.msra.mxu0 0
          %2729 = vmatpush.bf16.msra.mxu0 0
          %2730 = vmatpush.bf16.msra.mxu0 0
          %2731 = vmatpush.bf16.msra.mxu0 0
          %2732 = vmatpush.bf16.msra.mxu0 %v2720
          %2733 = vmatpush.bf16.msra.mxu0 %v2719
          %2734 = vmatmul.bf16.gmra.mxu0 %v2724
          %v2735 = vpop.f32.mrf.mxu0
          %v2736 = vadd.f32 %v553, %v2735
          %v2737 = vpop.f32.mrf.mxu0
          %v2738 = vadd.f32 %v553, %v2737
          %2739 = vdwg.mxu0
          %2742 = vrot.lane.b32.xlu0 %v2736, 120
          %v2743 = vpop.permute.xlu0 %2742
          %2744 = vrot.lane.b32.xlu0 %v2738, 120
          %v2745 = vpop.permute.xlu0 %2744
          %2748 = vrot.lane.b32.xlu0 %v2736, 112
          %v2749 = vpop.permute.xlu0 %2748
          %2750 = vrot.lane.b32.xlu0 %v2738, 112
          %v2751 = vpop.permute.xlu0 %2750
          %2754 = vrot.lane.b32.xlu0 %v2736, 104
          %v2755 = vpop.permute.xlu0 %2754
          %2756 = vrot.lane.b32.xlu0 %v2738, 104
          %v2757 = vpop.permute.xlu0 %2756
          %v2760 = vrot.slane %v2749, 4
          %v2761 = vsel %vm665, %v2760, %v2736
          %v2762 = vrot.slane %v2736, 4
          %v2763 = vsel %vm665, %v2749, %v2762
          %v2765 = vunpack.c.l.s4 1983009808
          %v2766 = vunpack.c.0.s8 %v2765
          %v2767 = vperm.slane %v2761, %v2766
          %v2769 = vunpack.c.l.s4 1983009808
          %v2770 = vunpack.c.0.s8 %v2769
          %v2771 = vperm.slane %v2763, %v2770
          %v2772 = vrot.slane %v2755, 4
          %v2773 = vsel %vm665, %v2772, %v2743
          %v2774 = vrot.slane %v2743, 4
          %v2775 = vsel %vm665, %v2755, %v2774
          %v2777 = vunpack.c.l.s4 1983009808
          %v2778 = vunpack.c.0.s8 %v2777
          %v2779 = vperm.slane %v2773, %v2778
          %v2781 = vunpack.c.l.s4 1983009808
          %v2782 = vunpack.c.0.s8 %v2781
          %v2783 = vperm.slane %v2775, %v2782
          %v2784 = vrot.slane %v2779, 4
          %v2785 = vsel %vm665, %v2784, %v2767
          %v2786 = vrot.slane %v2767, 4
          %v2787 = vsel %vm665, %v2779, %v2786
          %v2789 = vunpack.c.l.s4 1934713408
          %v2790 = vunpack.c.0.s8 %v2789
          %v2791 = vperm.slane %v2785, %v2790
          %v2793 = vunpack.c.l.s4 1934713408
          %v2794 = vunpack.c.0.s8 %v2793
          %v2795 = vperm.slane %v2787, %v2794
          %v2796 = vrot.slane %v2783, 4
          %v2797 = vsel %vm665, %v2796, %v2771
          %v2798 = vrot.slane %v2771, 4
          %v2799 = vsel %vm665, %v2783, %v2798
          %v2801 = vunpack.c.l.s4 1934713408
          %v2802 = vunpack.c.0.s8 %v2801
          %v2803 = vperm.slane %v2797, %v2802
          %v2805 = vunpack.c.l.s4 1934713408
          %v2806 = vunpack.c.0.s8 %v2805
          %v2807 = vperm.slane %v2799, %v2806
          %v2808 = vrot.slane %v2791, 4
          %v2809 = vsel %vm665, 0.0, %v2808
          %v2810 = vrot.slane %v2795, 4
          %v2811 = vsel %vm665, 0.0, %v2810
          %v2812 = vrot.slane %v2803, 4
          %v2813 = vsel %vm665, 0.0, %v2812
          %v2814 = vrot.slane %v2807, 4
          %v2815 = vsel %vm665, 0.0, %v2814
          %v2816 = vrot.slane %v2751, 4
          %v2817 = vsel %vm665, %v2816, %v2738
          %v2818 = vrot.slane %v2738, 4
          %v2819 = vsel %vm665, %v2751, %v2818
          %v2821 = vunpack.c.l.s4 1983009808
          %v2822 = vunpack.c.0.s8 %v2821
          %v2823 = vperm.slane %v2817, %v2822
          %v2825 = vunpack.c.l.s4 1983009808
          %v2826 = vunpack.c.0.s8 %v2825
          %v2827 = vperm.slane %v2819, %v2826
          %v2828 = vrot.slane %v2757, 4
          %v2829 = vsel %vm665, %v2828, %v2745
          %v2830 = vrot.slane %v2745, 4
          %v2831 = vsel %vm665, %v2757, %v2830
          %v2833 = vunpack.c.l.s4 1983009808
          %v2834 = vunpack.c.0.s8 %v2833
          %v2835 = vperm.slane %v2829, %v2834
          %v2837 = vunpack.c.l.s4 1983009808
          %v2838 = vunpack.c.0.s8 %v2837
          %v2839 = vperm.slane %v2831, %v2838
          %v2840 = vrot.slane %v2835, 4
          %v2841 = vsel %vm665, %v2840, %v2823
          %v2842 = vrot.slane %v2823, 4
          %v2843 = vsel %vm665, %v2835, %v2842
          %v2845 = vunpack.c.l.s4 1934713408
          %v2846 = vunpack.c.0.s8 %v2845
          %v2847 = vperm.slane %v2841, %v2846
          %v2849 = vunpack.c.l.s4 1934713408
          %v2850 = vunpack.c.0.s8 %v2849
          %v2851 = vperm.slane %v2843, %v2850
          %v2852 = vrot.slane %v2839, 4
          %v2853 = vsel %vm665, %v2852, %v2827
          %v2854 = vrot.slane %v2827, 4
          %v2855 = vsel %vm665, %v2839, %v2854
          %v2857 = vunpack.c.l.s4 1934713408
          %v2858 = vunpack.c.0.s8 %v2857
          %v2859 = vperm.slane %v2853, %v2858
          %v2861 = vunpack.c.l.s4 1934713408
          %v2862 = vunpack.c.0.s8 %v2861
          %v2863 = vperm.slane %v2855, %v2862
          %v2864 = vrot.slane %v2847, 4
          %v2865 = vsel %vm665, 0.0, %v2864
          %v2866 = vrot.slane %v2851, 4
          %v2867 = vsel %vm665, 0.0, %v2866
          %v2868 = vrot.slane %v2859, 4
          %v2869 = vsel %vm665, 0.0, %v2868
          %v2870 = vrot.slane %v2863, 4
          %v2871 = vsel %vm665, 0.0, %v2870
          %v2872 = vsel %vm665, %v2810, %v2791
          %v2874 = vunpack.c.l.s4 1983009808
          %v2875 = vunpack.c.0.s8 %v2874
          %v2876 = vperm.slane %v2872, %v2875
          %v2877 = vrot.slane %v2811, 4
          %v2878 = vsel %vm665, %v2877, %v2809
          %v2880 = vunpack.c.l.s4 1983009808
          %v2881 = vunpack.c.0.s8 %v2880
          %v2882 = vperm.slane %v2878, %v2881
          %v2883 = vsel %vm665, %v2814, %v2803
          %v2885 = vunpack.c.l.s4 1983009808
          %v2886 = vunpack.c.0.s8 %v2885
          %v2887 = vperm.slane %v2883, %v2886
          %v2888 = vrot.slane %v2815, 4
          %v2889 = vsel %vm665, %v2888, %v2813
          %v2891 = vunpack.c.l.s4 1983009808
          %v2892 = vunpack.c.0.s8 %v2891
          %v2893 = vperm.slane %v2889, %v2892
          %v2894 = vrot.slane %v2882, 4
          %v2895 = vsel %vm665, %v2894, %v2876
          %v2896 = vrot.slane %v2876, 4
          %v2897 = vsel %vm665, %v2882, %v2896
          %v2899 = vunpack.c.l.s4 1934713408
          %v2900 = vunpack.c.0.s8 %v2899
          %v2901 = vperm.slane %v2895, %v2900
          %v2903 = vunpack.c.l.s4 1934713408
          %v2904 = vunpack.c.0.s8 %v2903
          %v2905 = vperm.slane %v2897, %v2904
          %v2906 = vrot.slane %v2893, 4
          %v2907 = vsel %vm665, %v2906, %v2887
          %v2908 = vrot.slane %v2887, 4
          %v2909 = vsel %vm665, %v2893, %v2908
          %v2911 = vunpack.c.l.s4 1934713408
          %v2912 = vunpack.c.0.s8 %v2911
          %v2913 = vperm.slane %v2907, %v2912
          %v2915 = vunpack.c.l.s4 1934713408
          %v2916 = vunpack.c.0.s8 %v2915
          %v2917 = vperm.slane %v2909, %v2916
          %v2918 = vrot.slane %v2913, 4
          %v2919 = vsel %vm665, %v2918, %v2901
          %v2920 = vrot.slane %v2901, 4
          %v2921 = vsel %vm665, %v2913, %v2920
          %v2922 = vrot.slane %v2917, 4
          %v2923 = vsel %vm665, %v2922, %v2905
          %v2924 = vrot.slane %v2905, 4
          %v2925 = vsel %vm665, %v2917, %v2924
          %v2926 = vsel %vm665, %v2866, %v2847
          %v2928 = vunpack.c.l.s4 1983009808
          %v2929 = vunpack.c.0.s8 %v2928
          %v2930 = vperm.slane %v2926, %v2929
          %v2931 = vrot.slane %v2867, 4
          %v2932 = vsel %vm665, %v2931, %v2865
          %v2934 = vunpack.c.l.s4 1983009808
          %v2935 = vunpack.c.0.s8 %v2934
          %v2936 = vperm.slane %v2932, %v2935
          %v2937 = vsel %vm665, %v2870, %v2859
          %v2939 = vunpack.c.l.s4 1983009808
          %v2940 = vunpack.c.0.s8 %v2939
          %v2941 = vperm.slane %v2937, %v2940
          %v2942 = vrot.slane %v2871, 4
          %v2943 = vsel %vm665, %v2942, %v2869
          %v2945 = vunpack.c.l.s4 1983009808
          %v2946 = vunpack.c.0.s8 %v2945
          %v2947 = vperm.slane %v2943, %v2946
          %v2948 = vrot.slane %v2936, 4
          %v2949 = vsel %vm665, %v2948, %v2930
          %v2950 = vrot.slane %v2930, 4
          %v2951 = vsel %vm665, %v2936, %v2950
          %v2953 = vunpack.c.l.s4 1934713408
          %v2954 = vunpack.c.0.s8 %v2953
          %v2955 = vperm.slane %v2949, %v2954
          %v2957 = vunpack.c.l.s4 1934713408
          %v2958 = vunpack.c.0.s8 %v2957
          %v2959 = vperm.slane %v2951, %v2958
          %v2960 = vrot.slane %v2947, 4
          %v2961 = vsel %vm665, %v2960, %v2941
          %v2962 = vrot.slane %v2941, 4
          %v2963 = vsel %vm665, %v2947, %v2962
          %v2965 = vunpack.c.l.s4 1934713408
          %v2966 = vunpack.c.0.s8 %v2965
          %v2967 = vperm.slane %v2961, %v2966
          %v2969 = vunpack.c.l.s4 1934713408
          %v2970 = vunpack.c.0.s8 %v2969
          %v2971 = vperm.slane %v2963, %v2970
          %v2972 = vrot.slane %v2967, 4
          %v2973 = vsel %vm665, %v2972, %v2955
          %v2974 = vrot.slane %v2955, 4
          %v2975 = vsel %vm665, %v2967, %v2974
          %v2976 = vrot.slane %v2971, 4
          %v2977 = vsel %vm665, %v2976, %v2959
          %v2978 = vrot.slane %v2959, 4
          %v2979 = vsel %vm665, %v2971, %v2978
          %v2980 = vpack.c.bf16 %v2919, %v2919
          %v2981 = vpack.c.bf16 %v2973, %v2973
          %v2982 = vpack.c.bf16 %v2921, %v2921
          %v2983 = vpack.c.bf16 %v2975, %v2975
          %v2984 = vpack.c.bf16 %v2923, %v2923
          %v2985 = vpack.c.bf16 %v2977, %v2977
          %v2986 = vpack.c.bf16 %v2925, %v2925
          %v2987 = vpack.c.bf16 %v2979, %v2979
          %v2990 = vunpack.c.l.b16 %v2980
          %v2991 = vunpack.c.l.b16 %v2981
          %v2992 = vpack.c.b16 %v2991, %v2990
          %v2995 = vunpack.c.l.b16 %v885
          %v2996 = vunpack.c.l.b16 %v886
          %v2997 = vpack.c.b16 %v2996, %v2995
          %v2999 = vsel %vm1959, %v2992, 0
          %v3002 = vsel %vm1959, %v2997, 0
          %3004 = vmatpush.bf16.xpose.msra.mxu0 0
          %3005 = vmatpush.bf16.xpose.msra.mxu0 0
          %3006 = vmatpush.bf16.xpose.msra.mxu0 0
          %3007 = vmatpush.bf16.xpose.msra.mxu0 0
          %3008 = vmatpush.bf16.xpose.msra.mxu0 0
          %3009 = vmatpush.bf16.xpose.msra.mxu0 0
          %3010 = vmatpush.bf16.xpose.msra.mxu0 0
          %3011 = vmatpush.bf16.xpose.msra.mxu0 %v3002
          %3012 = vmatmul.bf16.gmra.mxu0 %v2999
          %v3013 = vpop.f32.mrf.mxu0
          %v3014 = vadd.f32 0.0, %v3013
          %v3015 = vpop.f32.mrf.mxu0
          %v3016 = vadd.f32 0.0, %v3015
          %3017 = vdwg.mxu0
          %v3020 = vunpack.c.l.b16 %v2982
          %v3021 = vunpack.c.l.b16 %v2983
          %v3022 = vpack.c.b16 %v3021, %v3020
          %v3025 = vunpack.c.l.b16 %v887
          %v3026 = vunpack.c.l.b16 %v888
          %v3027 = vpack.c.b16 %v3026, %v3025
          %v3029 = vsel %vm1959, %v3022, 0
          %v3032 = vsel %vm1959, %v3027, 0
          %3034 = vmatpush.bf16.xpose.msra.mxu0 0
          %3035 = vmatpush.bf16.xpose.msra.mxu0 0
          %3036 = vmatpush.bf16.xpose.msra.mxu0 0
          %3037 = vmatpush.bf16.xpose.msra.mxu0 0
          %3038 = vmatpush.bf16.xpose.msra.mxu0 0
          %3039 = vmatpush.bf16.xpose.msra.mxu0 0
          %3040 = vmatpush.bf16.xpose.msra.mxu0 0
          %3041 = vmatpush.bf16.xpose.msra.mxu0 %v3032
          %3042 = vmatmul.bf16.gmra.mxu0 %v3029
          %v3043 = vpop.f32.mrf.mxu0
          %v3044 = vadd.f32 0.0, %v3043
          %v3045 = vpop.f32.mrf.mxu0
          %v3046 = vadd.f32 0.0, %v3045
          %3047 = vdwg.mxu0
          %v3050 = vunpack.c.l.b16 %v2984
          %v3051 = vunpack.c.l.b16 %v2985
          %v3052 = vpack.c.b16 %v3051, %v3050
          %v3055 = vunpack.c.l.b16 %v889
          %v3056 = vunpack.c.l.b16 %v890
          %v3057 = vpack.c.b16 %v3056, %v3055
          %v3059 = vsel %vm1959, %v3052, 0
          %v3062 = vsel %vm1959, %v3057, 0
          %3064 = vmatpush.bf16.xpose.msra.mxu0 0
          %3065 = vmatpush.bf16.xpose.msra.mxu0 0
          %3066 = vmatpush.bf16.xpose.msra.mxu0 0
          %3067 = vmatpush.bf16.xpose.msra.mxu0 0
          %3068 = vmatpush.bf16.xpose.msra.mxu0 0
          %3069 = vmatpush.bf16.xpose.msra.mxu0 0
          %3070 = vmatpush.bf16.xpose.msra.mxu0 0
          %3071 = vmatpush.bf16.xpose.msra.mxu0 %v3062
          %3072 = vmatmul.bf16.gmra.mxu0 %v3059
          %v3073 = vpop.f32.mrf.mxu0
          %v3074 = vadd.f32 0.0, %v3073
          %v3075 = vpop.f32.mrf.mxu0
          %v3076 = vadd.f32 0.0, %v3075
          %3077 = vdwg.mxu0
          %v3080 = vunpack.c.l.b16 %v2986
          %v3081 = vunpack.c.l.b16 %v2987
          %v3082 = vpack.c.b16 %v3081, %v3080
          %v3085 = vunpack.c.l.b16 %v891
          %v3086 = vunpack.c.l.b16 %v892
          %v3087 = vpack.c.b16 %v3086, %v3085
          %v3089 = vsel %vm1959, %v3082, 0
          %v3092 = vsel %vm1959, %v3087, 0
          %3094 = vmatpush.bf16.xpose.msra.mxu0 0
          %3095 = vmatpush.bf16.xpose.msra.mxu0 0
          %3096 = vmatpush.bf16.xpose.msra.mxu0 0
          %3097 = vmatpush.bf16.xpose.msra.mxu0 0
          %3098 = vmatpush.bf16.xpose.msra.mxu0 0
          %3099 = vmatpush.bf16.xpose.msra.mxu0 0
          %3100 = vmatpush.bf16.xpose.msra.mxu0 0
          %3101 = vmatpush.bf16.xpose.msra.mxu0 %v3092
          %3102 = vmatmul.bf16.gmra.mxu0 %v3089
          %v3103 = vpop.f32.mrf.mxu0
          %v3104 = vadd.f32 0.0, %v3103
          %v3105 = vpop.f32.mrf.mxu0
          %v3106 = vadd.f32 0.0, %v3105
          %3107 = vdwg.mxu0
          %v3108 = vmul.f32 %v3014, 0.35355338
          %v3109 = vmul.f32 %v3016, 0.35355338
          %v3110 = vmul.f32 %v3044, 0.35355338
          %v3111 = vmul.f32 %v3046, 0.35355338
          %v3112 = vmul.f32 %v3074, 0.35355338
          %v3113 = vmul.f32 %v3076, 0.35355338
          %v3114 = vmul.f32 %v3104, 0.35355338
          %v3115 = vmul.f32 %v3106, 0.35355338
          %v3116 = vsel %vm2615, %v3108, -inf
          %3117 = vmax.xlane.f32.xlu0 %v3116
          %v3118 = vpop.xlane.xlu0 %3117
          %v3119 = vsel %vm2615, %v3109, -inf
          %3120 = vmax.xlane.f32.xlu0 %v3119
          %v3121 = vpop.xlane.xlu0 %3120
          %v3122 = vsel %vm2615, %v3110, -inf
          %3123 = vmax.xlane.f32.xlu0 %v3122
          %v3124 = vpop.xlane.xlu0 %3123
          %v3125 = vsel %vm2615, %v3111, -inf
          %3126 = vmax.xlane.f32.xlu0 %v3125
          %v3127 = vpop.xlane.xlu0 %3126
          %v3128 = vsel %vm2615, %v3112, -inf
          %3129 = vmax.xlane.f32.xlu0 %v3128
          %v3130 = vpop.xlane.xlu0 %3129
          %v3131 = vsel %vm2615, %v3113, -inf
          %3132 = vmax.xlane.f32.xlu0 %v3131
          %v3133 = vpop.xlane.xlu0 %3132
          %v3134 = vsel %vm2615, %v3114, -inf
          %3135 = vmax.xlane.f32.xlu0 %v3134
          %v3136 = vpop.xlane.xlu0 %3135
          %v3137 = vsel %vm2615, %v3115, -inf
          %3138 = vmax.xlane.f32.xlu0 %v3137
          %v3139 = vpop.xlane.xlu0 %3138
          %v3140 = vsub.f32 %v3108, %v3118
          %v3141 = vsub.f32 %v3109, %v3121
          %v3142 = vsub.f32 %v3110, %v3124
          %v3143 = vsub.f32 %v3111, %v3127
          %v3144 = vsub.f32 %v3112, %v3130
          %v3145 = vsub.f32 %v3113, %v3133
          %v3146 = vsub.f32 %v3114, %v3136
          %v3147 = vsub.f32 %v3115, %v3139
          %v3148 = vmul.f32 %v3140, 1.442695
          %v3149 = vpow.pop %v3148
          %v3150 = vmul.f32 %v3141, 1.442695
          %v3151 = vpow.pop %v3150
          %v3152 = vmul.f32 %v3142, 1.442695
          %v3153 = vpow.pop %v3152
          %v3154 = vmul.f32 %v3143, 1.442695
          %v3155 = vpow.pop %v3154
          %v3156 = vmul.f32 %v3144, 1.442695
          %v3157 = vpow.pop %v3156
          %v3158 = vmul.f32 %v3145, 1.442695
          %v3159 = vpow.pop %v3158
          %v3160 = vmul.f32 %v3146, 1.442695
          %v3161 = vpow.pop %v3160
          %v3162 = vmul.f32 %v3147, 1.442695
          %v3163 = vpow.pop %v3162
          %v3164 = vsel %vm2615, %v3149, 0.0
          %3165 = vadd.xlane.f32.xlu0 %v3164
          %v3166 = vpop.xlane.xlu0 %3165
          %v3167 = vsel %vm2615, %v3151, 0.0
          %3168 = vadd.xlane.f32.xlu0 %v3167
          %v3169 = vpop.xlane.xlu0 %3168
          %v3170 = vsel %vm2615, %v3153, 0.0
          %3171 = vadd.xlane.f32.xlu0 %v3170
          %v3172 = vpop.xlane.xlu0 %3171
          %v3173 = vsel %vm2615, %v3155, 0.0
          %3174 = vadd.xlane.f32.xlu0 %v3173
          %v3175 = vpop.xlane.xlu0 %3174
          %v3176 = vsel %vm2615, %v3157, 0.0
          %3177 = vadd.xlane.f32.xlu0 %v3176
          %v3178 = vpop.xlane.xlu0 %3177
          %v3179 = vsel %vm2615, %v3159, 0.0
          %3180 = vadd.xlane.f32.xlu0 %v3179
          %v3181 = vpop.xlane.xlu0 %3180
          %v3182 = vsel %vm2615, %v3161, 0.0
          %3183 = vadd.xlane.f32.xlu0 %v3182
          %v3184 = vpop.xlane.xlu0 %3183
          %v3185 = vsel %vm2615, %v3163, 0.0
          %3186 = vadd.xlane.f32.xlu0 %v3185
          %v3187 = vpop.xlane.xlu0 %3186
          %v3188 = vrcp.pop %v3166
          %v3189 = vrcp.pop %v3169
          %v3190 = vrcp.pop %v3172
          %v3191 = vrcp.pop %v3175
          %v3192 = vrcp.pop %v3178
          %v3193 = vrcp.pop %v3181
          %v3194 = vrcp.pop %v3184
          %v3195 = vrcp.pop %v3187
          %v3196 = vmul.f32 %v3149, %v3188
          %v3197 = vmul.f32 %v3151, %v3189
          %v3198 = vmul.f32 %v3153, %v3190
          %v3199 = vmul.f32 %v3155, %v3191
          %v3200 = vmul.f32 %v3157, %v3192
          %v3201 = vmul.f32 %v3159, %v3193
          %v3202 = vmul.f32 %v3161, %v3194
          %v3203 = vmul.f32 %v3163, %v3195
          %v3204 = vpack.c.bf16 %v3196, %v3196
          %v3205 = vpack.c.bf16 %v3197, %v3197
          %v3206 = vpack.c.bf16 %v3198, %v3198
          %v3207 = vpack.c.bf16 %v3199, %v3199
          %v3208 = vpack.c.bf16 %v3200, %v3200
          %v3209 = vpack.c.bf16 %v3201, %v3201
          %v3210 = vpack.c.bf16 %v3202, %v3202
          %v3211 = vpack.c.bf16 %v3203, %v3203
          %v3214 = vunpack.c.l.b16 %v3204
          %v3215 = vunpack.c.l.b16 %v3205
          %v3216 = vpack.c.b16 %v3215, %v3214
          %v3219 = vunpack.c.l.b16 %v1133
          %v3220 = vunpack.c.l.b16 %v1134
          %v3221 = vpack.c.b16 %v3220, %v3219
          %v3224 = vsel %vm2615, %v3216, 0
          %3226 = vmatpush.bf16.msra.mxu0 0
          %3227 = vmatpush.bf16.msra.mxu0 0
          %3228 = vmatpush.bf16.msra.mxu0 0
          %3229 = vmatpush.bf16.msra.mxu0 0
          %3230 = vmatpush.bf16.msra.mxu0 0
          %3231 = vmatpush.bf16.msra.mxu0 0
          %3232 = vmatpush.bf16.msra.mxu0 0
          %3233 = vmatpush.bf16.msra.mxu0 %v3221
          %3234 = vmatmul.bf16.gmra.mxu0 %v3224
          %v3235 = vpop.f32.mrf.mxu0
          %v3236 = vadd.f32 0.0, %v3235
          %v3237 = vpop.f32.mrf.mxu0
          %v3238 = vadd.f32 0.0, %v3237
          %3239 = vdwg.mxu0
          %v3242 = vunpack.c.l.b16 %v3206
          %v3243 = vunpack.c.l.b16 %v3207
          %v3244 = vpack.c.b16 %v3243, %v3242
          %v3247 = vunpack.c.l.b16 %v1135
          %v3248 = vunpack.c.l.b16 %v1136
          %v3249 = vpack.c.b16 %v3248, %v3247
          %v3252 = vsel %vm2615, %v3244, 0
          %3254 = vmatpush.bf16.msra.mxu0 0
          %3255 = vmatpush.bf16.msra.mxu0 0
          %3256 = vmatpush.bf16.msra.mxu0 0
          %3257 = vmatpush.bf16.msra.mxu0 0
          %3258 = vmatpush.bf16.msra.mxu0 0
          %3259 = vmatpush.bf16.msra.mxu0 0
          %3260 = vmatpush.bf16.msra.mxu0 0
          %3261 = vmatpush.bf16.msra.mxu0 %v3249
          %3262 = vmatmul.bf16.gmra.mxu0 %v3252
          %v3263 = vpop.f32.mrf.mxu0
          %v3264 = vadd.f32 0.0, %v3263
          %v3265 = vpop.f32.mrf.mxu0
          %v3266 = vadd.f32 0.0, %v3265
          %3267 = vdwg.mxu0
          %v3270 = vunpack.c.l.b16 %v3208
          %v3271 = vunpack.c.l.b16 %v3209
          %v3272 = vpack.c.b16 %v3271, %v3270
          %v3275 = vunpack.c.l.b16 %v1137
          %v3276 = vunpack.c.l.b16 %v1138
          %v3277 = vpack.c.b16 %v3276, %v3275
          %v3280 = vsel %vm2615, %v3272, 0
          %3282 = vmatpush.bf16.msra.mxu0 0
          %3283 = vmatpush.bf16.msra.mxu0 0
          %3284 = vmatpush.bf16.msra.mxu0 0
          %3285 = vmatpush.bf16.msra.mxu0 0
          %3286 = vmatpush.bf16.msra.mxu0 0
          %3287 = vmatpush.bf16.msra.mxu0 0
          %3288 = vmatpush.bf16.msra.mxu0 0
          %3289 = vmatpush.bf16.msra.mxu0 %v3277
          %3290 = vmatmul.bf16.gmra.mxu0 %v3280
          %v3291 = vpop.f32.mrf.mxu0
          %v3292 = vadd.f32 0.0, %v3291
          %v3293 = vpop.f32.mrf.mxu0
          %v3294 = vadd.f32 0.0, %v3293
          %3295 = vdwg.mxu0
          %v3298 = vunpack.c.l.b16 %v3210
          %v3299 = vunpack.c.l.b16 %v3211
          %v3300 = vpack.c.b16 %v3299, %v3298
          %v3303 = vunpack.c.l.b16 %v1139
          %v3304 = vunpack.c.l.b16 %v1140
          %v3305 = vpack.c.b16 %v3304, %v3303
          %v3308 = vsel %vm2615, %v3300, 0
          %3310 = vmatpush.bf16.msra.mxu0 0
          %3311 = vmatpush.bf16.msra.mxu0 0
          %3312 = vmatpush.bf16.msra.mxu0 0
          %3313 = vmatpush.bf16.msra.mxu0 0
          %3314 = vmatpush.bf16.msra.mxu0 0
          %3315 = vmatpush.bf16.msra.mxu0 0
          %3316 = vmatpush.bf16.msra.mxu0 0
          %3317 = vmatpush.bf16.msra.mxu0 %v3305
          %3318 = vmatmul.bf16.gmra.mxu0 %v3308
          %v3319 = vpop.f32.mrf.mxu0
          %v3320 = vadd.f32 0.0, %v3319
          %v3321 = vpop.f32.mrf.mxu0
          %v3322 = vadd.f32 0.0, %v3321
          %3323 = vdwg.mxu0
          %v3324 = vrot.slane %v3292, 4
          %v3325 = vsel %vm665, %v3324, %v3236
          %v3326 = vrot.slane %v3236, 4
          %v3327 = vsel %vm665, %v3292, %v3326
          %v3329 = vunpack.c.l.s4 1983009808
          %v3330 = vunpack.c.0.s8 %v3329
          %v3331 = vperm.slane %v3325, %v3330
          %v3333 = vunpack.c.l.s4 1983009808
          %v3334 = vunpack.c.0.s8 %v3333
          %v3335 = vperm.slane %v3327, %v3334
          %v3336 = vrot.slane %v3320, 4
          %v3337 = vsel %vm665, %v3336, %v3264
          %v3338 = vrot.slane %v3264, 4
          %v3339 = vsel %vm665, %v3320, %v3338
          %v3341 = vunpack.c.l.s4 1983009808
          %v3342 = vunpack.c.0.s8 %v3341
          %v3343 = vperm.slane %v3337, %v3342
          %v3345 = vunpack.c.l.s4 1983009808
          %v3346 = vunpack.c.0.s8 %v3345
          %v3347 = vperm.slane %v3339, %v3346
          %v3348 = vrot.slane %v3343, 4
          %v3349 = vsel %vm665, %v3348, %v3331
          %v3350 = vrot.slane %v3331, 4
          %v3351 = vsel %vm665, %v3343, %v3350
          %v3353 = vunpack.c.l.s4 1934713408
          %v3354 = vunpack.c.0.s8 %v3353
          %v3355 = vperm.slane %v3349, %v3354
          %v3357 = vunpack.c.l.s4 1934713408
          %v3358 = vunpack.c.0.s8 %v3357
          %v3359 = vperm.slane %v3351, %v3358
          %v3360 = vrot.slane %v3347, 4
          %v3361 = vsel %vm665, %v3360, %v3335
          %v3362 = vrot.slane %v3335, 4
          %v3363 = vsel %vm665, %v3347, %v3362
          %v3365 = vunpack.c.l.s4 1934713408
          %v3366 = vunpack.c.0.s8 %v3365
          %v3367 = vperm.slane %v3361, %v3366
          %v3369 = vunpack.c.l.s4 1934713408
          %v3370 = vunpack.c.0.s8 %v3369
          %v3371 = vperm.slane %v3363, %v3370
          %v3372 = vrot.slane %v3355, 4
          %v3373 = vsel %vm665, 0.0, %v3372
          %v3374 = vrot.slane %v3359, 4
          %v3375 = vsel %vm665, 0.0, %v3374
          %v3376 = vrot.slane %v3367, 4
          %v3377 = vsel %vm665, 0.0, %v3376
          %v3378 = vrot.slane %v3371, 4
          %v3379 = vsel %vm665, 0.0, %v3378
          %v3380 = vrot.slane %v3294, 4
          %v3381 = vsel %vm665, %v3380, %v3238
          %v3382 = vrot.slane %v3238, 4
          %v3383 = vsel %vm665, %v3294, %v3382
          %v3385 = vunpack.c.l.s4 1983009808
          %v3386 = vunpack.c.0.s8 %v3385
          %v3387 = vperm.slane %v3381, %v3386
          %v3389 = vunpack.c.l.s4 1983009808
          %v3390 = vunpack.c.0.s8 %v3389
          %v3391 = vperm.slane %v3383, %v3390
          %v3392 = vrot.slane %v3322, 4
          %v3393 = vsel %vm665, %v3392, %v3266
          %v3394 = vrot.slane %v3266, 4
          %v3395 = vsel %vm665, %v3322, %v3394
          %v3397 = vunpack.c.l.s4 1983009808
          %v3398 = vunpack.c.0.s8 %v3397
          %v3399 = vperm.slane %v3393, %v3398
          %v3401 = vunpack.c.l.s4 1983009808
          %v3402 = vunpack.c.0.s8 %v3401
          %v3403 = vperm.slane %v3395, %v3402
          %v3404 = vrot.slane %v3399, 4
          %v3405 = vsel %vm665, %v3404, %v3387
          %v3406 = vrot.slane %v3387, 4
          %v3407 = vsel %vm665, %v3399, %v3406
          %v3409 = vunpack.c.l.s4 1934713408
          %v3410 = vunpack.c.0.s8 %v3409
          %v3411 = vperm.slane %v3405, %v3410
          %v3413 = vunpack.c.l.s4 1934713408
          %v3414 = vunpack.c.0.s8 %v3413
          %v3415 = vperm.slane %v3407, %v3414
          %v3416 = vrot.slane %v3403, 4
          %v3417 = vsel %vm665, %v3416, %v3391
          %v3418 = vrot.slane %v3391, 4
          %v3419 = vsel %vm665, %v3403, %v3418
          %v3421 = vunpack.c.l.s4 1934713408
          %v3422 = vunpack.c.0.s8 %v3421
          %v3423 = vperm.slane %v3417, %v3422
          %v3425 = vunpack.c.l.s4 1934713408
          %v3426 = vunpack.c.0.s8 %v3425
          %v3427 = vperm.slane %v3419, %v3426
          %v3428 = vrot.slane %v3411, 4
          %v3429 = vsel %vm665, 0.0, %v3428
          %v3430 = vrot.slane %v3415, 4
          %v3431 = vsel %vm665, 0.0, %v3430
          %v3432 = vrot.slane %v3423, 4
          %v3433 = vsel %vm665, 0.0, %v3432
          %v3434 = vrot.slane %v3427, 4
          %v3435 = vsel %vm665, 0.0, %v3434
          %v3436 = vsel %vm665, %v3374, %v3355
          %v3438 = vunpack.c.l.s4 1983009808
          %v3439 = vunpack.c.0.s8 %v3438
          %v3440 = vperm.slane %v3436, %v3439
          %v3441 = vrot.slane %v3375, 4
          %v3442 = vsel %vm665, %v3441, %v3373
          %v3444 = vunpack.c.l.s4 1983009808
          %v3445 = vunpack.c.0.s8 %v3444
          %v3446 = vperm.slane %v3442, %v3445
          %v3447 = vsel %vm665, %v3378, %v3367
          %v3449 = vunpack.c.l.s4 1983009808
          %v3450 = vunpack.c.0.s8 %v3449
          %v3451 = vperm.slane %v3447, %v3450
          %v3452 = vrot.slane %v3379, 4
          %v3453 = vsel %vm665, %v3452, %v3377
          %v3455 = vunpack.c.l.s4 1983009808
          %v3456 = vunpack.c.0.s8 %v3455
          %v3457 = vperm.slane %v3453, %v3456
          %v3458 = vrot.slane %v3446, 4
          %v3459 = vsel %vm665, %v3458, %v3440
          %v3460 = vrot.slane %v3440, 4
          %v3461 = vsel %vm665, %v3446, %v3460
          %v3463 = vunpack.c.l.s4 1934713408
          %v3464 = vunpack.c.0.s8 %v3463
          %v3465 = vperm.slane %v3459, %v3464
          %v3467 = vunpack.c.l.s4 1934713408
          %v3468 = vunpack.c.0.s8 %v3467
          %v3469 = vperm.slane %v3461, %v3468
          %v3470 = vrot.slane %v3457, 4
          %v3471 = vsel %vm665, %v3470, %v3451
          %v3472 = vrot.slane %v3451, 4
          %v3473 = vsel %vm665, %v3457, %v3472
          %v3475 = vunpack.c.l.s4 1934713408
          %v3476 = vunpack.c.0.s8 %v3475
          %v3477 = vperm.slane %v3471, %v3476
          %v3479 = vunpack.c.l.s4 1934713408
          %v3480 = vunpack.c.0.s8 %v3479
          %v3481 = vperm.slane %v3473, %v3480
          %v3482 = vrot.slane %v3477, 4
          %v3483 = vsel %vm665, %v3482, %v3465
          %v3484 = vrot.slane %v3465, 4
          %v3485 = vsel %vm665, %v3477, %v3484
          %v3486 = vrot.slane %v3481, 4
          %v3487 = vsel %vm665, %v3486, %v3469
          %v3488 = vrot.slane %v3469, 4
          %v3489 = vsel %vm665, %v3481, %v3488
          %v3490 = vsel %vm665, %v3430, %v3411
          %v3492 = vunpack.c.l.s4 1983009808
          %v3493 = vunpack.c.0.s8 %v3492
          %v3494 = vperm.slane %v3490, %v3493
          %v3495 = vrot.slane %v3431, 4
          %v3496 = vsel %vm665, %v3495, %v3429
          %v3498 = vunpack.c.l.s4 1983009808
          %v3499 = vunpack.c.0.s8 %v3498
          %v3500 = vperm.slane %v3496, %v3499
          %v3501 = vsel %vm665, %v3434, %v3423
          %v3503 = vunpack.c.l.s4 1983009808
          %v3504 = vunpack.c.0.s8 %v3503
          %v3505 = vperm.slane %v3501, %v3504
          %v3506 = vrot.slane %v3435, 4
          %v3507 = vsel %vm665, %v3506, %v3433
          %v3509 = vunpack.c.l.s4 1983009808
          %v3510 = vunpack.c.0.s8 %v3509
          %v3511 = vperm.slane %v3507, %v3510
          %v3512 = vrot.slane %v3500, 4
          %v3513 = vsel %vm665, %v3512, %v3494
          %v3514 = vrot.slane %v3494, 4
          %v3515 = vsel %vm665, %v3500, %v3514
          %v3517 = vunpack.c.l.s4 1934713408
          %v3518 = vunpack.c.0.s8 %v3517
          %v3519 = vperm.slane %v3513, %v3518
          %v3521 = vunpack.c.l.s4 1934713408
          %v3522 = vunpack.c.0.s8 %v3521
          %v3523 = vperm.slane %v3515, %v3522
          %v3524 = vrot.slane %v3511, 4
          %v3525 = vsel %vm665, %v3524, %v3505
          %v3526 = vrot.slane %v3505, 4
          %v3527 = vsel %vm665, %v3511, %v3526
          %v3529 = vunpack.c.l.s4 1934713408
          %v3530 = vunpack.c.0.s8 %v3529
          %v3531 = vperm.slane %v3525, %v3530
          %v3533 = vunpack.c.l.s4 1934713408
          %v3534 = vunpack.c.0.s8 %v3533
          %v3535 = vperm.slane %v3527, %v3534
          %v3536 = vrot.slane %v3531, 4
          %v3537 = vsel %vm665, %v3536, %v3519
          %v3538 = vrot.slane %v3519, 4
          %v3539 = vsel %vm665, %v3531, %v3538
          %v3540 = vrot.slane %v3535, 4
          %v3541 = vsel %vm665, %v3540, %v3523
          %v3542 = vrot.slane %v3523, 4
          %v3543 = vsel %vm665, %v3535, %v3542
          %3546 = vrot.lane.b32.xlu0 %v3485, 8
          %v3547 = vpop.permute.xlu0 %3546
          %3548 = vrot.lane.b32.xlu0 %v3539, 8
          %v3549 = vpop.permute.xlu0 %3548
          %3554 = vrot.lane.b32.xlu0 %v3487, 16
          %v3555 = vpop.permute.xlu0 %3554
          %3556 = vrot.lane.b32.xlu0 %v3541, 16
          %v3557 = vpop.permute.xlu0 %3556
          %3562 = vrot.lane.b32.xlu0 %v3489, 24
          %v3563 = vpop.permute.xlu0 %3562
          %3564 = vrot.lane.b32.xlu0 %v3543, 24
          %v3565 = vpop.permute.xlu0 %3564
          %v3568 = vsel %vm1959, %v3483, %v3547
          %v3569 = vsel %vm1959, %v3537, %v3549
          %v3570 = vsel %vm2615, %v3568, %v3555
          %v3571 = vsel %vm2615, %v3569, %v3557
          %v3572 = vsel %vm2618, %v3570, %v3563
          %v3573 = vsel %vm2618, %v3571, %v3565
          %v3574 = vpack.c.bf16 %v3573, %v3572
          %v3579 = vunpack.c.l.b16 %v529
          %v3580 = vunpack.c.l.b16 %v530
          %v3581 = vunpack.c.l.b16 %v531
          %v3582 = vunpack.c.l.b16 %v532
          %v3583 = vpack.c.b16 %v3580, %v3579
          %v3584 = vpack.c.b16 %v3582, %v3581
          %v3588 = vsel %vm596, %v3574, 0
          %3590 = vmatpush.bf16.msra.mxu0 0
          %3591 = vmatpush.bf16.msra.mxu0 0
          %3592 = vmatpush.bf16.msra.mxu0 0
          %3593 = vmatpush.bf16.msra.mxu0 0
          %3594 = vmatpush.bf16.msra.mxu0 0
          %3595 = vmatpush.bf16.msra.mxu0 0
          %3596 = vmatpush.bf16.msra.mxu0 %v3584
          %3597 = vmatpush.bf16.msra.mxu0 %v3583
          %3598 = vmatmul.bf16.gmra.mxu0 %v3588
          %v3599 = vpop.f32.mrf.mxu0
          %v3600 = vadd.f32 %v554, %v3599
          %v3601 = vpop.f32.mrf.mxu0
          %v3602 = vadd.f32 %v554, %v3601
          %3603 = vdwg.mxu0
          %v3604 = vadd.f32 %v2706, %v3600
          %v3605 = vadd.f32 %v2707, %v3602
          %v3606 = vsel %vm596, %v3604, 0.0
          %3607 = vadd.xlane.f32.xlu0 %v3606
          %v3608 = vpop.xlane.xlu0 %3607
          %v3609 = vsel %vm596, %v3605, 0.0
          %3610 = vadd.xlane.f32.xlu0 %v3609
          %v3611 = vpop.xlane.xlu0 %3610
          %v3612 = vmul.f32 %v3608, %v2665
          %v3613 = vmul.f32 %v3611, %v2665
          %v3614 = vsub.f32 %v3604, %v3612
          %v3615 = vsub.f32 %v3605, %v3613
          %v3616 = vmul.f32 %v3614, %v3614
          %v3617 = vmul.f32 %v3615, %v3615
          %v3618 = vsel %vm596, %v3616, 0.0
          %3619 = vadd.xlane.f32.xlu0 %v3618
          %v3620 = vpop.xlane.xlu0 %3619
          %v3621 = vsel %vm596, %v3617, 0.0
          %3622 = vadd.xlane.f32.xlu0 %v3621
          %v3623 = vpop.xlane.xlu0 %3622
          %v3624 = vmul.f32 %v3620, %v2665
          %v3625 = vmul.f32 %v3623, %v2665
          %v3626 = vadd.f32 %v3624, 1e-05
          %v3627 = vadd.f32 %v3625, 1e-05
          %v3628 = vrsqrt.pop %v3626
          %v3629 = vmul.f32 %v3628, %v3626
          %v3630 = vmul.f32 %v3629, %v3628
          %v3631 = vmul.f32 0.5, %v3630
          %v3632 = vsub.f32 1.5, %v3631
          %v3633 = vmul.f32 %v3628, %v3632
          %vm3634 = vweird.f32 %v3626
          %vm3635 = vweird.f32 %v3628
          %vm3636 = vmor %vm3634, %vm3635
          %v3637 = vsel %vm3636, %v3628, %v3633
          %v3638 = vrsqrt.pop %v3627
          %v3639 = vmul.f32 %v3638, %v3627
          %v3640 = vmul.f32 %v3639, %v3638
          %v3641 = vmul.f32 0.5, %v3640
          %v3642 = vsub.f32 1.5, %v3641
          %v3643 = vmul.f32 %v3638, %v3642
          %vm3644 = vweird.f32 %v3627
          %vm3645 = vweird.f32 %v3638
          %vm3646 = vmor %vm3644, %vm3645
          %v3647 = vsel %vm3646, %v3638, %v3643
          %v3648 = vmul.f32 %v3614, %v3637
          %v3649 = vmul.f32 %v3615, %v3647
          %v3650 = vmul.f32 %v3648, %v555
          %v3651 = vmul.f32 %v3649, %v555
          %v3652 = vadd.f32 %v3650, %v556
          %v3653 = vadd.f32 %v3651, %v556
          %v3654 = vpack.c.bf16 %v3653, %v3652
          %v3659 = vunpack.c.l.b16 %v533
          %v3660 = vunpack.c.l.b16 %v534
          %v3661 = vunpack.c.l.b16 %v535
          %v3662 = vunpack.c.l.b16 %v536
          %v3663 = vpack.c.b16 %v3660, %v3659
          %v3664 = vpack.c.b16 %v3662, %v3661
          %v3668 = vsel %vm596, %v3654, 0
          %3670 = vmatpush.bf16.msra.mxu0 0
          %3671 = vmatpush.bf16.msra.mxu0 0
          %3672 = vmatpush.bf16.msra.mxu0 0
          %3673 = vmatpush.bf16.msra.mxu0 0
          %3674 = vmatpush.bf16.msra.mxu0 0
          %3675 = vmatpush.bf16.msra.mxu0 0
          %3676 = vmatpush.bf16.msra.mxu0 %v3664
          %3677 = vmatpush.bf16.msra.mxu0 %v3663
          %3678 = vmatmul.bf16.gmra.mxu0 %v3668
          %v3679 = vpop.f32.mrf.mxu0
          %v3680 = vadd.f32 %v557, %v3679
          %v3681 = vpop.f32.mrf.mxu0
          %v3682 = vadd.f32 %v557, %v3681
          %3683 = vdwg.mxu0
          %v3684 = vmax.f32 %v3680, 0.0
          %v3685 = vmax.f32 %v3682, 0.0
          %v3686 = vpack.c.bf16 %v3685, %v3684
          %v3695 = vunpack.c.l.b16 %v537
          %v3696 = vunpack.c.l.b16 %v538
          %v3697 = vunpack.c.l.b16 %v539
          %v3698 = vunpack.c.l.b16 %v540
          %v3699 = vunpack.c.l.b16 %v541
          %v3700 = vunpack.c.l.b16 %v542
          %v3701 = vunpack.c.l.b16 %v543
          %v3702 = vunpack.c.l.b16 %v544
          %v3703 = vpack.c.b16 %v3696, %v3695
          %v3704 = vpack.c.b16 %v3698, %v3697
          %v3705 = vpack.c.b16 %v3700, %v3699
          %v3706 = vpack.c.b16 %v3702, %v3701
          %vm3711 = vcmask 523264
          %v3713 = vsel %vm3711, %v3686, 0
          %3715 = vmatpush.bf16.msra.mxu0 0
          %3716 = vmatpush.bf16.msra.mxu0 0
          %3717 = vmatpush.bf16.msra.mxu0 0
          %3718 = vmatpush.bf16.msra.mxu0 0
          %3719 = vmatpush.bf16.msra.mxu0 %v3706
          %3720 = vmatpush.bf16.msra.mxu0 %v3705
          %3721 = vmatpush.bf16.msra.mxu0 %v3704
          %3722 = vmatpush.bf16.msra.mxu0 %v3703
          %3723 = vmatmul.bf16.gmra.mxu0 %v3713
          %v3724 = vpop.f32.mrf.mxu0
          %v3725 = vadd.f32 %v558, %v3724
          %v3726 = vpop.f32.mrf.mxu0
          %v3727 = vadd.f32 %v558, %v3726
          %3728 = vdwg.mxu0
          %v3729 = vadd.f32 %v3652, %v3725
          %v3730 = vadd.f32 %v3653, %v3727
          %v3731 = vsel %vm596, %v3729, 0.0
          %3732 = vadd.xlane.f32.xlu0 %v3731
          %v3733 = vpop.xlane.xlu0 %3732
          %v3734 = vsel %vm596, %v3730, 0.0
          %3735 = vadd.xlane.f32.xlu0 %v3734
          %v3736 = vpop.xlane.xlu0 %3735
          %v3737 = vmul.f32 %v3733, %v2665
          %v3738 = vmul.f32 %v3736, %v2665
          %v3739 = vsub.f32 %v3729, %v3737
          %v3740 = vsub.f32 %v3730, %v3738
          %v3741 = vmul.f32 %v3739, %v3739
          %v3742 = vmul.f32 %v3740, %v3740
          %v3743 = vsel %vm596, %v3741, 0.0
          %3744 = vadd.xlane.f32.xlu0 %v3743
          %v3745 = vpop.xlane.xlu0 %3744
          %v3746 = vsel %vm596, %v3742, 0.0
          %3747 = vadd.xlane.f32.xlu0 %v3746
          %v3748 = vpop.xlane.xlu0 %3747
          %v3749 = vmul.f32 %v3745, %v2665
          %v3750 = vmul.f32 %v3748, %v2665
          %v3751 = vadd.f32 %v3749, 1e-05
          %v3752 = vadd.f32 %v3750, 1e-05
          %v3753 = vrsqrt.pop %v3751
          %v3754 = vmul.f32 %v3753, %v3751
          %v3755 = vmul.f32 %v3754, %v3753
          %v3756 = vmul.f32 0.5, %v3755
          %v3757 = vsub.f32 1.5, %v3756
          %v3758 = vmul.f32 %v3753, %v3757
          %vm3759 = vweird.f32 %v3751
          %vm3760 = vweird.f32 %v3753
          %vm3761 = vmor %vm3759, %vm3760
          %v3762 = vsel %vm3761, %v3753, %v3758
          %v3763 = vrsqrt.pop %v3752
          %v3764 = vmul.f32 %v3763, %v3752
          %v3765 = vmul.f32 %v3764, %v3763
          %v3766 = vmul.f32 0.5, %v3765
          %v3767 = vsub.f32 1.5, %v3766
          %v3768 = vmul.f32 %v3763, %v3767
          %vm3769 = vweird.f32 %v3752
          %vm3770 = vweird.f32 %v3763
          %vm3771 = vmor %vm3769, %vm3770
          %v3772 = vsel %vm3771, %v3763, %v3768
          %v3773 = vmul.f32 %v3739, %v3762
          %v3774 = vmul.f32 %v3740, %v3772
          %v3775 = vmul.f32 %v3773, %v559
          %v3776 = vmul.f32 %v3774, %v559
          %v3777 = vadd.f32 %v3775, %v560
          %v3778 = vadd.f32 %v3776, %v560
        $region85: #{tpu_custom_call.1} parent=55 // loop_footer
          %s1146 = sadd.s32 1, %s1142
        $region86: #{tpu_custom_call.1} parent=55 // loop_footer_branch
          %1141 = sbr.rel target = $region82
        $region87: #{tpu_custom_call.1} parent=55 // loop_exit
          _
        %v3779 = vsel %vm596, %v1147, 0.0
        %3780 = vadd.xlane.f32.xlu0 %v3779
        %v3781 = vpop.xlane.xlu0 %3780
        %v3782 = vsel %vm596, %v1148, 0.0
        %3783 = vadd.xlane.f32.xlu0 %v3782
        %v3784 = vpop.xlane.xlu0 %3783
        %v3785 = vrcp.pop 32.0
        %v3786 = vmul.f32 32.0, %v3785
        %v3787 = vsub.f32 1.0, %v3786
        %v3788 = vmul.f32 %v3785, %v3787
        %v3789 = vadd.f32 %v3785, %v3788
        %vm3790 = vweird.f32 %v3785
        %v3791 = vsel %vm3790, %v3785, %v3789
        %v3792 = vmul.f32 %v3781, %v3791
        %v3793 = vmul.f32 %v3784, %v3791
        %v3794 = vsub.f32 %v1147, %v3792
        %v3795 = vsub.f32 %v1148, %v3793
        %v3796 = vmul.f32 %v3794, %v3794
        %v3797 = vmul.f32 %v3795, %v3795
        %v3798 = vsel %vm596, %v3796, 0.0
        %3799 = vadd.xlane.f32.xlu0 %v3798
        %v3800 = vpop.xlane.xlu0 %3799
        %v3801 = vsel %vm596, %v3797, 0.0
        %3802 = vadd.xlane.f32.xlu0 %v3801
        %v3803 = vpop.xlane.xlu0 %3802
        %v3804 = vmul.f32 %v3800, %v3791
        %v3805 = vmul.f32 %v3803, %v3791
        %v3806 = vadd.f32 %v3804, 1e-05
        %v3807 = vadd.f32 %v3805, 1e-05
        %v3808 = vrsqrt.pop %v3806
        %v3809 = vmul.f32 %v3808, %v3806
        %v3810 = vmul.f32 %v3809, %v3808
        %v3811 = vmul.f32 0.5, %v3810
        %v3812 = vsub.f32 1.5, %v3811
        %v3813 = vmul.f32 %v3808, %v3812
        %vm3814 = vweird.f32 %v3806
        %vm3815 = vweird.f32 %v3808
        %vm3816 = vmor %vm3814, %vm3815
        %v3817 = vsel %vm3816, %v3808, %v3813
        %v3818 = vrsqrt.pop %v3807
        %v3819 = vmul.f32 %v3818, %v3807
        %v3820 = vmul.f32 %v3819, %v3818
        %v3821 = vmul.f32 0.5, %v3820
        %v3822 = vsub.f32 1.5, %v3821
        %v3823 = vmul.f32 %v3818, %v3822
        %vm3824 = vweird.f32 %v3807
        %vm3825 = vweird.f32 %v3818
        %vm3826 = vmor %vm3824, %vm3825
        %v3827 = vsel %vm3826, %v3818, %v3823
        %v3828 = vmul.f32 %v3794, %v3817
        %v3829 = vmul.f32 %v3795, %v3827
        %v3830 = vmul.f32 %v3828, %v561
        %v3831 = vmul.f32 %v3829, %v561
        %v3832 = vadd.f32 %v3830, %v562
        %v3833 = vadd.f32 %v3831, %v562
        %v3834 = vpack.c.bf16 %v3832, %v3832
        %v3835 = vpack.c.bf16 %v3833, %v3833
        %vm3836 = vcmask 257024
        %3837 = vst.msk [vmem:[%s498] sm:$0xf] %vm3836, %v3834
        %3838 = vst.msk [vmem:[%s498 + $0x4] sm:$0xf] %vm3836, %v3835
        %s3839 = sand.u32 %s248, 1
        %s3840 = scalar_lea.sflag [#allocation4], %s3839
        %s3841 = sand.u32 %s248, 1
        %s3842 = smul.addr %s3841, 8
        %s3843 = scalar_lea.vmem [#allocation13], %s3842
        // Predicated region
        $region88: #{tpu_custom_call.1} parent=55 // pred_check
          %p3844 = pneg %p258
        $region89: #{tpu_custom_call.1} parent=55 // pred_check_branch
          %3846 = sbr.rel (%p3844) target = $region91
        $region90: #{tpu_custom_call.1} parent=55 // pred_region
          %3848 = vsyncadd %s3840, 0
          %s3849 = smul.addr %s31, 2
          %s3850 = smul.addr %s3849, 4
          %s3851 = scalar_lea.hbm %s9, %s3850
          %s3852 = sshll.u32 %s3843, 4
          %s3853 = int_to_ptr.vmem [resolvable:$true] %s3852
          %s3854 = sshll.u32 %s3851, 4
          %s3855 = int_to_ptr.hbm [resolvable:$true] %s3854
          %3860 = dma.vmem_to_hbm [thread:$0]  %s3853, 128, %s3855, %s3840, 64, 64, 4
        $region91: #{tpu_custom_call.1} parent=55 // pred_fallthru
          _
      $region56: #{tpu_custom_call.1} parent=5 // pred_fallthru
        _
      %p3861 = scmp.le.s32.totalorder 2, %s26
      // Predicated region
      $region92: #{tpu_custom_call.1} parent=5 // pred_check
        %p3862 = pneg %p3861
      $region93: #{tpu_custom_call.1} parent=5 // pred_check_branch
        %3864 = sbr.rel (%p3862) target = $region95
      $region94: #{tpu_custom_call.1} parent=5 // pred_region
        %s3865 = ssub.s32 %s26, 2
        // Predicated region
        $region96: #{tpu_custom_call.1} parent=94 // pred_check
          %p3866 = pneg %p264
        $region97: #{tpu_custom_call.1} parent=94 // pred_check_branch
          %3868 = sbr.rel (%p3866) target = $region99
        $region98: #{tpu_custom_call.1} parent=94 // pred_region
          %s3869 = sand.u32 %s249, 1
          %s3870 = scalar_lea.sflag [#allocation4], %s3869
          %s3871 = sand.u32 %s249, 1
          %s3872 = smul.addr %s3871, 8
          %s3873 = scalar_lea.vmem [#allocation13], %s3872
          %3875 = dma.done %s3870, 128
        $region99: #{tpu_custom_call.1} parent=94 // pred_fallthru
          _
      $region95: #{tpu_custom_call.1} parent=5 // pred_fallthru
        _
    $region6: #{tpu_custom_call.1} parent=1 // loop_footer
      %s30 = sadd.s32 1, %s26
    $region7: #{tpu_custom_call.1} parent=1 // loop_footer_branch
      %25 = sbr.rel target = $region3
    $region8: #{tpu_custom_call.1} parent=1 // loop_exit
      _
    %3876 = vsyncpa [#allocation3], 1
    %s3877 = scalar_lea.sflag [#allocation3], 1
    %3878 = vsyncpa %s3877, 1
    %3879 = vsyncpa [#allocation6], 1
    %s3880 = scalar_lea.sflag [#allocation6], 1
    %3881 = vsyncpa %s3880, 1
    %3882 = vsyncpa [#allocation9], 1
    %3883 = vsyncpa [#allocation12], 1
    %3884 = vsyncpa [#allocation4], 1
    %s3885 = scalar_lea.sflag [#allocation4], 1
    %3886 = vsyncpa %s3885, 1

</llo_original>
